<compile_context>
chip_gen: v5e
topology: v5e:2x2
jax: 0.10.0
libtpu: 0.0.40
codegen_flags: <defaults>
</compile_context>

<pallas_src>
import functools

import jax
import jax.numpy as jnp
from jax.experimental import pallas as pl
from jax.experimental.pallas import tpu as pltpu


def mhsa_kernel(x_ref, gamma_ref, beta_ref, wqkv_t_ref, bqkv_ref, wo_h_ref, bo_ref,
                o_ref, *opt_attnw_ref, num_heads, eps, compute_dtype):
    """One batch element per grid step.

    Block shapes:
      x_ref      (1, S, E)    gamma/beta (1, E)
      wqkv_t_ref (E, 3E)      bqkv_ref   (1, 3E)
      wo_h_ref   (H, Dh, E)   bo_ref     (1, E)
      o_ref      (1, S, E)    attnw_ref  (1, S, S)   [only if need_weights]
    """
    attnw_ref = opt_attnw_ref[0] if opt_attnw_ref else None
    cdt = compute_dtype

    x = x_ref[0].astype(jnp.float32)                       # (S, E)
    S, E = x.shape
    H = num_heads
    Dh = E // H
    scale = 1.0 / (Dh ** 0.5)

    # ---- LayerNorm (f32 statistics, torch semantics) ----
    mean = jnp.mean(x, axis=-1, keepdims=True)
    var = jnp.mean((x - mean) ** 2, axis=-1, keepdims=True)
    xn = (x - mean) * jax.lax.rsqrt(var + eps)
    xn = xn * gamma_ref[...] + beta_ref[...]               # (S, E) f32

    # ---- fused QKV projection: (S, E) @ (E, 3E) on the MXU, f32 accumulate ----
    qkv = jnp.dot(xn.astype(cdt), wqkv_t_ref[...],
                  preferred_element_type=jnp.float32) + bqkv_ref[...]   # (S, 3E) f32

    q = qkv[:, 0:E] * scale          # torch scales q (incl. bias) by 1/sqrt(Dh)
    k = qkv[:, E:2 * E]
    v = qkv[:, 2 * E:3 * E]

    # Head-major (H, S, Dh) layout so the attention matmuls are head-batched.
    def to_heads(t):
        return jnp.stack([t[:, h * Dh:(h + 1) * Dh] for h in range(H)], axis=0)

    qh = to_heads(q).astype(cdt)     # (H, S, Dh)
    kh = to_heads(k).astype(cdt)
    vh = to_heads(v).astype(cdt)

    # ---- attention scores + softmax (f32) ----
    scores = jnp.einsum('hqd,hkd->hqk', qh, kh,
                        preferred_element_type=jnp.float32)             # (H, S, S)
    scores = scores - jnp.max(scores, axis=-1, keepdims=True)
    p = jnp.exp(scores)
    denom = jnp.sum(p, axis=-1, keepdims=True)
    # One reciprocal per row instead of an S-wide divide per element.
    p = p * pl.reciprocal(denom, approx=False)                          # (H, S, S) f32

    # ---- context: batched (H, S, S) @ (H, S, Dh) ----
    ctx = jnp.einsum('hqk,hkd->hqd', p.astype(cdt), vh,
                     preferred_element_type=jnp.float32)                # (H, S, Dh) f32

    # ---- output projection accumulated per head (no lane-concat of heads) ----
    acc = jnp.zeros((S, E), jnp.float32)
    for h in range(H):
        acc = acc + jnp.dot(ctx[h].astype(cdt), wo_h_ref[h],
                            preferred_element_type=jnp.float32)
    out = acc + bo_ref[...]
    o_ref[0] = out.astype(o_ref.dtype)

    if attnw_ref is not None:
        # need_weights=True, average_attn_weights=True -> mean over heads (f32)
        attn_mean = p[0]
        for h in range(1, H):
            attn_mean = attn_mean + p[h]
        attnw_ref[0] = (attn_mean * (1.0 / H)).astype(attnw_ref.dtype)


def mhsa_block(x, params, num_heads, *, need_weights=True,
               compute_dtype=jnp.bfloat16, eps=1e-5):
    B, S, E = x.shape
    assert E % num_heads == 0
    H = num_heads
    Dh = E // H
    cdt = compute_dtype

    # One-time weight re-layout done outside the kernel (plain XLA):
    #   in_proj_weight (3E, E) -> (E, 3E) so the kernel computes x @ W directly,
    #   out_proj.weight (E, E) -> W^T split per head as (H, Dh, E).
    # MXU operands are shipped in compute_dtype (bf16 default): halves weight DMA,
    # doubles MXU throughput; biases / LN params stay f32.
    gamma = params["ln_gamma"].reshape(1, E).astype(jnp.float32)
    beta = params["ln_beta"].reshape(1, E).astype(jnp.float32)
    wqkv_t = params["in_proj_weight"].T.astype(cdt)                     # (E, 3E)
    bqkv = params["in_proj_bias"].reshape(1, 3 * E).astype(jnp.float32)
    wo_h = params["out_proj_weight"].T.reshape(H, Dh, E).astype(cdt)    # (H, Dh, E)
    bo = params["out_proj_bias"].reshape(1, E).astype(jnp.float32)

    kernel = functools.partial(mhsa_kernel, num_heads=H, eps=eps, compute_dtype=cdt)

    in_specs = [
        pl.BlockSpec((1, S, E), lambda b: (b, 0, 0)),        # x: one batch per step
        pl.BlockSpec((1, E), lambda b: (0, 0)),              # ln gamma
        pl.BlockSpec((1, E), lambda b: (0, 0)),              # ln beta
        pl.BlockSpec((E, 3 * E), lambda b: (0, 0)),          # in_proj^T
        pl.BlockSpec((1, 3 * E), lambda b: (0, 0)),          # in_proj bias
        pl.BlockSpec((H, Dh, E), lambda b: (0, 0, 0)),       # out_proj^T per head
        pl.BlockSpec((1, E), lambda b: (0, 0)),              # out_proj bias
    ]

    w_itemsize = jnp.dtype(cdt).itemsize
    flops = B * (2 * S * E * 3 * E + 4 * H * S * S * Dh + 2 * S * E * E)
    transcendentals = B * H * S * S
    bytes_accessed = (B * S * E * x.dtype.itemsize * 2            # x in + out
                      + (3 * E * E + E * E) * w_itemsize          # weights
                      + (3 * E + 3 * E) * 4)                      # biases + LN params
    if need_weights:
        bytes_accessed += B * S * S * 4

    compiler_params = pltpu.CompilerParams(
        dimension_semantics=("parallel",),
        vmem_limit_bytes=48 * 1024 * 1024,
    )
    cost = pl.CostEstimate(flops=int(flops), transcendentals=int(transcendentals),
                           bytes_accessed=int(bytes_accessed))

    if need_weights:
        out_shape = (jax.ShapeDtypeStruct((B, S, E), x.dtype),
                     jax.ShapeDtypeStruct((B, S, S), jnp.float32))
        out_specs = (pl.BlockSpec((1, S, E), lambda b: (b, 0, 0)),
                     pl.BlockSpec((1, S, S), lambda b: (b, 0, 0)))
    else:
        out_shape = jax.ShapeDtypeStruct((B, S, E), x.dtype)
        out_specs = pl.BlockSpec((1, S, E), lambda b: (b, 0, 0))

    # Note: for very long S (where full (S,S) scores no longer fit VMEM, esp. v7x's
    # 64 MiB) this should become a (B, S//tq) grid with online softmax; the fused
    # need_weights output makes that restructure out of scope here.
    return pl.pallas_call(
        kernel,
        out_shape=out_shape,
        grid=(B,),
        in_specs=in_specs,
        out_specs=out_specs,
        compiler_params=compiler_params,
        cost_estimate=cost,
    )(x, gamma, beta, wqkv_t, bqkv, wo_h, bo)


def mhsa_reference(x, params, num_heads, eps=1e-5, compute_dtype=jnp.float32):
    """Pure-JAX reference mirroring torch LayerNorm + MultiheadAttention forward,
    with the same compute-dtype casts at the matmul boundaries as the kernel."""
    B, S, E = x.shape
    H = num_heads
    Dh = E // H
    cdt = compute_dtype
    hp = jax.lax.Precision.HIGHEST

    xf = x.astype(jnp.float32)
    mean = jnp.mean(xf, axis=-1, keepdims=True)
    var = jnp.mean((xf - mean) ** 2, axis=-1, keepdims=True)
    xn = (xf - mean) * jax.lax.rsqrt(var + eps)
    xn = xn * params["ln_gamma"] + params["ln_beta"]

    wqkv_t = params["in_proj_weight"].T.astype(cdt)
    qkv = jnp.einsum("bse,ef->bsf", xn.astype(cdt), wqkv_t,
                     preferred_element_type=jnp.float32, precision=hp)
    qkv = qkv + params["in_proj_bias"]
    q, k, v = qkv[..., :E], qkv[..., E:2 * E], qkv[..., 2 * E:]
    q = (q * (1.0 / (Dh ** 0.5))).reshape(B, S, H, Dh).transpose(0, 2, 1, 3)
    k = k.reshape(B, S, H, Dh).transpose(0, 2, 1, 3)
    v = v.reshape(B, S, H, Dh).transpose(0, 2, 1, 3)
    scores = jnp.einsum("bhqd,bhkd->bhqk", q.astype(cdt), k.astype(cdt),
                        preferred_element_type=jnp.float32, precision=hp)
    p = jax.nn.softmax(scores, axis=-1)
    ctx = jnp.einsum("bhqk,bhkd->bhqd", p.astype(cdt), v.astype(cdt),
                     preferred_element_type=jnp.float32, precision=hp)
    ctx = ctx.transpose(0, 2, 1, 3).reshape(B, S, E)
    wo_t = params["out_proj_weight"].T.astype(cdt)
    out = jnp.einsum("bse,ef->bsf", ctx.astype(cdt), wo_t,
                     preferred_element_type=jnp.float32, precision=hp)
    out = out + params["out_proj_bias"]
    return out.astype(x.dtype), jnp.mean(p, axis=1)


if __name__ == "__main__":
    # Small but lane-aligned shapes (multiples of 128 keep all outputs lane-dense).
    B, S, E, H = 2, 128, 128, 4

    key = jax.random.PRNGKey(0)
    kx, k1, k2, k3, k4, k5, k6 = jax.random.split(key, 7)

    x = jax.random.normal(kx, (B, S, E), jnp.float32)
    params = {
        "ln_gamma": 1.0 + 0.1 * jax.random.normal(k1, (E,), jnp.float32),
        "ln_beta": 0.1 * jax.random.normal(k2, (E,), jnp.float32),
        "in_proj_weight": 0.05 * jax.random.normal(k3, (3 * E, E), jnp.float32),
        "in_proj_bias": 0.02 * jax.random.normal(k4, (3 * E,), jnp.float32),
        "out_proj_weight": 0.05 * jax.random.normal(k5, (E, E), jnp.float32),
        "out_proj_bias": 0.02 * jax.random.normal(k6, (E,), jnp.float32),
    }

    # 1) f32 compute path: strict check against the pure-JAX reference.
    out32, w32 = mhsa_block(x, params, H, need_weights=True,
                            compute_dtype=jnp.float32)
    out32 = jax.block_until_ready(out32)
    w32 = jax.block_until_ready(w32)
    ref32, refw32 = mhsa_reference(x, params, H, compute_dtype=jnp.float32)
    assert out32.shape == (B, S, E) and w32.shape == (B, S, S)
    assert jnp.allclose(out32, ref32, atol=1e-4, rtol=1e-4), "f32 attn output mismatch"
    assert jnp.allclose(w32, refw32, atol=1e-4, rtol=1e-4), "f32 attn weights mismatch"

    # 2) bf16 MXU path (the fast path): compare against a matching bf16 reference.
    out16, w16 = mhsa_block(x, params, H, need_weights=True,
                            compute_dtype=jnp.bfloat16)
    out16 = jax.block_until_ready(out16)
    w16 = jax.block_until_ready(w16)
    ref16, refw16 = mhsa_reference(x, params, H, compute_dtype=jnp.bfloat16)
    assert jnp.allclose(out16, ref16, atol=2e-2, rtol=2e-2), "bf16 attn output mismatch"
    assert jnp.allclose(w16, refw16, atol=2e-2, rtol=2e-2), "bf16 attn weights mismatch"

    # 3) need_weights=False path (drops the (B,S,S) HBM write and its VMEM buffer).
    out_now = mhsa_block(x, params, H, need_weights=False,
                         compute_dtype=jnp.bfloat16)
    out_now = jax.block_until_ready(out_now)
    assert jnp.allclose(out_now, out16, atol=1e-4, rtol=1e-4), "need_weights path mismatch"

    print("KERNEL_OK")
</pallas_src>

<mosaic_0001>
module attributes {stable_mosaic.version = 11 : i64} {
  func.func @mhsa_kernel(%arg0: i32, %arg1: memref<1x128x128xf32, #tpu.memory_space<vmem>>, %arg2: memref<1x128xf32, #tpu.memory_space<vmem>>, %arg3: memref<1x128xf32, #tpu.memory_space<vmem>>, %arg4: memref<128x384xf32, #tpu.memory_space<vmem>>, %arg5: memref<1x384xf32, #tpu.memory_space<vmem>>, %arg6: memref<4x32x128xf32, #tpu.memory_space<vmem>>, %arg7: memref<1x128xf32, #tpu.memory_space<vmem>>, %arg8: memref<1x128x128xf32, #tpu.memory_space<vmem>>, %arg9: memref<1x128x128xf32, #tpu.memory_space<vmem>>) attributes {dimension_semantics = [#tpu.dimension_semantics<parallel>], iteration_bounds = array<i64: 2>, scalar_prefetch = 0 : i64, scratch_operands = 0 : i64, tpu.core_type = #tpu.core_type<tc>, window_params = [{transform_indices = @transform_0, window_bounds = array<i64: 1, 128, 128>}, {pipeline_mode = #tpu.pipeline_mode<synchronous>, transform_indices = @transform_1, window_bounds = array<i64: 1, 128>}, {pipeline_mode = #tpu.pipeline_mode<synchronous>, transform_indices = @transform_2, window_bounds = array<i64: 1, 128>}, {pipeline_mode = #tpu.pipeline_mode<synchronous>, transform_indices = @transform_3, window_bounds = array<i64: 128, 384>}, {pipeline_mode = #tpu.pipeline_mode<synchronous>, transform_indices = @transform_4, window_bounds = array<i64: 1, 384>}, {pipeline_mode = #tpu.pipeline_mode<synchronous>, transform_indices = @transform_5, window_bounds = array<i64: 4, 32, 128>}, {pipeline_mode = #tpu.pipeline_mode<synchronous>, transform_indices = @transform_6, window_bounds = array<i64: 1, 128>}, {transform_indices = @transform_7, window_bounds = array<i64: 1, 128, 128>}, {transform_indices = @transform_8, window_bounds = array<i64: 1, 128, 128>}]} {
    %c0 = arith.constant 0 : index
    %c0_0 = arith.constant 0 : index
    %c0_1 = arith.constant 0 : index
    %0 = vector.load %arg1[%c0, %c0_0, %c0_1] : memref<1x128x128xf32, #tpu.memory_space<vmem>>, vector<1x128x128xf32>
    %1 = vector.shape_cast %0 : vector<1x128x128xf32> to vector<128x128xf32>
    %cst = arith.constant dense<0.000000e+00> : vector<128xf32>
    %2 = vector.multi_reduction <add>, %1, %cst [1] : vector<128x128xf32> to vector<128xf32>
    %3 = vector.shape_cast %2 : vector<128xf32> to vector<128x1xf32>
    %cst_2 = arith.constant 1.280000e+02 : f32
    %4 = vector.broadcast %cst_2 : f32 to vector<128x1xf32>
    %5 = arith.divf %3, %4 : vector<128x1xf32>
    %6 = vector.broadcast %5 : vector<128x1xf32> to vector<128x128xf32>
    %7 = arith.subf %1, %6 : vector<128x128xf32>
    %8 = arith.mulf %7, %7 : vector<128x128xf32>
    %cst_3 = arith.constant dense<0.000000e+00> : vector<128xf32>
    %9 = vector.multi_reduction <add>, %8, %cst_3 [1] : vector<128x128xf32> to vector<128xf32>
    %10 = vector.shape_cast %9 : vector<128xf32> to vector<128x1xf32>
    %cst_4 = arith.constant 1.280000e+02 : f32
    %11 = vector.broadcast %cst_4 : f32 to vector<128x1xf32>
    %12 = arith.divf %10, %11 : vector<128x1xf32>
    %13 = vector.broadcast %5 : vector<128x1xf32> to vector<128x128xf32>
    %14 = arith.subf %1, %13 : vector<128x128xf32>
    %cst_5 = arith.constant 9.99999974E-6 : f32
    %15 = vector.broadcast %cst_5 : f32 to vector<128x1xf32>
    %16 = arith.addf %12, %15 : vector<128x1xf32>
    %17 = math.rsqrt %16 : vector<128x1xf32>
    %18 = vector.broadcast %17 : vector<128x1xf32> to vector<128x128xf32>
    %19 = arith.mulf %14, %18 : vector<128x128xf32>
    %c0_6 = arith.constant 0 : index
    %c0_7 = arith.constant 0 : index
    %20 = vector.load %arg2[%c0_6, %c0_7] : memref<1x128xf32, #tpu.memory_space<vmem>>, vector<1x128xf32>
    %21 = vector.broadcast %20 : vector<1x128xf32> to vector<128x128xf32>
    %22 = arith.mulf %19, %21 : vector<128x128xf32>
    %c0_8 = arith.constant 0 : index
    %c0_9 = arith.constant 0 : index
    %23 = vector.load %arg3[%c0_8, %c0_9] : memref<1x128xf32, #tpu.memory_space<vmem>>, vector<1x128xf32>
    %24 = vector.broadcast %23 : vector<1x128xf32> to vector<128x128xf32>
    %25 = arith.addf %22, %24 : vector<128x128xf32>
    %c0_10 = arith.constant 0 : index
    %c0_11 = arith.constant 0 : index
    %26 = vector.load %arg4[%c0_10, %c0_11] : memref<128x384xf32, #tpu.memory_space<vmem>>, vector<128x384xf32>
    %cst_12 = arith.constant dense<0.000000e+00> : vector<128x384xf32>
    %27 = tpu.matmul %25, %26, %cst_12 {dimension_numbers = #tpu.dot_dimension_numbers<[1], [0], [0], [1], [0, 0, 1, 1], [], []>} : vector<128x128xf32>, vector<128x384xf32>, vector<128x384xf32> -> vector<128x384xf32>
    %c0_13 = arith.constant 0 : index
    %c0_14 = arith.constant 0 : index
    %28 = vector.load %arg5[%c0_13, %c0_14] : memref<1x384xf32, #tpu.memory_space<vmem>>, vector<1x384xf32>
    %29 = vector.broadcast %28 : vector<1x384xf32> to vector<128x384xf32>
    %30 = arith.addf %27, %29 : vector<128x384xf32>
    %31 = vector.extract_strided_slice %30 {offsets = [0, 0], sizes = [128, 128], strides = [1, 1]} : vector<128x384xf32> to vector<128x128xf32>
    %cst_15 = arith.constant 0.176776692 : f32
    %32 = vector.broadcast %cst_15 : f32 to vector<128x128xf32>
    %33 = arith.mulf %31, %32 : vector<128x128xf32>
    %34 = vector.extract_strided_slice %30 {offsets = [0, 128], sizes = [128, 128], strides = [1, 1]} : vector<128x384xf32> to vector<128x128xf32>
    %35 = vector.extract_strided_slice %30 {offsets = [0, 256], sizes = [128, 128], strides = [1, 1]} : vector<128x384xf32> to vector<128x128xf32>
    %36 = vector.extract_strided_slice %33 {offsets = [0, 0], sizes = [128, 32], strides = [1, 1]} : vector<128x128xf32> to vector<128x32xf32>
    %37 = vector.extract_strided_slice %33 {offsets = [0, 32], sizes = [128, 32], strides = [1, 1]} : vector<128x128xf32> to vector<128x32xf32>
    %38 = vector.extract_strided_slice %33 {offsets = [0, 64], sizes = [128, 32], strides = [1, 1]} : vector<128x128xf32> to vector<128x32xf32>
    %39 = vector.extract_strided_slice %33 {offsets = [0, 96], sizes = [128, 32], strides = [1, 1]} : vector<128x128xf32> to vector<128x32xf32>
    %40 = vector.shape_cast %36 : vector<128x32xf32> to vector<1x128x32xf32>
    %41 = vector.shape_cast %37 : vector<128x32xf32> to vector<1x128x32xf32>
    %42 = vector.shape_cast %38 : vector<128x32xf32> to vector<1x128x32xf32>
    %43 = vector.shape_cast %39 : vector<128x32xf32> to vector<1x128x32xf32>
    %44 = tpu.concatenate %40, %41, %42, %43 in 0 : vector<1x128x32xf32>, vector<1x128x32xf32>, vector<1x128x32xf32>, vector<1x128x32xf32> -> vector<4x128x32xf32>
    %45 = vector.extract_strided_slice %34 {offsets = [0, 0], sizes = [128, 32], strides = [1, 1]} : vector<128x128xf32> to vector<128x32xf32>
    %46 = vector.extract_strided_slice %34 {offsets = [0, 32], sizes = [128, 32], strides = [1, 1]} : vector<128x128xf32> to vector<128x32xf32>
    %47 = vector.extract_strided_slice %34 {offsets = [0, 64], sizes = [128, 32], strides = [1, 1]} : vector<128x128xf32> to vector<128x32xf32>
    %48 = vector.extract_strided_slice %34 {offsets = [0, 96], sizes = [128, 32], strides = [1, 1]} : vector<128x128xf32> to vector<128x32xf32>
    %49 = vector.shape_cast %45 : vector<128x32xf32> to vector<1x128x32xf32>
    %50 = vector.shape_cast %46 : vector<128x32xf32> to vector<1x128x32xf32>
    %51 = vector.shape_cast %47 : vector<128x32xf32> to vector<1x128x32xf32>
    %52 = vector.shape_cast %48 : vector<128x32xf32> to vector<1x128x32xf32>
    %53 = tpu.concatenate %49, %50, %51, %52 in 0 : vector<1x128x32xf32>, vector<1x128x32xf32>, vector<1x128x32xf32>, vector<1x128x32xf32> -> vector<4x128x32xf32>
    %54 = vector.extract_strided_slice %35 {offsets = [0, 0], sizes = [128, 32], strides = [1, 1]} : vector<128x128xf32> to vector<128x32xf32>
    %55 = vector.extract_strided_slice %35 {offsets = [0, 32], sizes = [128, 32], strides = [1, 1]} : vector<128x128xf32> to vector<128x32xf32>
    %56 = vector.extract_strided_slice %35 {offsets = [0, 64], sizes = [128, 32], strides = [1, 1]} : vector<128x128xf32> to vector<128x32xf32>
    %57 = vector.extract_strided_slice %35 {offsets = [0, 96], sizes = [128, 32], strides = [1, 1]} : vector<128x128xf32> to vector<128x32xf32>
    %58 = vector.shape_cast %54 : vector<128x32xf32> to vector<1x128x32xf32>
    %59 = vector.shape_cast %55 : vector<128x32xf32> to vector<1x128x32xf32>
    %60 = vector.shape_cast %56 : vector<128x32xf32> to vector<1x128x32xf32>
    %61 = vector.shape_cast %57 : vector<128x32xf32> to vector<1x128x32xf32>
    %62 = tpu.concatenate %58, %59, %60, %61 in 0 : vector<1x128x32xf32>, vector<1x128x32xf32>, vector<1x128x32xf32>, vector<1x128x32xf32> -> vector<4x128x32xf32>
    "tpu.trace_start"() <{level = 10 : i32, message = "hqd,hkd->hqk"}> : () -> ()
    %cst_16 = arith.constant dense<0.000000e+00> : vector<4x128x128xf32>
    %63 = tpu.matmul %44, %53, %cst_16 {dimension_numbers = #tpu.dot_dimension_numbers<[2], [2], [1], [1], [0, 0, 0, 1, 1, 1], [0], [0]>} : vector<4x128x32xf32>, vector<4x128x32xf32>, vector<4x128x128xf32> -> vector<4x128x128xf32>
    "tpu.trace_stop"() : () -> ()
    %cst_17 = arith.constant dense<0xFF800000> : vector<4x128xf32>
    %64 = vector.multi_reduction <maximumf>, %63, %cst_17 [2] : vector<4x128x128xf32> to vector<4x128xf32>
    %65 = vector.shape_cast %64 : vector<4x128xf32> to vector<4x128x1xf32>
    %66 = vector.broadcast %65 : vector<4x128x1xf32> to vector<4x128x128xf32>
    %67 = arith.subf %63, %66 : vector<4x128x128xf32>
    %68 = math.exp %67 : vector<4x128x128xf32>
    %cst_18 = arith.constant dense<0.000000e+00> : vector<4x128xf32>
    %69 = vector.multi_reduction <add>, %68, %cst_18 [2] : vector<4x128x128xf32> to vector<4x128xf32>
    %70 = vector.shape_cast %69 : vector<4x128xf32> to vector<4x128x1xf32>
    %71 = tpu.reciprocal %70 : vector<4x128x1xf32> -> vector<4x128x1xf32>
    %72 = vector.broadcast %71 : vector<4x128x1xf32> to vector<4x128x128xf32>
    %73 = arith.mulf %68, %72 : vector<4x128x128xf32>
    "tpu.trace_start"() <{level = 10 : i32, message = "hqk,hkd->hqd"}> : () -> ()
    %cst_19 = arith.constant dense<0.000000e+00> : vector<4x128x32xf32>
    %74 = tpu.matmul %73, %62, %cst_19 {dimension_numbers = #tpu.dot_dimension_numbers<[2], [1], [1], [2], [0, 0, 0, 1, 1, 2], [0], [0]>} : vector<4x128x128xf32>, vector<4x128x32xf32>, vector<4x128x32xf32> -> vector<4x128x32xf32>
    %cst_20 = arith.constant 0.000000e+00 : f32
    "tpu.trace_stop"() : () -> ()
    %75 = vector.broadcast %cst_20 : f32 to vector<128x128xf32>
    %76 = vector.extract_strided_slice %74 {offsets = [0, 0, 0], sizes = [1, 128, 32], strides = [1, 1, 1]} : vector<4x128x32xf32> to vector<1x128x32xf32>
    %77 = vector.shape_cast %76 : vector<1x128x32xf32> to vector<128x32xf32>
    %c0_21 = arith.constant 0 : index
    %c0_22 = arith.constant 0 : index
    %c0_23 = arith.constant 0 : index
    %78 = vector.load %arg6[%c0_21, %c0_22, %c0_23] : memref<4x32x128xf32, #tpu.memory_space<vmem>>, vector<1x32x128xf32>
    %79 = vector.shape_cast %78 : vector<1x32x128xf32> to vector<32x128xf32>
    %cst_24 = arith.constant dense<0.000000e+00> : vector<128x128xf32>
    %80 = tpu.matmul %77, %79, %cst_24 {dimension_numbers = #tpu.dot_dimension_numbers<[1], [0], [0], [1], [0, 0, 1, 1], [], []>} : vector<128x32xf32>, vector<32x128xf32>, vector<128x128xf32> -> vector<128x128xf32>
    %81 = arith.addf %75, %80 : vector<128x128xf32>
    %82 = vector.extract_strided_slice %74 {offsets = [1, 0, 0], sizes = [1, 128, 32], strides = [1, 1, 1]} : vector<4x128x32xf32> to vector<1x128x32xf32>
    %83 = vector.shape_cast %82 : vector<1x128x32xf32> to vector<128x32xf32>
    %c1 = arith.constant 1 : index
    %c0_25 = arith.constant 0 : index
    %c0_26 = arith.constant 0 : index
    %84 = vector.load %arg6[%c1, %c0_25, %c0_26] : memref<4x32x128xf32, #tpu.memory_space<vmem>>, vector<1x32x128xf32>
    %85 = vector.shape_cast %84 : vector<1x32x128xf32> to vector<32x128xf32>
    %cst_27 = arith.constant dense<0.000000e+00> : vector<128x128xf32>
    %86 = tpu.matmul %83, %85, %cst_27 {dimension_numbers = #tpu.dot_dimension_numbers<[1], [0], [0], [1], [0, 0, 1, 1], [], []>} : vector<128x32xf32>, vector<32x128xf32>, vector<128x128xf32> -> vector<128x128xf32>
    %87 = arith.addf %81, %86 : vector<128x128xf32>
    %88 = vector.extract_strided_slice %74 {offsets = [2, 0, 0], sizes = [1, 128, 32], strides = [1, 1, 1]} : vector<4x128x32xf32> to vector<1x128x32xf32>
    %89 = vector.shape_cast %88 : vector<1x128x32xf32> to vector<128x32xf32>
    %c2 = arith.constant 2 : index
    %c0_28 = arith.constant 0 : index
    %c0_29 = arith.constant 0 : index
    %90 = vector.load %arg6[%c2, %c0_28, %c0_29] : memref<4x32x128xf32, #tpu.memory_space<vmem>>, vector<1x32x128xf32>
    %91 = vector.shape_cast %90 : vector<1x32x128xf32> to vector<32x128xf32>
    %cst_30 = arith.constant dense<0.000000e+00> : vector<128x128xf32>
    %92 = tpu.matmul %89, %91, %cst_30 {dimension_numbers = #tpu.dot_dimension_numbers<[1], [0], [0], [1], [0, 0, 1, 1], [], []>} : vector<128x32xf32>, vector<32x128xf32>, vector<128x128xf32> -> vector<128x128xf32>
    %93 = arith.addf %87, %92 : vector<128x128xf32>
    %94 = vector.extract_strided_slice %74 {offsets = [3, 0, 0], sizes = [1, 128, 32], strides = [1, 1, 1]} : vector<4x128x32xf32> to vector<1x128x32xf32>
    %95 = vector.shape_cast %94 : vector<1x128x32xf32> to vector<128x32xf32>
    %c3 = arith.constant 3 : index
    %c0_31 = arith.constant 0 : index
    %c0_32 = arith.constant 0 : index
    %96 = vector.load %arg6[%c3, %c0_31, %c0_32] : memref<4x32x128xf32, #tpu.memory_space<vmem>>, vector<1x32x128xf32>
    %97 = vector.shape_cast %96 : vector<1x32x128xf32> to vector<32x128xf32>
    %cst_33 = arith.constant dense<0.000000e+00> : vector<128x128xf32>
    %98 = tpu.matmul %95, %97, %cst_33 {dimension_numbers = #tpu.dot_dimension_numbers<[1], [0], [0], [1], [0, 0, 1, 1], [], []>} : vector<128x32xf32>, vector<32x128xf32>, vector<128x128xf32> -> vector<128x128xf32>
    %99 = arith.addf %93, %98 : vector<128x128xf32>
    %c0_34 = arith.constant 0 : index
    %c0_35 = arith.constant 0 : index
    %100 = vector.load %arg7[%c0_34, %c0_35] : memref<1x128xf32, #tpu.memory_space<vmem>>, vector<1x128xf32>
    %101 = vector.broadcast %100 : vector<1x128xf32> to vector<128x128xf32>
    %102 = arith.addf %99, %101 : vector<128x128xf32>
    %c0_36 = arith.constant 0 : index
    %c0_37 = arith.constant 0 : index
    %c0_38 = arith.constant 0 : index
    %103 = vector.load %arg8[%c0_36, %c0_37, %c0_38] : memref<1x128x128xf32, #tpu.memory_space<vmem>>, vector<1x128x128xf32>
    %104 = vector.shape_cast %103 : vector<1x128x128xf32> to vector<128x128xf32>
    %105 = vector.shape_cast %102 : vector<128x128xf32> to vector<1x128x128xf32>
    tpu.vector_store %arg8[%c0_36, %c0_37, %c0_38], %105 {strides = array<i32>} : memref<1x128x128xf32, #tpu.memory_space<vmem>>, vector<1x128x128xf32>,
    %106 = vector.extract_strided_slice %73 {offsets = [0, 0, 0], sizes = [1, 128, 128], strides = [1, 1, 1]} : vector<4x128x128xf32> to vector<1x128x128xf32>
    %107 = vector.shape_cast %106 : vector<1x128x128xf32> to vector<128x128xf32>
    %108 = vector.extract_strided_slice %73 {offsets = [1, 0, 0], sizes = [1, 128, 128], strides = [1, 1, 1]} : vector<4x128x128xf32> to vector<1x128x128xf32>
    %109 = vector.shape_cast %108 : vector<1x128x128xf32> to vector<128x128xf32>
    %110 = arith.addf %107, %109 : vector<128x128xf32>
    %111 = vector.extract_strided_slice %73 {offsets = [2, 0, 0], sizes = [1, 128, 128], strides = [1, 1, 1]} : vector<4x128x128xf32> to vector<1x128x128xf32>
    %112 = vector.shape_cast %111 : vector<1x128x128xf32> to vector<128x128xf32>
    %113 = arith.addf %110, %112 : vector<128x128xf32>
    %114 = vector.extract_strided_slice %73 {offsets = [3, 0, 0], sizes = [1, 128, 128], strides = [1, 1, 1]} : vector<4x128x128xf32> to vector<1x128x128xf32>
    %115 = vector.shape_cast %114 : vector<1x128x128xf32> to vector<128x128xf32>
    %116 = arith.addf %113, %115 : vector<128x128xf32>
    %cst_39 = arith.constant 2.500000e-01 : f32
    %117 = vector.broadcast %cst_39 : f32 to vector<128x128xf32>
    %118 = arith.mulf %116, %117 : vector<128x128xf32>
    %c0_40 = arith.constant 0 : index
    %c0_41 = arith.constant 0 : index
    %c0_42 = arith.constant 0 : index
    %119 = vector.load %arg9[%c0_40, %c0_41, %c0_42] : memref<1x128x128xf32, #tpu.memory_space<vmem>>, vector<1x128x128xf32>
    %120 = vector.shape_cast %119 : vector<1x128x128xf32> to vector<128x128xf32>
    %121 = vector.shape_cast %118 : vector<128x128xf32> to vector<1x128x128xf32>
    tpu.vector_store %arg9[%c0_40, %c0_41, %c0_42], %121 {strides = array<i32>} : memref<1x128x128xf32, #tpu.memory_space<vmem>>, vector<1x128x128xf32>,
    return
  }
  func.func @transform_0(%arg0: i32) -> (i32, i32, i32) {
    %c0_i32 = arith.constant 0 : i32
    %c0_i32_0 = arith.constant 0 : i32
    %c0_i32_1 = arith.constant 0 : i32
    return %arg0, %c0_i32, %c0_i32_0 : i32, i32, i32
  }
  func.func @transform_1(%arg0: i32) -> (i32, i32) {
    %c0_i32 = arith.constant 0 : i32
    %c0_i32_0 = arith.constant 0 : i32
    %c0_i32_1 = arith.constant 0 : i32
    return %c0_i32, %c0_i32_0 : i32, i32
  }
  func.func @transform_2(%arg0: i32) -> (i32, i32) {
    %c0_i32 = arith.constant 0 : i32
    %c0_i32_0 = arith.constant 0 : i32
    %c0_i32_1 = arith.constant 0 : i32
    return %c0_i32, %c0_i32_0 : i32, i32
  }
  func.func @transform_3(%arg0: i32) -> (i32, i32) {
    %c0_i32 = arith.constant 0 : i32
    %c0_i32_0 = arith.constant 0 : i32
    %c0_i32_1 = arith.constant 0 : i32
    return %c0_i32, %c0_i32_0 : i32, i32
  }
  func.func @transform_4(%arg0: i32) -> (i32, i32) {
    %c0_i32 = arith.constant 0 : i32
    %c0_i32_0 = arith.constant 0 : i32
    %c0_i32_1 = arith.constant 0 : i32
    return %c0_i32, %c0_i32_0 : i32, i32
  }
  func.func @transform_5(%arg0: i32) -> (i32, i32, i32) {
    %c0_i32 = arith.constant 0 : i32
    %c0_i32_0 = arith.constant 0 : i32
    %c0_i32_1 = arith.constant 0 : i32
    %c0_i32_2 = arith.constant 0 : i32
    return %c0_i32, %c0_i32_0, %c0_i32_1 : i32, i32, i32
  }
  func.func @transform_6(%arg0: i32) -> (i32, i32) {
    %c0_i32 = arith.constant 0 : i32
    %c0_i32_0 = arith.constant 0 : i32
    %c0_i32_1 = arith.constant 0 : i32
    return %c0_i32, %c0_i32_0 : i32, i32
  }
  func.func @transform_7(%arg0: i32) -> (i32, i32, i32) {
    %c0_i32 = arith.constant 0 : i32
    %c0_i32_0 = arith.constant 0 : i32
    %c0_i32_1 = arith.constant 0 : i32
    return %arg0, %c0_i32, %c0_i32_0 : i32, i32, i32
  }
  func.func @transform_8(%arg0: i32) -> (i32, i32, i32) {
    %c0_i32 = arith.constant 0 : i32
    %c0_i32_0 = arith.constant 0 : i32
    %c0_i32_1 = arith.constant 0 : i32
    return %arg0, %c0_i32, %c0_i32_0 : i32, i32, i32
  }
}

</mosaic_0001>

<llo_original>
// kernel: tpu_custom_call.1
$region0: #{tpu_custom_call.1}
  #allocation0 [shape = 'u32[]', space=smem, size = 0x4, offset = 0x4, fixed_abs, tag = 'smem constant byte address 0x4 - core index']
  #allocation1 [shape = 'u32[72,128]{1,0:T(1,128)}', space=vmem, size = 0x9000, scoped, tag = 'internal scratch']
  %s0 = inlined_call_operand.hbm [shape: f32[2,128,128], index: 0, kind: input, shape index: {}]
  %s1 = inlined_call_operand.hbm [shape: f32[1,128], index: 1, kind: input, shape index: {}]
  %s2 = inlined_call_operand.hbm [shape: f32[1,128], index: 2, kind: input, shape index: {}]
  %s3 = inlined_call_operand.hbm [shape: f32[128,384], index: 3, kind: input, shape index: {}]
  %s4 = inlined_call_operand.vmem [shape: f32[1,384], index: 4, kind: input, shape index: {}]
  %s5 = inlined_call_operand.hbm [shape: f32[4,32,128], index: 5, kind: input, shape index: {}]
  %s6 = inlined_call_operand.vmem [shape: f32[1,128], index: 6, kind: input, shape index: {}]
  %s7 = inlined_call_operand.hbm [shape: f32[2,128,128], index: 7, kind: output, shape index: {0}]
  %s8 = inlined_call_operand.hbm [shape: f32[2,128,128], index: 8, kind: output, shape index: {1}]
  %9 = xla_tuple %s7, %s8
  %s10 = sld [smem:[#allocation0]]
  $region89: #{tpu_custom_call.1} parent=0
    _
  %s12 = ssub.s32 1, %s10
  %s13 = scalar_select 0, %s12, %s10
  $region1: #{tpu_custom_call.1} parent=0
    #allocation2 [shape = 'u8[131072]{0}', space=vmem, size = 0x20000, scoped, tag = 'input window, operand 0']
    #allocation3 [shape = 's32[2]{0}', space=sflag, size = 0x8, scoped, tag = 'scoped memory for tpu_custom_call.1']
    #allocation4 [shape = 's32[2]{0}', space=sflag, size = 0x8, scoped, tag = 'scoped memory for tpu_custom_call.1']
    #allocation5 [shape = 'u8[512]{0}', space=vmem, size = 0x400, scoped, tag = 'input window, operand 1, single buffered']
    #allocation6 [shape = 's32[1]{0}', space=sflag, size = 0x4, scoped, tag = 'scoped memory for tpu_custom_call.1']
    #allocation7 [shape = 'u8[512]{0}', space=vmem, size = 0x400, scoped, tag = 'input window, operand 2, single buffered']
    #allocation8 [shape = 'u8[196608]{0}', space=vmem, size = 0x30000, scoped, tag = 'input window, operand 3, single buffered']
    #allocation9 [shape = 's32[1]{0}', space=sflag, size = 0x4, scoped, tag = 'scoped memory for tpu_custom_call.1']
    #allocation10 [shape = 'u8[65536]{0}', space=vmem, size = 0x10000, scoped, tag = 'input window, operand 5, single buffered']
    #allocation11 [shape = 'u8[131072]{0}', space=vmem, size = 0x20000, scoped, tag = 'output window, operand 0']
    #allocation12 [shape = 'u8[131072]{0}', space=vmem, size = 0x20000, scoped, tag = 'output window, operand 1']
    #allocation13 [shape = 's32[2]{0}', space=sflag, size = 0x8, scoped, tag = 'scoped memory for tpu_custom_call.1']
    %14 = vsyncpa [#allocation3], 0
    %s15 = scalar_lea.sflag [#allocation3], 1
    %16 = vsyncpa %s15, 0
    %17 = vsyncpa [#allocation6], 0
    %18 = vsyncpa [#allocation9], 0
    %19 = vsyncpa [#allocation4], 0
    %s20 = scalar_lea.sflag [#allocation4], 1
    %21 = vsyncpa %s20, 0
    %22 = vsyncpa [#allocation13], 0
    %s23 = scalar_lea.sflag [#allocation13], 1
    %24 = vsyncpa %s23, 0
    loop: start=0, step=1, limit=4
    $region2: #{tpu_custom_call.1} parent=1 // loop_pre_header
      _
    $region3: #{tpu_custom_call.1} parent=1 // loop_header
      %s26 = sphi 0, %s30
      %p27 = scmp.ge.s32.totalorder %s26, 4
      %s36 = sphi 0, %s38
      %s39 = sphi 0, %s36
      %s40 = sphi 0, %s39
      %s56 = sphi 0, %s40
      %s60 = sphi 0, %s60
      %s62 = sphi 0, %s60
      %s63 = sphi 0, %s62
      %s77 = sphi 0, %s63
      %s81 = sphi 0, %s81
      %s83 = sphi 0, %s81
      %s84 = sphi 0, %s83
      %s98 = sphi 0, %s84
      %s102 = sphi 0, %s102
      %s104 = sphi 0, %s102
      %s105 = sphi 0, %s104
      %s119 = sphi 0, %s105
      %s123 = sphi 0, %s123
      %s125 = sphi 0, %s123
      %s126 = sphi 0, %s125
      %s140 = sphi 0, %s126
      %s144 = sphi 0, %s144
      %s146 = sphi 0, %s144
      %s147 = sphi 0, %s146
      %s161 = sphi 0, %s147
      %s165 = sphi 0, %s165
      %s167 = sphi 0, %s165
      %s168 = sphi 0, %s167
      %s182 = sphi 0, %s168
      %s188 = sphi 0, %s190
      %s191 = sphi 0, %s188
      %s192 = sphi 0, %s191
      %s208 = sphi 0, %s192
      %s214 = sphi 0, %s216
      %s217 = sphi 0, %s214
      %s218 = sphi 0, %s217
      %s234 = sphi 0, %s218
    $region4: #{tpu_custom_call.1} parent=1 // loop_header_branch
      %29 = sbr.rel (%p27) target = $region8
    $region5: #{tpu_custom_call.1} parent=1 // loop_body
      %s31 = ssub.s32 %s26, 1
      %s32 = ssub.s32 %s26, 2
      %s33 = sadd.s32 %s26, 1
      %s34 = ssub.s32 %s26, %s33
      %p35 = scmp.eq.s32.totalorder %s34, 0
      %s37 = sadd.s32 %s36, 1
      %s38 = scalar_select %p35, %s36, %s37
      %p41 = pneg %p35
      %p42 = scmp.eq.s32.totalorder %s26, 1
      %p43 = por %p41, %p42
      %p44 = scmp.ne.s32.totalorder %s36, %s39
      %p45 = scmp.eq.s32.totalorder %s26, 0
      %p46 = por %p44, %p45
      %p47 = scmp.ne.s32.totalorder %s36, %s39
      %p48 = scmp.eq.s32.totalorder %s31, 1
      %p49 = por %p47, %p48
      %p50 = scmp.ne.s32.totalorder %s39, %s40
      %p51 = scmp.eq.s32.totalorder %s31, 0
      %p52 = por %p50, %p51
      %p53 = scmp.ne.s32.totalorder %s39, %s40
      %p54 = scmp.eq.s32.totalorder %s32, 1
      %p55 = por %p53, %p54
      %p57 = scmp.ne.s32.totalorder %s40, %s56
      %p58 = scmp.eq.s32.totalorder %s32, 0
      %p59 = por %p57, %p58
      %s61 = sadd.s32 %s60, 1
      %p64 = scmp.eq.s32.totalorder %s26, 1
      %p65 = scmp.ne.s32.totalorder %s60, %s62
      %p66 = scmp.eq.s32.totalorder %s26, 0
      %p67 = por %p65, %p66
      %p68 = scmp.ne.s32.totalorder %s60, %s62
      %p69 = scmp.eq.s32.totalorder %s31, 1
      %p70 = por %p68, %p69
      %p71 = scmp.ne.s32.totalorder %s62, %s63
      %p72 = scmp.eq.s32.totalorder %s31, 0
      %p73 = por %p71, %p72
      %p74 = scmp.ne.s32.totalorder %s62, %s63
      %p75 = scmp.eq.s32.totalorder %s32, 1
      %p76 = por %p74, %p75
      %p78 = scmp.ne.s32.totalorder %s63, %s77
      %p79 = scmp.eq.s32.totalorder %s32, 0
      %p80 = por %p78, %p79
      %s82 = sadd.s32 %s81, 1
      %p85 = scmp.eq.s32.totalorder %s26, 1
      %p86 = scmp.ne.s32.totalorder %s81, %s83
      %p87 = scmp.eq.s32.totalorder %s26, 0
      %p88 = por %p86, %p87
      %p89 = scmp.ne.s32.totalorder %s81, %s83
      %p90 = scmp.eq.s32.totalorder %s31, 1
      %p91 = por %p89, %p90
      %p92 = scmp.ne.s32.totalorder %s83, %s84
      %p93 = scmp.eq.s32.totalorder %s31, 0
      %p94 = por %p92, %p93
      %p95 = scmp.ne.s32.totalorder %s83, %s84
      %p96 = scmp.eq.s32.totalorder %s32, 1
      %p97 = por %p95, %p96
      %p99 = scmp.ne.s32.totalorder %s84, %s98
      %p100 = scmp.eq.s32.totalorder %s32, 0
      %p101 = por %p99, %p100
      %s103 = sadd.s32 %s102, 1
      %p106 = scmp.eq.s32.totalorder %s26, 1
      %p107 = scmp.ne.s32.totalorder %s102, %s104
      %p108 = scmp.eq.s32.totalorder %s26, 0
      %p109 = por %p107, %p108
      %p110 = scmp.ne.s32.totalorder %s102, %s104
      %p111 = scmp.eq.s32.totalorder %s31, 1
      %p112 = por %p110, %p111
      %p113 = scmp.ne.s32.totalorder %s104, %s105
      %p114 = scmp.eq.s32.totalorder %s31, 0
      %p115 = por %p113, %p114
      %p116 = scmp.ne.s32.totalorder %s104, %s105
      %p117 = scmp.eq.s32.totalorder %s32, 1
      %p118 = por %p116, %p117
      %p120 = scmp.ne.s32.totalorder %s105, %s119
      %p121 = scmp.eq.s32.totalorder %s32, 0
      %p122 = por %p120, %p121
      %s124 = sadd.s32 %s123, 1
      %p127 = scmp.eq.s32.totalorder %s26, 1
      %p128 = scmp.ne.s32.totalorder %s123, %s125
      %p129 = scmp.eq.s32.totalorder %s26, 0
      %p130 = por %p128, %p129
      %p131 = scmp.ne.s32.totalorder %s123, %s125
      %p132 = scmp.eq.s32.totalorder %s31, 1
      %p133 = por %p131, %p132
      %p134 = scmp.ne.s32.totalorder %s125, %s126
      %p135 = scmp.eq.s32.totalorder %s31, 0
      %p136 = por %p134, %p135
      %p137 = scmp.ne.s32.totalorder %s125, %s126
      %p138 = scmp.eq.s32.totalorder %s32, 1
      %p139 = por %p137, %p138
      %p141 = scmp.ne.s32.totalorder %s126, %s140
      %p142 = scmp.eq.s32.totalorder %s32, 0
      %p143 = por %p141, %p142
      %s145 = sadd.s32 %s144, 1
      %p148 = scmp.eq.s32.totalorder %s26, 1
      %p149 = scmp.ne.s32.totalorder %s144, %s146
      %p150 = scmp.eq.s32.totalorder %s26, 0
      %p151 = por %p149, %p150
      %p152 = scmp.ne.s32.totalorder %s144, %s146
      %p153 = scmp.eq.s32.totalorder %s31, 1
      %p154 = por %p152, %p153
      %p155 = scmp.ne.s32.totalorder %s146, %s147
      %p156 = scmp.eq.s32.totalorder %s31, 0
      %p157 = por %p155, %p156
      %p158 = scmp.ne.s32.totalorder %s146, %s147
      %p159 = scmp.eq.s32.totalorder %s32, 1
      %p160 = por %p158, %p159
      %p162 = scmp.ne.s32.totalorder %s147, %s161
      %p163 = scmp.eq.s32.totalorder %s32, 0
      %p164 = por %p162, %p163
      %s166 = sadd.s32 %s165, 1
      %p169 = scmp.eq.s32.totalorder %s26, 1
      %p170 = scmp.ne.s32.totalorder %s165, %s167
      %p171 = scmp.eq.s32.totalorder %s26, 0
      %p172 = por %p170, %p171
      %p173 = scmp.ne.s32.totalorder %s165, %s167
      %p174 = scmp.eq.s32.totalorder %s31, 1
      %p175 = por %p173, %p174
      %p176 = scmp.ne.s32.totalorder %s167, %s168
      %p177 = scmp.eq.s32.totalorder %s31, 0
      %p178 = por %p176, %p177
      %p179 = scmp.ne.s32.totalorder %s167, %s168
      %p180 = scmp.eq.s32.totalorder %s32, 1
      %p181 = por %p179, %p180
      %p183 = scmp.ne.s32.totalorder %s168, %s182
      %p184 = scmp.eq.s32.totalorder %s32, 0
      %p185 = por %p183, %p184
      %s186 = ssub.s32 %s26, %s33
      %p187 = scmp.eq.s32.totalorder %s186, 0
      %s189 = sadd.s32 %s188, 1
      %s190 = scalar_select %p187, %s188, %s189
      %p193 = pneg %p187
      %p194 = scmp.eq.s32.totalorder %s26, 1
      %p195 = por %p193, %p194
      %p196 = scmp.ne.s32.totalorder %s188, %s191
      %p197 = scmp.eq.s32.totalorder %s26, 0
      %p198 = por %p196, %p197
      %p199 = scmp.ne.s32.totalorder %s188, %s191
      %p200 = scmp.eq.s32.totalorder %s31, 1
      %p201 = por %p199, %p200
      %p202 = scmp.ne.s32.totalorder %s191, %s192
      %p203 = scmp.eq.s32.totalorder %s31, 0
      %p204 = por %p202, %p203
      %p205 = scmp.ne.s32.totalorder %s191, %s192
      %p206 = scmp.eq.s32.totalorder %s32, 1
      %p207 = por %p205, %p206
      %p209 = scmp.ne.s32.totalorder %s192, %s208
      %p210 = scmp.eq.s32.totalorder %s32, 0
      %p211 = por %p209, %p210
      %s212 = ssub.s32 %s26, %s33
      %p213 = scmp.eq.s32.totalorder %s212, 0
      %s215 = sadd.s32 %s214, 1
      %s216 = scalar_select %p213, %s214, %s215
      %p219 = pneg %p213
      %p220 = scmp.eq.s32.totalorder %s26, 1
      %p221 = por %p219, %p220
      %p222 = scmp.ne.s32.totalorder %s214, %s217
      %p223 = scmp.eq.s32.totalorder %s26, 0
      %p224 = por %p222, %p223
      %p225 = scmp.ne.s32.totalorder %s214, %s217
      %p226 = scmp.eq.s32.totalorder %s31, 1
      %p227 = por %p225, %p226
      %p228 = scmp.ne.s32.totalorder %s217, %s218
      %p229 = scmp.eq.s32.totalorder %s31, 0
      %p230 = por %p228, %p229
      %p231 = scmp.ne.s32.totalorder %s217, %s218
      %p232 = scmp.eq.s32.totalorder %s32, 1
      %p233 = por %p231, %p232
      %p235 = scmp.ne.s32.totalorder %s218, %s234
      %p236 = scmp.eq.s32.totalorder %s32, 0
      %p237 = por %p235, %p236
      %p238 = scmp.le.s32.totalorder 1, %s26
      %p239 = scmp.lt.s32.totalorder %s26, 3
      %p240 = pnand %p238, %p239
      %p241 = pneg %p240
      // Predicated region
      $region9: #{tpu_custom_call.1} parent=5 // pred_check
        _
      $region10: #{tpu_custom_call.1} parent=5 // pred_check_branch
        %243 = sbr.rel (%p240) target = $region12
      $region11: #{tpu_custom_call.1} parent=5 // pred_region
        %s244 = ssub.s32 %s26, 1
        // Predicated region
        $region13: #{tpu_custom_call.1} parent=11 // pred_check
          %p245 = pneg %p73
        $region14: #{tpu_custom_call.1} parent=11 // pred_check_branch
          %247 = sbr.rel (%p245) target = $region16
        $region15: #{tpu_custom_call.1} parent=11 // pred_region
          %249 = vsyncadd [#allocation6], 0
          %s251 = sshll.u32 %s1, 4
          %s252 = int_to_ptr.hbm [resolvable:$true] %s251
          %s253 = sshll.u32 [#allocation5], 4
          %s254 = int_to_ptr.vmem [resolvable:$true] %s253
          %256 = dma.hbm_to_vmem [thread:$0]  %s252, 16, %s254, [#allocation6]
        $region16: #{tpu_custom_call.1} parent=11 // pred_fallthru
          _
        // Predicated region
        $region17: #{tpu_custom_call.1} parent=11 // pred_check
          %p257 = pneg %p94
        $region18: #{tpu_custom_call.1} parent=11 // pred_check_branch
          %259 = sbr.rel (%p257) target = $region20
        $region19: #{tpu_custom_call.1} parent=11 // pred_region
          %261 = vsyncadd [#allocation6], 0
          %s263 = sshll.u32 %s2, 4
          %s264 = int_to_ptr.hbm [resolvable:$true] %s263
          %s265 = sshll.u32 [#allocation7], 4
          %s266 = int_to_ptr.vmem [resolvable:$true] %s265
          %268 = dma.hbm_to_vmem [thread:$0]  %s264, 16, %s266, [#allocation6]
        $region20: #{tpu_custom_call.1} parent=11 // pred_fallthru
          _
        // Predicated region
        $region21: #{tpu_custom_call.1} parent=11 // pred_check
          %p269 = pneg %p115
        $region22: #{tpu_custom_call.1} parent=11 // pred_check_branch
          %271 = sbr.rel (%p269) target = $region24
        $region23: #{tpu_custom_call.1} parent=11 // pred_region
          %273 = vsyncadd [#allocation9], 0
          %s274 = sshll.u32 %s3, 4
          %s275 = int_to_ptr.hbm [resolvable:$true] %s274
          %s276 = sshll.u32 [#allocation8], 4
          %s277 = int_to_ptr.vmem [resolvable:$true] %s276
          %282 = dma.hbm_to_vmem [thread:$0]  %s275, 6144, %s277, [#allocation9], 384, 384, 24
        $region24: #{tpu_custom_call.1} parent=11 // pred_fallthru
          _
        // Predicated region
        $region25: #{tpu_custom_call.1} parent=11 // pred_check
          %p283 = pneg %p136
        $region26: #{tpu_custom_call.1} parent=11 // pred_check_branch
          %285 = sbr.rel (%p283) target = $region28
        $region27: #{tpu_custom_call.1} parent=11 // pred_region
          _
        $region28: #{tpu_custom_call.1} parent=11 // pred_fallthru
          _
        // Predicated region
        $region29: #{tpu_custom_call.1} parent=11 // pred_check
          %p286 = pneg %p157
        $region30: #{tpu_custom_call.1} parent=11 // pred_check_branch
          %288 = sbr.rel (%p286) target = $region32
        $region31: #{tpu_custom_call.1} parent=11 // pred_region
          %290 = vsyncadd [#allocation9], 0
          %s291 = sshll.u32 %s5, 4
          %s292 = int_to_ptr.hbm [resolvable:$true] %s291
          %s293 = sshll.u32 [#allocation10], 4
          %s294 = int_to_ptr.vmem [resolvable:$true] %s293
          %299 = dma.hbm_to_vmem [thread:$0]  %s292, 2048, %s294, [#allocation9], 128, 128, 8
        $region32: #{tpu_custom_call.1} parent=11 // pred_fallthru
          _
        // Predicated region
        $region33: #{tpu_custom_call.1} parent=11 // pred_check
          %p300 = pneg %p178
        $region34: #{tpu_custom_call.1} parent=11 // pred_check_branch
          %302 = sbr.rel (%p300) target = $region36
        $region35: #{tpu_custom_call.1} parent=11 // pred_region
          _
        $region36: #{tpu_custom_call.1} parent=11 // pred_fallthru
          _
      $region12: #{tpu_custom_call.1} parent=5 // pred_fallthru
        _
      %p303 = scmp.lt.s32.totalorder %s26, 2
      // Predicated region
      $region37: #{tpu_custom_call.1} parent=5 // pred_check
        %p304 = pneg %p303
      $region38: #{tpu_custom_call.1} parent=5 // pred_check_branch
        %306 = sbr.rel (%p304) target = $region40
      $region39: #{tpu_custom_call.1} parent=5 // pred_region
        // Predicated region
        $region41: #{tpu_custom_call.1} parent=39 // pred_check
          %p307 = pneg %p46
        $region42: #{tpu_custom_call.1} parent=39 // pred_check_branch
          %309 = sbr.rel (%p307) target = $region44
        $region43: #{tpu_custom_call.1} parent=39 // pred_region
          %s310 = sand.u32 %s36, 1
          %s311 = scalar_lea.sflag [#allocation3], %s310
          %s312 = sand.u32 %s36, 1
          %s313 = smul.addr %s312, 128
          %s314 = scalar_lea.vmem [#allocation2], %s313
          %316 = vsyncadd %s311, 0
          %s317 = smul.addr %s26, 16
          %s318 = smul.addr %s317, 8
          %s319 = scalar_lea.hbm %s0, %s318
          %s320 = sshll.u32 %s319, 4
          %s321 = int_to_ptr.hbm [resolvable:$true] %s320
          %s322 = sshll.u32 %s314, 4
          %s323 = int_to_ptr.vmem [resolvable:$true] %s322
          %328 = dma.hbm_to_vmem [thread:$0]  %s321, 2048, %s323, %s311, 128, 128, 8
        $region44: #{tpu_custom_call.1} parent=39 // pred_fallthru
          _
      $region40: #{tpu_custom_call.1} parent=5 // pred_fallthru
        _
      %p329 = scmp.le.s32.totalorder 1, %s26
      %p330 = scmp.lt.s32.totalorder %s26, 3
      %p331 = pnand %p329, %p330
      %p332 = pneg %p331
      // Predicated region
      $region45: #{tpu_custom_call.1} parent=5 // pred_check
        _
      $region46: #{tpu_custom_call.1} parent=5 // pred_check_branch
        %334 = sbr.rel (%p331) target = $region48
      $region47: #{tpu_custom_call.1} parent=5 // pred_region
        %s335 = ssub.s32 %s26, 1
        %s336 = sand.u32 %s39, 1
        %s337 = scalar_lea.sflag [#allocation3], %s336
        %s338 = sand.u32 %s39, 1
        %s339 = smul.addr %s338, 128
        %s340 = scalar_lea.vmem [#allocation2], %s339
        // Predicated region
        $region49: #{tpu_custom_call.1} parent=47 // pred_check
          %p341 = pneg %p52
        $region50: #{tpu_custom_call.1} parent=47 // pred_check_branch
          %343 = sbr.rel (%p341) target = $region52
        $region51: #{tpu_custom_call.1} parent=47 // pred_region
          %345 = dma.done %s337, 2048
        $region52: #{tpu_custom_call.1} parent=47 // pred_fallthru
          _
        // Predicated region
        $region53: #{tpu_custom_call.1} parent=47 // pred_check
          %p346 = pneg %p73
        $region54: #{tpu_custom_call.1} parent=47 // pred_check_branch
          %348 = sbr.rel (%p346) target = $region56
        $region55: #{tpu_custom_call.1} parent=47 // pred_region
          %350 = dma.done [#allocation6], 16
        $region56: #{tpu_custom_call.1} parent=47 // pred_fallthru
          _
        // Predicated region
        $region57: #{tpu_custom_call.1} parent=47 // pred_check
          %p351 = pneg %p94
        $region58: #{tpu_custom_call.1} parent=47 // pred_check_branch
          %353 = sbr.rel (%p351) target = $region60
        $region59: #{tpu_custom_call.1} parent=47 // pred_region
          %355 = dma.done [#allocation6], 16
        $region60: #{tpu_custom_call.1} parent=47 // pred_fallthru
          _
        // Predicated region
        $region61: #{tpu_custom_call.1} parent=47 // pred_check
          %p356 = pneg %p115
        $region62: #{tpu_custom_call.1} parent=47 // pred_check_branch
          %358 = sbr.rel (%p356) target = $region64
        $region63: #{tpu_custom_call.1} parent=47 // pred_region
          %360 = dma.done [#allocation9], 6144
        $region64: #{tpu_custom_call.1} parent=47 // pred_fallthru
          _
        // Predicated region
        $region65: #{tpu_custom_call.1} parent=47 // pred_check
          %p361 = pneg %p157
        $region66: #{tpu_custom_call.1} parent=47 // pred_check_branch
          %363 = sbr.rel (%p361) target = $region68
        $region67: #{tpu_custom_call.1} parent=47 // pred_region
          %365 = dma.done [#allocation9], 2048
        $region68: #{tpu_custom_call.1} parent=47 // pred_fallthru
          _
        %s366 = sand.u32 %s39, 1
        %s367 = scalar_lea.sflag [#allocation3], %s366
        %s368 = sand.u32 %s39, 1
        %s369 = smul.addr %s368, 128
        %s370 = scalar_lea.vmem [#allocation2], %s369
        %p371 = pneg %p52
        %p372 = pneg %p49
        %p373 = pneg %p73
        %p374 = pneg %p70
        %p375 = pneg %p94
        %p376 = pneg %p91
        %p377 = pneg %p115
        %p378 = pneg %p112
        %p379 = pneg %p136
        %p380 = pneg %p133
        %p381 = pneg %p157
        %p382 = pneg %p154
        %p383 = pneg %p178
        %p384 = pneg %p175
        %p385 = pneg %p204
        %p386 = pneg %p201
        %s387 = sand.u32 %s191, 1
        %s388 = scalar_lea.sflag [#allocation4], %s387
        %s389 = sand.u32 %s191, 1
        %s390 = smul.addr %s389, 128
        %s391 = scalar_lea.vmem [#allocation11], %s390
        %p392 = pneg %p230
        %p393 = pneg %p227
        %s394 = sand.u32 %s217, 1
        %s395 = scalar_lea.sflag [#allocation13], %s394
        %s396 = sand.u32 %s217, 1
        %s397 = smul.addr %s396, 128
        %s398 = scalar_lea.vmem [#allocation12], %s397
        %v399 = vld [vmem:[%s340] sm:$0xff]
        %v400 = vld [vmem:[%s340 + $0x8] sm:$0xff]
        %v401 = vld [vmem:[%s340 + $0x10] sm:$0xff]
        %v402 = vld [vmem:[%s340 + $0x18] sm:$0xff]
        %v403 = vld [vmem:[%s340 + $0x20] sm:$0xff]
        %v404 = vld [vmem:[%s340 + $0x28] sm:$0xff]
        %v405 = vld [vmem:[%s340 + $0x30] sm:$0xff]
        %v406 = vld [vmem:[%s340 + $0x38] sm:$0xff]
        %v407 = vld [vmem:[%s340 + $0x40] sm:$0xff]
        %v408 = vld [vmem:[%s340 + $0x48] sm:$0xff]
        %v409 = vld [vmem:[%s340 + $0x50] sm:$0xff]
        %v410 = vld [vmem:[%s340 + $0x58] sm:$0xff]
        %v411 = vld [vmem:[%s340 + $0x60] sm:$0xff]
        %v412 = vld [vmem:[%s340 + $0x68] sm:$0xff]
        %v413 = vld [vmem:[%s340 + $0x70] sm:$0xff]
        %v414 = vld [vmem:[%s340 + $0x78] sm:$0xff]
        %415 = vadd.xlane.f32.xlu0 %v399
        %v416 = vpop.xlane.xlu0 %415
        %417 = vadd.xlane.f32.xlu0 %v400
        %v418 = vpop.xlane.xlu0 %417
        %419 = vadd.xlane.f32.xlu0 %v401
        %v420 = vpop.xlane.xlu0 %419
        %421 = vadd.xlane.f32.xlu0 %v402
        %v422 = vpop.xlane.xlu0 %421
        %423 = vadd.xlane.f32.xlu0 %v403
        %v424 = vpop.xlane.xlu0 %423
        %425 = vadd.xlane.f32.xlu0 %v404
        %v426 = vpop.xlane.xlu0 %425
        %427 = vadd.xlane.f32.xlu0 %v405
        %v428 = vpop.xlane.xlu0 %427
        %429 = vadd.xlane.f32.xlu0 %v406
        %v430 = vpop.xlane.xlu0 %429
        %431 = vadd.xlane.f32.xlu0 %v407
        %v432 = vpop.xlane.xlu0 %431
        %433 = vadd.xlane.f32.xlu0 %v408
        %v434 = vpop.xlane.xlu0 %433
        %435 = vadd.xlane.f32.xlu0 %v409
        %v436 = vpop.xlane.xlu0 %435
        %437 = vadd.xlane.f32.xlu0 %v410
        %v438 = vpop.xlane.xlu0 %437
        %439 = vadd.xlane.f32.xlu0 %v411
        %v440 = vpop.xlane.xlu0 %439
        %441 = vadd.xlane.f32.xlu0 %v412
        %v442 = vpop.xlane.xlu0 %441
        %443 = vadd.xlane.f32.xlu0 %v413
        %v444 = vpop.xlane.xlu0 %443
        %445 = vadd.xlane.f32.xlu0 %v414
        %v446 = vpop.xlane.xlu0 %445
        %v447 = vrcp.pop 128.0
        %v448 = vmul.f32 128.0, %v447
        %v449 = vsub.f32 1.0, %v448
        %v450 = vmul.f32 %v447, %v449
        %v451 = vadd.f32 %v447, %v450
        %vm452 = vweird.f32 %v447
        %v453 = vsel %vm452, %v447, %v451
        %v454 = vmul.f32 %v416, %v453
        %v455 = vmul.f32 %v418, %v453
        %v456 = vmul.f32 %v420, %v453
        %v457 = vmul.f32 %v422, %v453
        %v458 = vmul.f32 %v424, %v453
        %v459 = vmul.f32 %v426, %v453
        %v460 = vmul.f32 %v428, %v453
        %v461 = vmul.f32 %v430, %v453
        %v462 = vmul.f32 %v432, %v453
        %v463 = vmul.f32 %v434, %v453
        %v464 = vmul.f32 %v436, %v453
        %v465 = vmul.f32 %v438, %v453
        %v466 = vmul.f32 %v440, %v453
        %v467 = vmul.f32 %v442, %v453
        %v468 = vmul.f32 %v444, %v453
        %v469 = vmul.f32 %v446, %v453
        %v470 = vsub.f32 %v399, %v454
        %v471 = vsub.f32 %v400, %v455
        %v472 = vsub.f32 %v401, %v456
        %v473 = vsub.f32 %v402, %v457
        %v474 = vsub.f32 %v403, %v458
        %v475 = vsub.f32 %v404, %v459
        %v476 = vsub.f32 %v405, %v460
        %v477 = vsub.f32 %v406, %v461
        %v478 = vsub.f32 %v407, %v462
        %v479 = vsub.f32 %v408, %v463
        %v480 = vsub.f32 %v409, %v464
        %v481 = vsub.f32 %v410, %v465
        %v482 = vsub.f32 %v411, %v466
        %v483 = vsub.f32 %v412, %v467
        %v484 = vsub.f32 %v413, %v468
        %v485 = vsub.f32 %v414, %v469
        %v486 = vmul.f32 %v470, %v470
        %v487 = vmul.f32 %v471, %v471
        %v488 = vmul.f32 %v472, %v472
        %v489 = vmul.f32 %v473, %v473
        %v490 = vmul.f32 %v474, %v474
        %v491 = vmul.f32 %v475, %v475
        %v492 = vmul.f32 %v476, %v476
        %v493 = vmul.f32 %v477, %v477
        %v494 = vmul.f32 %v478, %v478
        %v495 = vmul.f32 %v479, %v479
        %v496 = vmul.f32 %v480, %v480
        %v497 = vmul.f32 %v481, %v481
        %v498 = vmul.f32 %v482, %v482
        %v499 = vmul.f32 %v483, %v483
        %v500 = vmul.f32 %v484, %v484
        %v501 = vmul.f32 %v485, %v485
        %502 = vadd.xlane.f32.xlu0 %v486
        %v503 = vpop.xlane.xlu0 %502
        %504 = vadd.xlane.f32.xlu0 %v487
        %v505 = vpop.xlane.xlu0 %504
        %506 = vadd.xlane.f32.xlu0 %v488
        %v507 = vpop.xlane.xlu0 %506
        %508 = vadd.xlane.f32.xlu0 %v489
        %v509 = vpop.xlane.xlu0 %508
        %510 = vadd.xlane.f32.xlu0 %v490
        %v511 = vpop.xlane.xlu0 %510
        %512 = vadd.xlane.f32.xlu0 %v491
        %v513 = vpop.xlane.xlu0 %512
        %514 = vadd.xlane.f32.xlu0 %v492
        %v515 = vpop.xlane.xlu0 %514
        %516 = vadd.xlane.f32.xlu0 %v493
        %v517 = vpop.xlane.xlu0 %516
        %518 = vadd.xlane.f32.xlu0 %v494
        %v519 = vpop.xlane.xlu0 %518
        %520 = vadd.xlane.f32.xlu0 %v495
        %v521 = vpop.xlane.xlu0 %520
        %522 = vadd.xlane.f32.xlu0 %v496
        %v523 = vpop.xlane.xlu0 %522
        %524 = vadd.xlane.f32.xlu0 %v497
        %v525 = vpop.xlane.xlu0 %524
        %526 = vadd.xlane.f32.xlu0 %v498
        %v527 = vpop.xlane.xlu0 %526
        %528 = vadd.xlane.f32.xlu0 %v499
        %v529 = vpop.xlane.xlu0 %528
        %530 = vadd.xlane.f32.xlu0 %v500
        %v531 = vpop.xlane.xlu0 %530
        %532 = vadd.xlane.f32.xlu0 %v501
        %v533 = vpop.xlane.xlu0 %532
        %v534 = vmul.f32 %v503, %v453
        %v535 = vmul.f32 %v505, %v453
        %v536 = vmul.f32 %v507, %v453
        %v537 = vmul.f32 %v509, %v453
        %v538 = vmul.f32 %v511, %v453
        %v539 = vmul.f32 %v513, %v453
        %v540 = vmul.f32 %v515, %v453
        %v541 = vmul.f32 %v517, %v453
        %v542 = vmul.f32 %v519, %v453
        %v543 = vmul.f32 %v521, %v453
        %v544 = vmul.f32 %v523, %v453
        %v545 = vmul.f32 %v525, %v453
        %v546 = vmul.f32 %v527, %v453
        %v547 = vmul.f32 %v529, %v453
        %v548 = vmul.f32 %v531, %v453
        %v549 = vmul.f32 %v533, %v453
        %v550 = vadd.f32 %v534, 1e-05
        %v551 = vadd.f32 %v535, 1e-05
        %v552 = vadd.f32 %v536, 1e-05
        %v553 = vadd.f32 %v537, 1e-05
        %v554 = vadd.f32 %v538, 1e-05
        %v555 = vadd.f32 %v539, 1e-05
        %v556 = vadd.f32 %v540, 1e-05
        %v557 = vadd.f32 %v541, 1e-05
        %v558 = vadd.f32 %v542, 1e-05
        %v559 = vadd.f32 %v543, 1e-05
        %v560 = vadd.f32 %v544, 1e-05
        %v561 = vadd.f32 %v545, 1e-05
        %v562 = vadd.f32 %v546, 1e-05
        %v563 = vadd.f32 %v547, 1e-05
        %v564 = vadd.f32 %v548, 1e-05
        %v565 = vadd.f32 %v549, 1e-05
        %v566 = vrsqrt.pop %v550
        %v567 = vmul.f32 %v566, %v550
        %v568 = vmul.f32 %v567, %v566
        %v569 = vmul.f32 0.5, %v568
        %v570 = vsub.f32 1.5, %v569
        %v571 = vmul.f32 %v566, %v570
        %vm572 = vweird.f32 %v550
        %vm573 = vweird.f32 %v566
        %vm574 = vmor %vm572, %vm573
        %v575 = vsel %vm574, %v566, %v571
        %v576 = vrsqrt.pop %v551
        %v577 = vmul.f32 %v576, %v551
        %v578 = vmul.f32 %v577, %v576
        %v579 = vmul.f32 0.5, %v578
        %v580 = vsub.f32 1.5, %v579
        %v581 = vmul.f32 %v576, %v580
        %vm582 = vweird.f32 %v551
        %vm583 = vweird.f32 %v576
        %vm584 = vmor %vm582, %vm583
        %v585 = vsel %vm584, %v576, %v581
        %v586 = vrsqrt.pop %v552
        %v587 = vmul.f32 %v586, %v552
        %v588 = vmul.f32 %v587, %v586
        %v589 = vmul.f32 0.5, %v588
        %v590 = vsub.f32 1.5, %v589
        %v591 = vmul.f32 %v586, %v590
        %vm592 = vweird.f32 %v552
        %vm593 = vweird.f32 %v586
        %vm594 = vmor %vm592, %vm593
        %v595 = vsel %vm594, %v586, %v591
        %v596 = vrsqrt.pop %v553
        %v597 = vmul.f32 %v596, %v553
        %v598 = vmul.f32 %v597, %v596
        %v599 = vmul.f32 0.5, %v598
        %v600 = vsub.f32 1.5, %v599
        %v601 = vmul.f32 %v596, %v600
        %vm602 = vweird.f32 %v553
        %vm603 = vweird.f32 %v596
        %vm604 = vmor %vm602, %vm603
        %v605 = vsel %vm604, %v596, %v601
        %v606 = vrsqrt.pop %v554
        %v607 = vmul.f32 %v606, %v554
        %v608 = vmul.f32 %v607, %v606
        %v609 = vmul.f32 0.5, %v608
        %v610 = vsub.f32 1.5, %v609
        %v611 = vmul.f32 %v606, %v610
        %vm612 = vweird.f32 %v554
        %vm613 = vweird.f32 %v606
        %vm614 = vmor %vm612, %vm613
        %v615 = vsel %vm614, %v606, %v611
        %v616 = vrsqrt.pop %v555
        %v617 = vmul.f32 %v616, %v555
        %v618 = vmul.f32 %v617, %v616
        %v619 = vmul.f32 0.5, %v618
        %v620 = vsub.f32 1.5, %v619
        %v621 = vmul.f32 %v616, %v620
        %vm622 = vweird.f32 %v555
        %vm623 = vweird.f32 %v616
        %vm624 = vmor %vm622, %vm623
        %v625 = vsel %vm624, %v616, %v621
        %v626 = vrsqrt.pop %v556
        %v627 = vmul.f32 %v626, %v556
        %v628 = vmul.f32 %v627, %v626
        %v629 = vmul.f32 0.5, %v628
        %v630 = vsub.f32 1.5, %v629
        %v631 = vmul.f32 %v626, %v630
        %vm632 = vweird.f32 %v556
        %vm633 = vweird.f32 %v626
        %vm634 = vmor %vm632, %vm633
        %v635 = vsel %vm634, %v626, %v631
        %v636 = vrsqrt.pop %v557
        %v637 = vmul.f32 %v636, %v557
        %v638 = vmul.f32 %v637, %v636
        %v639 = vmul.f32 0.5, %v638
        %v640 = vsub.f32 1.5, %v639
        %v641 = vmul.f32 %v636, %v640
        %vm642 = vweird.f32 %v557
        %vm643 = vweird.f32 %v636
        %vm644 = vmor %vm642, %vm643
        %v645 = vsel %vm644, %v636, %v641
        %v646 = vrsqrt.pop %v558
        %v647 = vmul.f32 %v646, %v558
        %v648 = vmul.f32 %v647, %v646
        %v649 = vmul.f32 0.5, %v648
        %v650 = vsub.f32 1.5, %v649
        %v651 = vmul.f32 %v646, %v650
        %vm652 = vweird.f32 %v558
        %vm653 = vweird.f32 %v646
        %vm654 = vmor %vm652, %vm653
        %v655 = vsel %vm654, %v646, %v651
        %v656 = vrsqrt.pop %v559
        %v657 = vmul.f32 %v656, %v559
        %v658 = vmul.f32 %v657, %v656
        %v659 = vmul.f32 0.5, %v658
        %v660 = vsub.f32 1.5, %v659
        %v661 = vmul.f32 %v656, %v660
        %vm662 = vweird.f32 %v559
        %vm663 = vweird.f32 %v656
        %vm664 = vmor %vm662, %vm663
        %v665 = vsel %vm664, %v656, %v661
        %v666 = vrsqrt.pop %v560
        %v667 = vmul.f32 %v666, %v560
        %v668 = vmul.f32 %v667, %v666
        %v669 = vmul.f32 0.5, %v668
        %v670 = vsub.f32 1.5, %v669
        %v671 = vmul.f32 %v666, %v670
        %vm672 = vweird.f32 %v560
        %vm673 = vweird.f32 %v666
        %vm674 = vmor %vm672, %vm673
        %v675 = vsel %vm674, %v666, %v671
        %v676 = vrsqrt.pop %v561
        %v677 = vmul.f32 %v676, %v561
        %v678 = vmul.f32 %v677, %v676
        %v679 = vmul.f32 0.5, %v678
        %v680 = vsub.f32 1.5, %v679
        %v681 = vmul.f32 %v676, %v680
        %vm682 = vweird.f32 %v561
        %vm683 = vweird.f32 %v676
        %vm684 = vmor %vm682, %vm683
        %v685 = vsel %vm684, %v676, %v681
        %v686 = vrsqrt.pop %v562
        %v687 = vmul.f32 %v686, %v562
        %v688 = vmul.f32 %v687, %v686
        %v689 = vmul.f32 0.5, %v688
        %v690 = vsub.f32 1.5, %v689
        %v691 = vmul.f32 %v686, %v690
        %vm692 = vweird.f32 %v562
        %vm693 = vweird.f32 %v686
        %vm694 = vmor %vm692, %vm693
        %v695 = vsel %vm694, %v686, %v691
        %v696 = vrsqrt.pop %v563
        %v697 = vmul.f32 %v696, %v563
        %v698 = vmul.f32 %v697, %v696
        %v699 = vmul.f32 0.5, %v698
        %v700 = vsub.f32 1.5, %v699
        %v701 = vmul.f32 %v696, %v700
        %vm702 = vweird.f32 %v563
        %vm703 = vweird.f32 %v696
        %vm704 = vmor %vm702, %vm703
        %v705 = vsel %vm704, %v696, %v701
        %v706 = vrsqrt.pop %v564
        %v707 = vmul.f32 %v706, %v564
        %v708 = vmul.f32 %v707, %v706
        %v709 = vmul.f32 0.5, %v708
        %v710 = vsub.f32 1.5, %v709
        %v711 = vmul.f32 %v706, %v710
        %vm712 = vweird.f32 %v564
        %vm713 = vweird.f32 %v706
        %vm714 = vmor %vm712, %vm713
        %v715 = vsel %vm714, %v706, %v711
        %v716 = vrsqrt.pop %v565
        %v717 = vmul.f32 %v716, %v565
        %v718 = vmul.f32 %v717, %v716
        %v719 = vmul.f32 0.5, %v718
        %v720 = vsub.f32 1.5, %v719
        %v721 = vmul.f32 %v716, %v720
        %vm722 = vweird.f32 %v565
        %vm723 = vweird.f32 %v716
        %vm724 = vmor %vm722, %vm723
        %v725 = vsel %vm724, %v716, %v721
        %v726 = vmul.f32 %v470, %v575
        %v727 = vmul.f32 %v471, %v585
        %v728 = vmul.f32 %v472, %v595
        %v729 = vmul.f32 %v473, %v605
        %v730 = vmul.f32 %v474, %v615
        %v731 = vmul.f32 %v475, %v625
        %v732 = vmul.f32 %v476, %v635
        %v733 = vmul.f32 %v477, %v645
        %v734 = vmul.f32 %v478, %v655
        %v735 = vmul.f32 %v479, %v665
        %v736 = vmul.f32 %v480, %v675
        %v737 = vmul.f32 %v481, %v685
        %v738 = vmul.f32 %v482, %v695
        %v739 = vmul.f32 %v483, %v705
        %v740 = vmul.f32 %v484, %v715
        %v741 = vmul.f32 %v485, %v725
        %v742 = vld [vmem:[#allocation5] sm:$0x1]
        %v744 = vperm.slane %v742, 0
        %v746 = vmul.f32 %v726, %v744
        %v747 = vmul.f32 %v727, %v744
        %v748 = vmul.f32 %v728, %v744
        %v749 = vmul.f32 %v729, %v744
        %v750 = vmul.f32 %v730, %v744
        %v751 = vmul.f32 %v731, %v744
        %v752 = vmul.f32 %v732, %v744
        %v753 = vmul.f32 %v733, %v744
        %v754 = vmul.f32 %v734, %v744
        %v755 = vmul.f32 %v735, %v744
        %v756 = vmul.f32 %v736, %v744
        %v757 = vmul.f32 %v737, %v744
        %v758 = vmul.f32 %v738, %v744
        %v759 = vmul.f32 %v739, %v744
        %v760 = vmul.f32 %v740, %v744
        %v761 = vmul.f32 %v741, %v744
        %v762 = vld [vmem:[#allocation7] sm:$0x1]
        %v764 = vperm.slane %v762, 0
        %v766 = vadd.f32 %v746, %v764
        %v767 = vadd.f32 %v747, %v764
        %v768 = vadd.f32 %v748, %v764
        %v769 = vadd.f32 %v749, %v764
        %v770 = vadd.f32 %v750, %v764
        %v771 = vadd.f32 %v751, %v764
        %v772 = vadd.f32 %v752, %v764
        %v773 = vadd.f32 %v753, %v764
        %v774 = vadd.f32 %v754, %v764
        %v775 = vadd.f32 %v755, %v764
        %v776 = vadd.f32 %v756, %v764
        %v777 = vadd.f32 %v757, %v764
        %v778 = vadd.f32 %v758, %v764
        %v779 = vadd.f32 %v759, %v764
        %v780 = vadd.f32 %v760, %v764
        %v781 = vadd.f32 %v761, %v764
        %v782 = vld [vmem:[#allocation8] sm:$0xff]
        %v783 = vld [vmem:[#allocation8 + $0x8] sm:$0xff]
        %v784 = vld [vmem:[#allocation8 + $0x10] sm:$0xff]
        %v785 = vld [vmem:[#allocation8 + $0x18] sm:$0xff]
        %v786 = vld [vmem:[#allocation8 + $0x20] sm:$0xff]
        %v787 = vld [vmem:[#allocation8 + $0x28] sm:$0xff]
        %v788 = vld [vmem:[#allocation8 + $0x30] sm:$0xff]
        %v789 = vld [vmem:[#allocation8 + $0x38] sm:$0xff]
        %v790 = vld [vmem:[#allocation8 + $0x40] sm:$0xff]
        %v791 = vld [vmem:[#allocation8 + $0x48] sm:$0xff]
        %v792 = vld [vmem:[#allocation8 + $0x50] sm:$0xff]
        %v793 = vld [vmem:[#allocation8 + $0x58] sm:$0xff]
        %v794 = vld [vmem:[#allocation8 + $0x60] sm:$0xff]
        %v795 = vld [vmem:[#allocation8 + $0x68] sm:$0xff]
        %v796 = vld [vmem:[#allocation8 + $0x70] sm:$0xff]
        %v797 = vld [vmem:[#allocation8 + $0x78] sm:$0xff]
        %v798 = vld [vmem:[#allocation8 + $0x80] sm:$0xff]
        %v799 = vld [vmem:[#allocation8 + $0x88] sm:$0xff]
        %v800 = vld [vmem:[#allocation8 + $0x90] sm:$0xff]
        %v801 = vld [vmem:[#allocation8 + $0x98] sm:$0xff]
        %v802 = vld [vmem:[#allocation8 + $0xa0] sm:$0xff]
        %v803 = vld [vmem:[#allocation8 + $0xa8] sm:$0xff]
        %v804 = vld [vmem:[#allocation8 + $0xb0] sm:$0xff]
        %v805 = vld [vmem:[#allocation8 + $0xb8] sm:$0xff]
        %v806 = vld [vmem:[#allocation8 + $0xc0] sm:$0xff]
        %v807 = vld [vmem:[#allocation8 + $0xc8] sm:$0xff]
        %v808 = vld [vmem:[#allocation8 + $0xd0] sm:$0xff]
        %v809 = vld [vmem:[#allocation8 + $0xd8] sm:$0xff]
        %v810 = vld [vmem:[#allocation8 + $0xe0] sm:$0xff]
        %v811 = vld [vmem:[#allocation8 + $0xe8] sm:$0xff]
        %v812 = vld [vmem:[#allocation8 + $0xf0] sm:$0xff]
        %v813 = vld [vmem:[#allocation8 + $0xf8] sm:$0xff]
        %v814 = vld [vmem:[#allocation8 + $0x100] sm:$0xff]
        %v815 = vld [vmem:[#allocation8 + $0x108] sm:$0xff]
        %v816 = vld [vmem:[#allocation8 + $0x110] sm:$0xff]
        %v817 = vld [vmem:[#allocation8 + $0x118] sm:$0xff]
        %v818 = vld [vmem:[#allocation8 + $0x120] sm:$0xff]
        %v819 = vld [vmem:[#allocation8 + $0x128] sm:$0xff]
        %v820 = vld [vmem:[#allocation8 + $0x130] sm:$0xff]
        %v821 = vld [vmem:[#allocation8 + $0x138] sm:$0xff]
        %v822 = vld [vmem:[#allocation8 + $0x140] sm:$0xff]
        %v823 = vld [vmem:[#allocation8 + $0x148] sm:$0xff]
        %v824 = vld [vmem:[#allocation8 + $0x150] sm:$0xff]
        %v825 = vld [vmem:[#allocation8 + $0x158] sm:$0xff]
        %v826 = vld [vmem:[#allocation8 + $0x160] sm:$0xff]
        %v827 = vld [vmem:[#allocation8 + $0x168] sm:$0xff]
        %v828 = vld [vmem:[#allocation8 + $0x170] sm:$0xff]
        %v829 = vld [vmem:[#allocation8 + $0x178] sm:$0xff]
        %v830 = vld [vmem:[%s4] sm:$0x7]
        %v832 = vperm.slane %v830, 0
        %v833 = vperm.slane %v830, 1
        %v834 = vperm.slane %v830, 2
        %838 = vmatpush.msra.mxu0 %v827
        %839 = vmatpush.msra.mxu0 %v824
        %840 = vmatpush.msra.mxu0 %v821
        %841 = vmatpush.msra.mxu0 %v818
        %842 = vmatpush.msra.mxu0 %v815
        %843 = vmatpush.msra.mxu0 %v812
        %844 = vmatpush.msra.mxu0 %v809
        %845 = vmatpush.msra.mxu0 %v806
        %846 = vmatpush.msra.mxu0 %v803
        %847 = vmatpush.msra.mxu0 %v800
        %848 = vmatpush.msra.mxu0 %v797
        %849 = vmatpush.msra.mxu0 %v794
        %850 = vmatpush.msra.mxu0 %v791
        %851 = vmatpush.msra.mxu0 %v788
        %852 = vmatpush.msra.mxu0 %v785
        %853 = vmatpush.msra.mxu0 %v782
        %854 = vmatmul.f32.gmra.mxu0 %v766
        %v855 = vpop.f32.mrf.mxu0
        %v856 = vadd.f32 %v832, %v855
        %857 = vmatmul.f32.gmra.mxu0 %v767
        %v858 = vpop.f32.mrf.mxu0
        %v859 = vadd.f32 %v832, %v858
        %860 = vmatmul.f32.gmra.mxu0 %v768
        %v861 = vpop.f32.mrf.mxu0
        %v862 = vadd.f32 %v832, %v861
        %863 = vmatmul.f32.gmra.mxu0 %v769
        %v864 = vpop.f32.mrf.mxu0
        %v865 = vadd.f32 %v832, %v864
        %866 = vmatmul.f32.gmra.mxu0 %v770
        %v867 = vpop.f32.mrf.mxu0
        %v868 = vadd.f32 %v832, %v867
        %869 = vmatmul.f32.gmra.mxu0 %v771
        %v870 = vpop.f32.mrf.mxu0
        %v871 = vadd.f32 %v832, %v870
        %872 = vmatmul.f32.gmra.mxu0 %v772
        %v873 = vpop.f32.mrf.mxu0
        %v874 = vadd.f32 %v832, %v873
        %875 = vmatmul.f32.gmra.mxu0 %v773
        %v876 = vpop.f32.mrf.mxu0
        %v877 = vadd.f32 %v832, %v876
        %878 = vmatmul.f32.gmra.mxu0 %v774
        %v879 = vpop.f32.mrf.mxu0
        %v880 = vadd.f32 %v832, %v879
        %881 = vmatmul.f32.gmra.mxu0 %v775
        %v882 = vpop.f32.mrf.mxu0
        %v883 = vadd.f32 %v832, %v882
        %884 = vmatmul.f32.gmra.mxu0 %v776
        %v885 = vpop.f32.mrf.mxu0
        %v886 = vadd.f32 %v832, %v885
        %887 = vmatmul.f32.gmra.mxu0 %v777
        %v888 = vpop.f32.mrf.mxu0
        %v889 = vadd.f32 %v832, %v888
        %890 = vmatmul.f32.gmra.mxu0 %v778
        %v891 = vpop.f32.mrf.mxu0
        %v892 = vadd.f32 %v832, %v891
        %893 = vmatmul.f32.gmra.mxu0 %v779
        %v894 = vpop.f32.mrf.mxu0
        %v895 = vadd.f32 %v832, %v894
        %896 = vmatmul.f32.gmra.mxu0 %v780
        %v897 = vpop.f32.mrf.mxu0
        %v898 = vadd.f32 %v832, %v897
        %899 = vmatmul.f32.gmra.mxu0 %v781
        %v900 = vpop.f32.mrf.mxu0
        %v901 = vadd.f32 %v832, %v900
        %902 = vdwg.mxu0
        %903 = vmatpush.msra.mxu0 %v828
        %904 = vmatpush.msra.mxu0 %v825
        %905 = vmatpush.msra.mxu0 %v822
        %906 = vmatpush.msra.mxu0 %v819
        %907 = vmatpush.msra.mxu0 %v816
        %908 = vmatpush.msra.mxu0 %v813
        %909 = vmatpush.msra.mxu0 %v810
        %910 = vmatpush.msra.mxu0 %v807
        %911 = vmatpush.msra.mxu0 %v804
        %912 = vmatpush.msra.mxu0 %v801
        %913 = vmatpush.msra.mxu0 %v798
        %914 = vmatpush.msra.mxu0 %v795
        %915 = vmatpush.msra.mxu0 %v792
        %916 = vmatpush.msra.mxu0 %v789
        %917 = vmatpush.msra.mxu0 %v786
        %918 = vmatpush.msra.mxu0 %v783
        %919 = vmatmul.f32.gmra.mxu0 %v766
        %v920 = vpop.f32.mrf.mxu0
        %v921 = vadd.f32 %v833, %v920
        %922 = vmatmul.f32.gmra.mxu0 %v767
        %v923 = vpop.f32.mrf.mxu0
        %v924 = vadd.f32 %v833, %v923
        %925 = vmatmul.f32.gmra.mxu0 %v768
        %v926 = vpop.f32.mrf.mxu0
        %v927 = vadd.f32 %v833, %v926
        %928 = vmatmul.f32.gmra.mxu0 %v769
        %v929 = vpop.f32.mrf.mxu0
        %v930 = vadd.f32 %v833, %v929
        %931 = vmatmul.f32.gmra.mxu0 %v770
        %v932 = vpop.f32.mrf.mxu0
        %v933 = vadd.f32 %v833, %v932
        %934 = vmatmul.f32.gmra.mxu0 %v771
        %v935 = vpop.f32.mrf.mxu0
        %v936 = vadd.f32 %v833, %v935
        %937 = vmatmul.f32.gmra.mxu0 %v772
        %v938 = vpop.f32.mrf.mxu0
        %v939 = vadd.f32 %v833, %v938
        %940 = vmatmul.f32.gmra.mxu0 %v773
        %v941 = vpop.f32.mrf.mxu0
        %v942 = vadd.f32 %v833, %v941
        %943 = vmatmul.f32.gmra.mxu0 %v774
        %v944 = vpop.f32.mrf.mxu0
        %v945 = vadd.f32 %v833, %v944
        %946 = vmatmul.f32.gmra.mxu0 %v775
        %v947 = vpop.f32.mrf.mxu0
        %v948 = vadd.f32 %v833, %v947
        %949 = vmatmul.f32.gmra.mxu0 %v776
        %v950 = vpop.f32.mrf.mxu0
        %v951 = vadd.f32 %v833, %v950
        %952 = vmatmul.f32.gmra.mxu0 %v777
        %v953 = vpop.f32.mrf.mxu0
        %v954 = vadd.f32 %v833, %v953
        %955 = vmatmul.f32.gmra.mxu0 %v778
        %v956 = vpop.f32.mrf.mxu0
        %v957 = vadd.f32 %v833, %v956
        %958 = vmatmul.f32.gmra.mxu0 %v779
        %v959 = vpop.f32.mrf.mxu0
        %v960 = vadd.f32 %v833, %v959
        %961 = vmatmul.f32.gmra.mxu0 %v780
        %v962 = vpop.f32.mrf.mxu0
        %v963 = vadd.f32 %v833, %v962
        %964 = vmatmul.f32.gmra.mxu0 %v781
        %v965 = vpop.f32.mrf.mxu0
        %v966 = vadd.f32 %v833, %v965
        %967 = vdwg.mxu0
        %968 = vmatpush.msra.mxu0 %v829
        %969 = vmatpush.msra.mxu0 %v826
        %970 = vmatpush.msra.mxu0 %v823
        %971 = vmatpush.msra.mxu0 %v820
        %972 = vmatpush.msra.mxu0 %v817
        %973 = vmatpush.msra.mxu0 %v814
        %974 = vmatpush.msra.mxu0 %v811
        %975 = vmatpush.msra.mxu0 %v808
        %976 = vmatpush.msra.mxu0 %v805
        %977 = vmatpush.msra.mxu0 %v802
        %978 = vmatpush.msra.mxu0 %v799
        %979 = vmatpush.msra.mxu0 %v796
        %980 = vmatpush.msra.mxu0 %v793
        %981 = vmatpush.msra.mxu0 %v790
        %982 = vmatpush.msra.mxu0 %v787
        %983 = vmatpush.msra.mxu0 %v784
        %984 = vmatmul.f32.gmra.mxu0 %v766
        %v985 = vpop.f32.mrf.mxu0
        %v986 = vadd.f32 %v834, %v985
        %987 = vmatmul.f32.gmra.mxu0 %v767
        %v988 = vpop.f32.mrf.mxu0
        %v989 = vadd.f32 %v834, %v988
        %990 = vmatmul.f32.gmra.mxu0 %v768
        %v991 = vpop.f32.mrf.mxu0
        %v992 = vadd.f32 %v834, %v991
        %993 = vmatmul.f32.gmra.mxu0 %v769
        %v994 = vpop.f32.mrf.mxu0
        %v995 = vadd.f32 %v834, %v994
        %996 = vmatmul.f32.gmra.mxu0 %v770
        %v997 = vpop.f32.mrf.mxu0
        %v998 = vadd.f32 %v834, %v997
        %999 = vmatmul.f32.gmra.mxu0 %v771
        %v1000 = vpop.f32.mrf.mxu0
        %v1001 = vadd.f32 %v834, %v1000
        %1002 = vmatmul.f32.gmra.mxu0 %v772
        %v1003 = vpop.f32.mrf.mxu0
        %v1004 = vadd.f32 %v834, %v1003
        %1005 = vmatmul.f32.gmra.mxu0 %v773
        %v1006 = vpop.f32.mrf.mxu0
        %v1007 = vadd.f32 %v834, %v1006
        %1008 = vmatmul.f32.gmra.mxu0 %v774
        %v1009 = vpop.f32.mrf.mxu0
        %v1010 = vadd.f32 %v834, %v1009
        %1011 = vmatmul.f32.gmra.mxu0 %v775
        %v1012 = vpop.f32.mrf.mxu0
        %v1013 = vadd.f32 %v834, %v1012
        %1014 = vmatmul.f32.gmra.mxu0 %v776
        %v1015 = vpop.f32.mrf.mxu0
        %v1016 = vadd.f32 %v834, %v1015
        %1017 = vmatmul.f32.gmra.mxu0 %v777
        %v1018 = vpop.f32.mrf.mxu0
        %v1019 = vadd.f32 %v834, %v1018
        %1020 = vmatmul.f32.gmra.mxu0 %v778
        %v1021 = vpop.f32.mrf.mxu0
        %v1022 = vadd.f32 %v834, %v1021
        %1023 = vmatmul.f32.gmra.mxu0 %v779
        %v1024 = vpop.f32.mrf.mxu0
        %v1025 = vadd.f32 %v834, %v1024
        %1026 = vmatmul.f32.gmra.mxu0 %v780
        %v1027 = vpop.f32.mrf.mxu0
        %v1028 = vadd.f32 %v834, %v1027
        %1029 = vmatmul.f32.gmra.mxu0 %v781
        %v1030 = vpop.f32.mrf.mxu0
        %v1031 = vadd.f32 %v834, %v1030
        %1032 = vdwg.mxu0
        %v1033 = vmul.f32 %v856, 0.17677669
        %v1034 = vmul.f32 %v859, 0.17677669
        %v1035 = vmul.f32 %v862, 0.17677669
        %v1036 = vmul.f32 %v865, 0.17677669
        %v1037 = vmul.f32 %v868, 0.17677669
        %v1038 = vmul.f32 %v871, 0.17677669
        %v1039 = vmul.f32 %v874, 0.17677669
        %v1040 = vmul.f32 %v877, 0.17677669
        %v1041 = vmul.f32 %v880, 0.17677669
        %v1042 = vmul.f32 %v883, 0.17677669
        %v1043 = vmul.f32 %v886, 0.17677669
        %v1044 = vmul.f32 %v889, 0.17677669
        %v1045 = vmul.f32 %v892, 0.17677669
        %v1046 = vmul.f32 %v895, 0.17677669
        %v1047 = vmul.f32 %v898, 0.17677669
        %v1048 = vmul.f32 %v901, 0.17677669
        %1065 = vrot.lane.b32.xlu0 %v1033, 96
        %v1066 = vpop.permute.xlu0 %1065
        %1067 = vrot.lane.b32.xlu0 %v1034, 96
        %v1068 = vpop.permute.xlu0 %1067
        %1069 = vrot.lane.b32.xlu0 %v1035, 96
        %v1070 = vpop.permute.xlu0 %1069
        %1071 = vrot.lane.b32.xlu0 %v1036, 96
        %v1072 = vpop.permute.xlu0 %1071
        %1073 = vrot.lane.b32.xlu0 %v1037, 96
        %v1074 = vpop.permute.xlu0 %1073
        %1075 = vrot.lane.b32.xlu0 %v1038, 96
        %v1076 = vpop.permute.xlu0 %1075
        %1077 = vrot.lane.b32.xlu0 %v1039, 96
        %v1078 = vpop.permute.xlu0 %1077
        %1079 = vrot.lane.b32.xlu0 %v1040, 96
        %v1080 = vpop.permute.xlu0 %1079
        %1081 = vrot.lane.b32.xlu0 %v1041, 96
        %v1082 = vpop.permute.xlu0 %1081
        %1083 = vrot.lane.b32.xlu0 %v1042, 96
        %v1084 = vpop.permute.xlu0 %1083
        %1085 = vrot.lane.b32.xlu0 %v1043, 96
        %v1086 = vpop.permute.xlu0 %1085
        %1087 = vrot.lane.b32.xlu0 %v1044, 96
        %v1088 = vpop.permute.xlu0 %1087
        %1089 = vrot.lane.b32.xlu0 %v1045, 96
        %v1090 = vpop.permute.xlu0 %1089
        %1091 = vrot.lane.b32.xlu0 %v1046, 96
        %v1092 = vpop.permute.xlu0 %1091
        %1093 = vrot.lane.b32.xlu0 %v1047, 96
        %v1094 = vpop.permute.xlu0 %1093
        %1095 = vrot.lane.b32.xlu0 %v1048, 96
        %v1096 = vpop.permute.xlu0 %1095
        %1097 = vrot.lane.b32.xlu0 %v1033, 64
        %v1098 = vpop.permute.xlu0 %1097
        %1099 = vrot.lane.b32.xlu0 %v1034, 64
        %v1100 = vpop.permute.xlu0 %1099
        %1101 = vrot.lane.b32.xlu0 %v1035, 64
        %v1102 = vpop.permute.xlu0 %1101
        %1103 = vrot.lane.b32.xlu0 %v1036, 64
        %v1104 = vpop.permute.xlu0 %1103
        %1105 = vrot.lane.b32.xlu0 %v1037, 64
        %v1106 = vpop.permute.xlu0 %1105
        %1107 = vrot.lane.b32.xlu0 %v1038, 64
        %v1108 = vpop.permute.xlu0 %1107
        %1109 = vrot.lane.b32.xlu0 %v1039, 64
        %v1110 = vpop.permute.xlu0 %1109
        %1111 = vrot.lane.b32.xlu0 %v1040, 64
        %v1112 = vpop.permute.xlu0 %1111
        %1113 = vrot.lane.b32.xlu0 %v1041, 64
        %v1114 = vpop.permute.xlu0 %1113
        %1115 = vrot.lane.b32.xlu0 %v1042, 64
        %v1116 = vpop.permute.xlu0 %1115
        %1117 = vrot.lane.b32.xlu0 %v1043, 64
        %v1118 = vpop.permute.xlu0 %1117
        %1119 = vrot.lane.b32.xlu0 %v1044, 64
        %v1120 = vpop.permute.xlu0 %1119
        %1121 = vrot.lane.b32.xlu0 %v1045, 64
        %v1122 = vpop.permute.xlu0 %1121
        %1123 = vrot.lane.b32.xlu0 %v1046, 64
        %v1124 = vpop.permute.xlu0 %1123
        %1125 = vrot.lane.b32.xlu0 %v1047, 64
        %v1126 = vpop.permute.xlu0 %1125
        %1127 = vrot.lane.b32.xlu0 %v1048, 64
        %v1128 = vpop.permute.xlu0 %1127
        %1129 = vrot.lane.b32.xlu0 %v1033, 32
        %v1130 = vpop.permute.xlu0 %1129
        %1131 = vrot.lane.b32.xlu0 %v1034, 32
        %v1132 = vpop.permute.xlu0 %1131
        %1133 = vrot.lane.b32.xlu0 %v1035, 32
        %v1134 = vpop.permute.xlu0 %1133
        %1135 = vrot.lane.b32.xlu0 %v1036, 32
        %v1136 = vpop.permute.xlu0 %1135
        %1137 = vrot.lane.b32.xlu0 %v1037, 32
        %v1138 = vpop.permute.xlu0 %1137
        %1139 = vrot.lane.b32.xlu0 %v1038, 32
        %v1140 = vpop.permute.xlu0 %1139
        %1141 = vrot.lane.b32.xlu0 %v1039, 32
        %v1142 = vpop.permute.xlu0 %1141
        %1143 = vrot.lane.b32.xlu0 %v1040, 32
        %v1144 = vpop.permute.xlu0 %1143
        %1145 = vrot.lane.b32.xlu0 %v1041, 32
        %v1146 = vpop.permute.xlu0 %1145
        %1147 = vrot.lane.b32.xlu0 %v1042, 32
        %v1148 = vpop.permute.xlu0 %1147
        %1149 = vrot.lane.b32.xlu0 %v1043, 32
        %v1150 = vpop.permute.xlu0 %1149
        %1151 = vrot.lane.b32.xlu0 %v1044, 32
        %v1152 = vpop.permute.xlu0 %1151
        %1153 = vrot.lane.b32.xlu0 %v1045, 32
        %v1154 = vpop.permute.xlu0 %1153
        %1155 = vrot.lane.b32.xlu0 %v1046, 32
        %v1156 = vpop.permute.xlu0 %1155
        %1157 = vrot.lane.b32.xlu0 %v1047, 32
        %v1158 = vpop.permute.xlu0 %1157
        %1159 = vrot.lane.b32.xlu0 %v1048, 32
        %v1160 = vpop.permute.xlu0 %1159
        %1177 = vrot.lane.b32.xlu0 %v921, 96
        %v1178 = vpop.permute.xlu0 %1177
        %1179 = vrot.lane.b32.xlu0 %v924, 96
        %v1180 = vpop.permute.xlu0 %1179
        %1181 = vrot.lane.b32.xlu0 %v927, 96
        %v1182 = vpop.permute.xlu0 %1181
        %1183 = vrot.lane.b32.xlu0 %v930, 96
        %v1184 = vpop.permute.xlu0 %1183
        %1185 = vrot.lane.b32.xlu0 %v933, 96
        %v1186 = vpop.permute.xlu0 %1185
        %1187 = vrot.lane.b32.xlu0 %v936, 96
        %v1188 = vpop.permute.xlu0 %1187
        %1189 = vrot.lane.b32.xlu0 %v939, 96
        %v1190 = vpop.permute.xlu0 %1189
        %1191 = vrot.lane.b32.xlu0 %v942, 96
        %v1192 = vpop.permute.xlu0 %1191
        %1193 = vrot.lane.b32.xlu0 %v945, 96
        %v1194 = vpop.permute.xlu0 %1193
        %1195 = vrot.lane.b32.xlu0 %v948, 96
        %v1196 = vpop.permute.xlu0 %1195
        %1197 = vrot.lane.b32.xlu0 %v951, 96
        %v1198 = vpop.permute.xlu0 %1197
        %1199 = vrot.lane.b32.xlu0 %v954, 96
        %v1200 = vpop.permute.xlu0 %1199
        %1201 = vrot.lane.b32.xlu0 %v957, 96
        %v1202 = vpop.permute.xlu0 %1201
        %1203 = vrot.lane.b32.xlu0 %v960, 96
        %v1204 = vpop.permute.xlu0 %1203
        %1205 = vrot.lane.b32.xlu0 %v963, 96
        %v1206 = vpop.permute.xlu0 %1205
        %1207 = vrot.lane.b32.xlu0 %v966, 96
        %v1208 = vpop.permute.xlu0 %1207
        %1209 = vrot.lane.b32.xlu0 %v921, 64
        %v1210 = vpop.permute.xlu0 %1209
        %1211 = vrot.lane.b32.xlu0 %v924, 64
        %v1212 = vpop.permute.xlu0 %1211
        %1213 = vrot.lane.b32.xlu0 %v927, 64
        %v1214 = vpop.permute.xlu0 %1213
        %1215 = vrot.lane.b32.xlu0 %v930, 64
        %v1216 = vpop.permute.xlu0 %1215
        %1217 = vrot.lane.b32.xlu0 %v933, 64
        %v1218 = vpop.permute.xlu0 %1217
        %1219 = vrot.lane.b32.xlu0 %v936, 64
        %v1220 = vpop.permute.xlu0 %1219
        %1221 = vrot.lane.b32.xlu0 %v939, 64
        %v1222 = vpop.permute.xlu0 %1221
        %1223 = vrot.lane.b32.xlu0 %v942, 64
        %v1224 = vpop.permute.xlu0 %1223
        %1225 = vrot.lane.b32.xlu0 %v945, 64
        %v1226 = vpop.permute.xlu0 %1225
        %1227 = vrot.lane.b32.xlu0 %v948, 64
        %v1228 = vpop.permute.xlu0 %1227
        %1229 = vrot.lane.b32.xlu0 %v951, 64
        %v1230 = vpop.permute.xlu0 %1229
        %1231 = vrot.lane.b32.xlu0 %v954, 64
        %v1232 = vpop.permute.xlu0 %1231
        %1233 = vrot.lane.b32.xlu0 %v957, 64
        %v1234 = vpop.permute.xlu0 %1233
        %1235 = vrot.lane.b32.xlu0 %v960, 64
        %v1236 = vpop.permute.xlu0 %1235
        %1237 = vrot.lane.b32.xlu0 %v963, 64
        %v1238 = vpop.permute.xlu0 %1237
        %1239 = vrot.lane.b32.xlu0 %v966, 64
        %v1240 = vpop.permute.xlu0 %1239
        %1241 = vrot.lane.b32.xlu0 %v921, 32
        %v1242 = vpop.permute.xlu0 %1241
        %1243 = vrot.lane.b32.xlu0 %v924, 32
        %v1244 = vpop.permute.xlu0 %1243
        %1245 = vrot.lane.b32.xlu0 %v927, 32
        %v1246 = vpop.permute.xlu0 %1245
        %1247 = vrot.lane.b32.xlu0 %v930, 32
        %v1248 = vpop.permute.xlu0 %1247
        %1249 = vrot.lane.b32.xlu0 %v933, 32
        %v1250 = vpop.permute.xlu0 %1249
        %1251 = vrot.lane.b32.xlu0 %v936, 32
        %v1252 = vpop.permute.xlu0 %1251
        %1253 = vrot.lane.b32.xlu0 %v939, 32
        %v1254 = vpop.permute.xlu0 %1253
        %1255 = vrot.lane.b32.xlu0 %v942, 32
        %v1256 = vpop.permute.xlu0 %1255
        %1257 = vrot.lane.b32.xlu0 %v945, 32
        %v1258 = vpop.permute.xlu0 %1257
        %1259 = vrot.lane.b32.xlu0 %v948, 32
        %v1260 = vpop.permute.xlu0 %1259
        %1261 = vrot.lane.b32.xlu0 %v951, 32
        %v1262 = vpop.permute.xlu0 %1261
        %1263 = vrot.lane.b32.xlu0 %v954, 32
        %v1264 = vpop.permute.xlu0 %1263
        %1265 = vrot.lane.b32.xlu0 %v957, 32
        %v1266 = vpop.permute.xlu0 %1265
        %1267 = vrot.lane.b32.xlu0 %v960, 32
        %v1268 = vpop.permute.xlu0 %1267
        %1269 = vrot.lane.b32.xlu0 %v963, 32
        %v1270 = vpop.permute.xlu0 %1269
        %1271 = vrot.lane.b32.xlu0 %v966, 32
        %v1272 = vpop.permute.xlu0 %1271
        %1289 = vrot.lane.b32.xlu0 %v986, 96
        %v1290 = vpop.permute.xlu0 %1289
        %1291 = vrot.lane.b32.xlu0 %v989, 96
        %v1292 = vpop.permute.xlu0 %1291
        %1293 = vrot.lane.b32.xlu0 %v992, 96
        %v1294 = vpop.permute.xlu0 %1293
        %1295 = vrot.lane.b32.xlu0 %v995, 96
        %v1296 = vpop.permute.xlu0 %1295
        %1297 = vrot.lane.b32.xlu0 %v998, 96
        %v1298 = vpop.permute.xlu0 %1297
        %1299 = vrot.lane.b32.xlu0 %v1001, 96
        %v1300 = vpop.permute.xlu0 %1299
        %1301 = vrot.lane.b32.xlu0 %v1004, 96
        %v1302 = vpop.permute.xlu0 %1301
        %1303 = vrot.lane.b32.xlu0 %v1007, 96
        %v1304 = vpop.permute.xlu0 %1303
        %1305 = vrot.lane.b32.xlu0 %v1010, 96
        %v1306 = vpop.permute.xlu0 %1305
        %1307 = vrot.lane.b32.xlu0 %v1013, 96
        %v1308 = vpop.permute.xlu0 %1307
        %1309 = vrot.lane.b32.xlu0 %v1016, 96
        %v1310 = vpop.permute.xlu0 %1309
        %1311 = vrot.lane.b32.xlu0 %v1019, 96
        %v1312 = vpop.permute.xlu0 %1311
        %1313 = vrot.lane.b32.xlu0 %v1022, 96
        %v1314 = vpop.permute.xlu0 %1313
        %1315 = vrot.lane.b32.xlu0 %v1025, 96
        %v1316 = vpop.permute.xlu0 %1315
        %1317 = vrot.lane.b32.xlu0 %v1028, 96
        %v1318 = vpop.permute.xlu0 %1317
        %1319 = vrot.lane.b32.xlu0 %v1031, 96
        %v1320 = vpop.permute.xlu0 %1319
        %1337 = vrot.lane.b32.xlu0 %v986, 64
        %v1338 = vpop.permute.xlu0 %1337
        %1339 = vrot.lane.b32.xlu0 %v989, 64
        %v1340 = vpop.permute.xlu0 %1339
        %1341 = vrot.lane.b32.xlu0 %v992, 64
        %v1342 = vpop.permute.xlu0 %1341
        %1343 = vrot.lane.b32.xlu0 %v995, 64
        %v1344 = vpop.permute.xlu0 %1343
        %1345 = vrot.lane.b32.xlu0 %v998, 64
        %v1346 = vpop.permute.xlu0 %1345
        %1347 = vrot.lane.b32.xlu0 %v1001, 64
        %v1348 = vpop.permute.xlu0 %1347
        %1349 = vrot.lane.b32.xlu0 %v1004, 64
        %v1350 = vpop.permute.xlu0 %1349
        %1351 = vrot.lane.b32.xlu0 %v1007, 64
        %v1352 = vpop.permute.xlu0 %1351
        %1353 = vrot.lane.b32.xlu0 %v1010, 64
        %v1354 = vpop.permute.xlu0 %1353
        %1355 = vrot.lane.b32.xlu0 %v1013, 64
        %v1356 = vpop.permute.xlu0 %1355
        %1357 = vrot.lane.b32.xlu0 %v1016, 64
        %v1358 = vpop.permute.xlu0 %1357
        %1359 = vrot.lane.b32.xlu0 %v1019, 64
        %v1360 = vpop.permute.xlu0 %1359
        %1361 = vrot.lane.b32.xlu0 %v1022, 64
        %v1362 = vpop.permute.xlu0 %1361
        %1363 = vrot.lane.b32.xlu0 %v1025, 64
        %v1364 = vpop.permute.xlu0 %1363
        %1365 = vrot.lane.b32.xlu0 %v1028, 64
        %v1366 = vpop.permute.xlu0 %1365
        %1367 = vrot.lane.b32.xlu0 %v1031, 64
        %v1368 = vpop.permute.xlu0 %1367
        %1385 = vrot.lane.b32.xlu0 %v986, 32
        %v1386 = vpop.permute.xlu0 %1385
        %1387 = vrot.lane.b32.xlu0 %v989, 32
        %v1388 = vpop.permute.xlu0 %1387
        %1389 = vrot.lane.b32.xlu0 %v992, 32
        %v1390 = vpop.permute.xlu0 %1389
        %1391 = vrot.lane.b32.xlu0 %v995, 32
        %v1392 = vpop.permute.xlu0 %1391
        %1393 = vrot.lane.b32.xlu0 %v998, 32
        %v1394 = vpop.permute.xlu0 %1393
        %1395 = vrot.lane.b32.xlu0 %v1001, 32
        %v1396 = vpop.permute.xlu0 %1395
        %1397 = vrot.lane.b32.xlu0 %v1004, 32
        %v1398 = vpop.permute.xlu0 %1397
        %1399 = vrot.lane.b32.xlu0 %v1007, 32
        %v1400 = vpop.permute.xlu0 %1399
        %1401 = vrot.lane.b32.xlu0 %v1010, 32
        %v1402 = vpop.permute.xlu0 %1401
        %1403 = vrot.lane.b32.xlu0 %v1013, 32
        %v1404 = vpop.permute.xlu0 %1403
        %1405 = vrot.lane.b32.xlu0 %v1016, 32
        %v1406 = vpop.permute.xlu0 %1405
        %1407 = vrot.lane.b32.xlu0 %v1019, 32
        %v1408 = vpop.permute.xlu0 %1407
        %1409 = vrot.lane.b32.xlu0 %v1022, 32
        %v1410 = vpop.permute.xlu0 %1409
        %1411 = vrot.lane.b32.xlu0 %v1025, 32
        %v1412 = vpop.permute.xlu0 %1411
        %1413 = vrot.lane.b32.xlu0 %v1028, 32
        %v1414 = vpop.permute.xlu0 %1413
        %1415 = vrot.lane.b32.xlu0 %v1031, 32
        %v1416 = vpop.permute.xlu0 %1415
        %vm1433 = vcmask 261120
        %v1434 = vsel %vm1433, %v1033, 0
        %v1436 = vsel %vm1433, %v1034, 0
        %v1438 = vsel %vm1433, %v1035, 0
        %v1440 = vsel %vm1433, %v1036, 0
        %v1442 = vsel %vm1433, %v1037, 0
        %v1444 = vsel %vm1433, %v1038, 0
        %v1446 = vsel %vm1433, %v1039, 0
        %v1448 = vsel %vm1433, %v1040, 0
        %v1450 = vsel %vm1433, %v1041, 0
        %v1452 = vsel %vm1433, %v1042, 0
        %v1454 = vsel %vm1433, %v1043, 0
        %v1456 = vsel %vm1433, %v1044, 0
        %v1458 = vsel %vm1433, %v1045, 0
        %v1460 = vsel %vm1433, %v1046, 0
        %v1462 = vsel %vm1433, %v1047, 0
        %v1464 = vsel %vm1433, %v1048, 0
        %v1466 = vsel %vm1433, %v921, 0
        %v1468 = vsel %vm1433, %v924, 0
        %v1470 = vsel %vm1433, %v927, 0
        %v1472 = vsel %vm1433, %v930, 0
        %v1474 = vsel %vm1433, %v933, 0
        %v1476 = vsel %vm1433, %v936, 0
        %v1478 = vsel %vm1433, %v939, 0
        %v1480 = vsel %vm1433, %v942, 0
        %v1482 = vsel %vm1433, %v945, 0
        %v1484 = vsel %vm1433, %v948, 0
        %v1486 = vsel %vm1433, %v951, 0
        %v1488 = vsel %vm1433, %v954, 0
        %v1490 = vsel %vm1433, %v957, 0
        %v1492 = vsel %vm1433, %v960, 0
        %v1494 = vsel %vm1433, %v963, 0
        %v1496 = vsel %vm1433, %v966, 0
        %1498 = vmatpush.xpose.msra.mxu0 %v1496
        %1499 = vmatpush.xpose.msra.mxu0 %v1494
        %1500 = vmatpush.xpose.msra.mxu0 %v1492
        %1501 = vmatpush.xpose.msra.mxu0 %v1490
        %1502 = vmatpush.xpose.msra.mxu0 %v1488
        %1503 = vmatpush.xpose.msra.mxu0 %v1486
        %1504 = vmatpush.xpose.msra.mxu0 %v1484
        %1505 = vmatpush.xpose.msra.mxu0 %v1482
        %1506 = vmatpush.xpose.msra.mxu0 %v1480
        %1507 = vmatpush.xpose.msra.mxu0 %v1478
        %1508 = vmatpush.xpose.msra.mxu0 %v1476
        %1509 = vmatpush.xpose.msra.mxu0 %v1474
        %1510 = vmatpush.xpose.msra.mxu0 %v1472
        %1511 = vmatpush.xpose.msra.mxu0 %v1470
        %1512 = vmatpush.xpose.msra.mxu0 %v1468
        %1513 = vmatpush.xpose.msra.mxu0 %v1466
        %1514 = vmatmul.f32.gmra.mxu0 %v1434
        %v1515 = vpop.f32.mrf.mxu0
        %v1516 = vadd.f32 0.0, %v1515
        %1517 = vmatmul.f32.gmra.mxu0 %v1436
        %v1518 = vpop.f32.mrf.mxu0
        %v1519 = vadd.f32 0.0, %v1518
        %1520 = vmatmul.f32.gmra.mxu0 %v1438
        %v1521 = vpop.f32.mrf.mxu0
        %v1522 = vadd.f32 0.0, %v1521
        %1523 = vmatmul.f32.gmra.mxu0 %v1440
        %v1524 = vpop.f32.mrf.mxu0
        %v1525 = vadd.f32 0.0, %v1524
        %1526 = vmatmul.f32.gmra.mxu0 %v1442
        %v1527 = vpop.f32.mrf.mxu0
        %v1528 = vadd.f32 0.0, %v1527
        %1529 = vmatmul.f32.gmra.mxu0 %v1444
        %v1530 = vpop.f32.mrf.mxu0
        %v1531 = vadd.f32 0.0, %v1530
        %1532 = vmatmul.f32.gmra.mxu0 %v1446
        %v1533 = vpop.f32.mrf.mxu0
        %v1534 = vadd.f32 0.0, %v1533
        %1535 = vmatmul.f32.gmra.mxu0 %v1448
        %v1536 = vpop.f32.mrf.mxu0
        %v1537 = vadd.f32 0.0, %v1536
        %1538 = vmatmul.f32.gmra.mxu0 %v1450
        %v1539 = vpop.f32.mrf.mxu0
        %v1540 = vadd.f32 0.0, %v1539
        %1541 = vmatmul.f32.gmra.mxu0 %v1452
        %v1542 = vpop.f32.mrf.mxu0
        %v1543 = vadd.f32 0.0, %v1542
        %1544 = vmatmul.f32.gmra.mxu0 %v1454
        %v1545 = vpop.f32.mrf.mxu0
        %v1546 = vadd.f32 0.0, %v1545
        %1547 = vmatmul.f32.gmra.mxu0 %v1456
        %v1548 = vpop.f32.mrf.mxu0
        %v1549 = vadd.f32 0.0, %v1548
        %1550 = vmatmul.f32.gmra.mxu0 %v1458
        %v1551 = vpop.f32.mrf.mxu0
        %v1552 = vadd.f32 0.0, %v1551
        %1553 = vmatmul.f32.gmra.mxu0 %v1460
        %v1554 = vpop.f32.mrf.mxu0
        %v1555 = vadd.f32 0.0, %v1554
        %1556 = vmatmul.f32.gmra.mxu0 %v1462
        %v1557 = vpop.f32.mrf.mxu0
        %v1558 = vadd.f32 0.0, %v1557
        %1559 = vmatmul.f32.gmra.mxu0 %v1464
        %v1560 = vpop.f32.mrf.mxu0
        %v1561 = vadd.f32 0.0, %v1560
        %1562 = vdwg.mxu0
        %v1563 = vsel %vm1433, %v1066, 0
        %v1565 = vsel %vm1433, %v1068, 0
        %v1567 = vsel %vm1433, %v1070, 0
        %v1569 = vsel %vm1433, %v1072, 0
        %v1571 = vsel %vm1433, %v1074, 0
        %v1573 = vsel %vm1433, %v1076, 0
        %v1575 = vsel %vm1433, %v1078, 0
        %v1577 = vsel %vm1433, %v1080, 0
        %v1579 = vsel %vm1433, %v1082, 0
        %v1581 = vsel %vm1433, %v1084, 0
        %v1583 = vsel %vm1433, %v1086, 0
        %v1585 = vsel %vm1433, %v1088, 0
        %v1587 = vsel %vm1433, %v1090, 0
        %v1589 = vsel %vm1433, %v1092, 0
        %v1591 = vsel %vm1433, %v1094, 0
        %v1593 = vsel %vm1433, %v1096, 0
        %v1595 = vsel %vm1433, %v1178, 0
        %v1597 = vsel %vm1433, %v1180, 0
        %v1599 = vsel %vm1433, %v1182, 0
        %v1601 = vsel %vm1433, %v1184, 0
        %v1603 = vsel %vm1433, %v1186, 0
        %v1605 = vsel %vm1433, %v1188, 0
        %v1607 = vsel %vm1433, %v1190, 0
        %v1609 = vsel %vm1433, %v1192, 0
        %v1611 = vsel %vm1433, %v1194, 0
        %v1613 = vsel %vm1433, %v1196, 0
        %v1615 = vsel %vm1433, %v1198, 0
        %v1617 = vsel %vm1433, %v1200, 0
        %v1619 = vsel %vm1433, %v1202, 0
        %v1621 = vsel %vm1433, %v1204, 0
        %v1623 = vsel %vm1433, %v1206, 0
        %v1625 = vsel %vm1433, %v1208, 0
        %1627 = vmatpush.xpose.msra.mxu0 %v1625
        %1628 = vmatpush.xpose.msra.mxu0 %v1623
        %1629 = vmatpush.xpose.msra.mxu0 %v1621
        %1630 = vmatpush.xpose.msra.mxu0 %v1619
        %1631 = vmatpush.xpose.msra.mxu0 %v1617
        %1632 = vmatpush.xpose.msra.mxu0 %v1615
        %1633 = vmatpush.xpose.msra.mxu0 %v1613
        %1634 = vmatpush.xpose.msra.mxu0 %v1611
        %1635 = vmatpush.xpose.msra.mxu0 %v1609
        %1636 = vmatpush.xpose.msra.mxu0 %v1607
        %1637 = vmatpush.xpose.msra.mxu0 %v1605
        %1638 = vmatpush.xpose.msra.mxu0 %v1603
        %1639 = vmatpush.xpose.msra.mxu0 %v1601
        %1640 = vmatpush.xpose.msra.mxu0 %v1599
        %1641 = vmatpush.xpose.msra.mxu0 %v1597
        %1642 = vmatpush.xpose.msra.mxu0 %v1595
        %1643 = vmatmul.f32.gmra.mxu0 %v1563
        %v1644 = vpop.f32.mrf.mxu0
        %v1645 = vadd.f32 0.0, %v1644
        %1646 = vmatmul.f32.gmra.mxu0 %v1565
        %v1647 = vpop.f32.mrf.mxu0
        %v1648 = vadd.f32 0.0, %v1647
        %1649 = vmatmul.f32.gmra.mxu0 %v1567
        %v1650 = vpop.f32.mrf.mxu0
        %v1651 = vadd.f32 0.0, %v1650
        %1652 = vmatmul.f32.gmra.mxu0 %v1569
        %v1653 = vpop.f32.mrf.mxu0
        %v1654 = vadd.f32 0.0, %v1653
        %1655 = vmatmul.f32.gmra.mxu0 %v1571
        %v1656 = vpop.f32.mrf.mxu0
        %v1657 = vadd.f32 0.0, %v1656
        %1658 = vmatmul.f32.gmra.mxu0 %v1573
        %v1659 = vpop.f32.mrf.mxu0
        %v1660 = vadd.f32 0.0, %v1659
        %1661 = vmatmul.f32.gmra.mxu0 %v1575
        %v1662 = vpop.f32.mrf.mxu0
        %v1663 = vadd.f32 0.0, %v1662
        %1664 = vmatmul.f32.gmra.mxu0 %v1577
        %v1665 = vpop.f32.mrf.mxu0
        %v1666 = vadd.f32 0.0, %v1665
        %1667 = vmatmul.f32.gmra.mxu0 %v1579
        %v1668 = vpop.f32.mrf.mxu0
        %v1669 = vadd.f32 0.0, %v1668
        %1670 = vmatmul.f32.gmra.mxu0 %v1581
        %v1671 = vpop.f32.mrf.mxu0
        %v1672 = vadd.f32 0.0, %v1671
        %1673 = vmatmul.f32.gmra.mxu0 %v1583
        %v1674 = vpop.f32.mrf.mxu0
        %v1675 = vadd.f32 0.0, %v1674
        %1676 = vmatmul.f32.gmra.mxu0 %v1585
        %v1677 = vpop.f32.mrf.mxu0
        %v1678 = vadd.f32 0.0, %v1677
        %1679 = vmatmul.f32.gmra.mxu0 %v1587
        %v1680 = vpop.f32.mrf.mxu0
        %v1681 = vadd.f32 0.0, %v1680
        %1682 = vmatmul.f32.gmra.mxu0 %v1589
        %v1683 = vpop.f32.mrf.mxu0
        %v1684 = vadd.f32 0.0, %v1683
        %1685 = vmatmul.f32.gmra.mxu0 %v1591
        %v1686 = vpop.f32.mrf.mxu0
        %v1687 = vadd.f32 0.0, %v1686
        %1688 = vmatmul.f32.gmra.mxu0 %v1593
        %v1689 = vpop.f32.mrf.mxu0
        %v1690 = vadd.f32 0.0, %v1689
        %1691 = vdwg.mxu0
        %v1692 = vsel %vm1433, %v1098, 0
        %v1694 = vsel %vm1433, %v1100, 0
        %v1696 = vsel %vm1433, %v1102, 0
        %v1698 = vsel %vm1433, %v1104, 0
        %v1700 = vsel %vm1433, %v1106, 0
        %v1702 = vsel %vm1433, %v1108, 0
        %v1704 = vsel %vm1433, %v1110, 0
        %v1706 = vsel %vm1433, %v1112, 0
        %v1708 = vsel %vm1433, %v1114, 0
        %v1710 = vsel %vm1433, %v1116, 0
        %v1712 = vsel %vm1433, %v1118, 0
        %v1714 = vsel %vm1433, %v1120, 0
        %v1716 = vsel %vm1433, %v1122, 0
        %v1718 = vsel %vm1433, %v1124, 0
        %v1720 = vsel %vm1433, %v1126, 0
        %v1722 = vsel %vm1433, %v1128, 0
        %v1724 = vsel %vm1433, %v1210, 0
        %v1726 = vsel %vm1433, %v1212, 0
        %v1728 = vsel %vm1433, %v1214, 0
        %v1730 = vsel %vm1433, %v1216, 0
        %v1732 = vsel %vm1433, %v1218, 0
        %v1734 = vsel %vm1433, %v1220, 0
        %v1736 = vsel %vm1433, %v1222, 0
        %v1738 = vsel %vm1433, %v1224, 0
        %v1740 = vsel %vm1433, %v1226, 0
        %v1742 = vsel %vm1433, %v1228, 0
        %v1744 = vsel %vm1433, %v1230, 0
        %v1746 = vsel %vm1433, %v1232, 0
        %v1748 = vsel %vm1433, %v1234, 0
        %v1750 = vsel %vm1433, %v1236, 0
        %v1752 = vsel %vm1433, %v1238, 0
        %v1754 = vsel %vm1433, %v1240, 0
        %1756 = vmatpush.xpose.msra.mxu0 %v1754
        %1757 = vmatpush.xpose.msra.mxu0 %v1752
        %1758 = vmatpush.xpose.msra.mxu0 %v1750
        %1759 = vmatpush.xpose.msra.mxu0 %v1748
        %1760 = vmatpush.xpose.msra.mxu0 %v1746
        %1761 = vmatpush.xpose.msra.mxu0 %v1744
        %1762 = vmatpush.xpose.msra.mxu0 %v1742
        %1763 = vmatpush.xpose.msra.mxu0 %v1740
        %1764 = vmatpush.xpose.msra.mxu0 %v1738
        %1765 = vmatpush.xpose.msra.mxu0 %v1736
        %1766 = vmatpush.xpose.msra.mxu0 %v1734
        %1767 = vmatpush.xpose.msra.mxu0 %v1732
        %1768 = vmatpush.xpose.msra.mxu0 %v1730
        %1769 = vmatpush.xpose.msra.mxu0 %v1728
        %1770 = vmatpush.xpose.msra.mxu0 %v1726
        %1771 = vmatpush.xpose.msra.mxu0 %v1724
        %1772 = vmatmul.f32.gmra.mxu0 %v1692
        %v1773 = vpop.f32.mrf.mxu0
        %v1774 = vadd.f32 0.0, %v1773
        %1775 = vmatmul.f32.gmra.mxu0 %v1694
        %v1776 = vpop.f32.mrf.mxu0
        %v1777 = vadd.f32 0.0, %v1776
        %1778 = vmatmul.f32.gmra.mxu0 %v1696
        %v1779 = vpop.f32.mrf.mxu0
        %v1780 = vadd.f32 0.0, %v1779
        %1781 = vmatmul.f32.gmra.mxu0 %v1698
        %v1782 = vpop.f32.mrf.mxu0
        %v1783 = vadd.f32 0.0, %v1782
        %1784 = vmatmul.f32.gmra.mxu0 %v1700
        %v1785 = vpop.f32.mrf.mxu0
        %v1786 = vadd.f32 0.0, %v1785
        %1787 = vmatmul.f32.gmra.mxu0 %v1702
        %v1788 = vpop.f32.mrf.mxu0
        %v1789 = vadd.f32 0.0, %v1788
        %1790 = vmatmul.f32.gmra.mxu0 %v1704
        %v1791 = vpop.f32.mrf.mxu0
        %v1792 = vadd.f32 0.0, %v1791
        %1793 = vmatmul.f32.gmra.mxu0 %v1706
        %v1794 = vpop.f32.mrf.mxu0
        %v1795 = vadd.f32 0.0, %v1794
        %1796 = vmatmul.f32.gmra.mxu0 %v1708
        %v1797 = vpop.f32.mrf.mxu0
        %v1798 = vadd.f32 0.0, %v1797
        %1799 = vmatmul.f32.gmra.mxu0 %v1710
        %v1800 = vpop.f32.mrf.mxu0
        %v1801 = vadd.f32 0.0, %v1800
        %1802 = vmatmul.f32.gmra.mxu0 %v1712
        %v1803 = vpop.f32.mrf.mxu0
        %v1804 = vadd.f32 0.0, %v1803
        %1805 = vmatmul.f32.gmra.mxu0 %v1714
        %v1806 = vpop.f32.mrf.mxu0
        %v1807 = vadd.f32 0.0, %v1806
        %1808 = vmatmul.f32.gmra.mxu0 %v1716
        %v1809 = vpop.f32.mrf.mxu0
        %v1810 = vadd.f32 0.0, %v1809
        %1811 = vmatmul.f32.gmra.mxu0 %v1718
        %v1812 = vpop.f32.mrf.mxu0
        %v1813 = vadd.f32 0.0, %v1812
        %1814 = vmatmul.f32.gmra.mxu0 %v1720
        %v1815 = vpop.f32.mrf.mxu0
        %v1816 = vadd.f32 0.0, %v1815
        %1817 = vmatmul.f32.gmra.mxu0 %v1722
        %v1818 = vpop.f32.mrf.mxu0
        %v1819 = vadd.f32 0.0, %v1818
        %1820 = vdwg.mxu0
        %v1821 = vsel %vm1433, %v1130, 0
        %v1823 = vsel %vm1433, %v1132, 0
        %v1825 = vsel %vm1433, %v1134, 0
        %v1827 = vsel %vm1433, %v1136, 0
        %v1829 = vsel %vm1433, %v1138, 0
        %v1831 = vsel %vm1433, %v1140, 0
        %v1833 = vsel %vm1433, %v1142, 0
        %v1835 = vsel %vm1433, %v1144, 0
        %v1837 = vsel %vm1433, %v1146, 0
        %v1839 = vsel %vm1433, %v1148, 0
        %v1841 = vsel %vm1433, %v1150, 0
        %v1843 = vsel %vm1433, %v1152, 0
        %v1845 = vsel %vm1433, %v1154, 0
        %v1847 = vsel %vm1433, %v1156, 0
        %v1849 = vsel %vm1433, %v1158, 0
        %v1851 = vsel %vm1433, %v1160, 0
        %v1853 = vsel %vm1433, %v1242, 0
        %v1855 = vsel %vm1433, %v1244, 0
        %v1857 = vsel %vm1433, %v1246, 0
        %v1859 = vsel %vm1433, %v1248, 0
        %v1861 = vsel %vm1433, %v1250, 0
        %v1863 = vsel %vm1433, %v1252, 0
        %v1865 = vsel %vm1433, %v1254, 0
        %v1867 = vsel %vm1433, %v1256, 0
        %v1869 = vsel %vm1433, %v1258, 0
        %v1871 = vsel %vm1433, %v1260, 0
        %v1873 = vsel %vm1433, %v1262, 0
        %v1875 = vsel %vm1433, %v1264, 0
        %v1877 = vsel %vm1433, %v1266, 0
        %v1879 = vsel %vm1433, %v1268, 0
        %v1881 = vsel %vm1433, %v1270, 0
        %v1883 = vsel %vm1433, %v1272, 0
        %1885 = vmatpush.xpose.msra.mxu0 %v1883
        %1886 = vmatpush.xpose.msra.mxu0 %v1881
        %1887 = vmatpush.xpose.msra.mxu0 %v1879
        %1888 = vmatpush.xpose.msra.mxu0 %v1877
        %1889 = vmatpush.xpose.msra.mxu0 %v1875
        %1890 = vmatpush.xpose.msra.mxu0 %v1873
        %1891 = vmatpush.xpose.msra.mxu0 %v1871
        %1892 = vmatpush.xpose.msra.mxu0 %v1869
        %1893 = vmatpush.xpose.msra.mxu0 %v1867
        %1894 = vmatpush.xpose.msra.mxu0 %v1865
        %1895 = vmatpush.xpose.msra.mxu0 %v1863
        %1896 = vmatpush.xpose.msra.mxu0 %v1861
        %1897 = vmatpush.xpose.msra.mxu0 %v1859
        %1898 = vmatpush.xpose.msra.mxu0 %v1857
        %1899 = vmatpush.xpose.msra.mxu0 %v1855
        %1900 = vmatpush.xpose.msra.mxu0 %v1853
        %1901 = vmatmul.f32.gmra.mxu0 %v1821
        %v1902 = vpop.f32.mrf.mxu0
        %v1903 = vadd.f32 0.0, %v1902
        %1904 = vmatmul.f32.gmra.mxu0 %v1823
        %v1905 = vpop.f32.mrf.mxu0
        %v1906 = vadd.f32 0.0, %v1905
        %1907 = vmatmul.f32.gmra.mxu0 %v1825
        %v1908 = vpop.f32.mrf.mxu0
        %v1909 = vadd.f32 0.0, %v1908
        %1910 = vmatmul.f32.gmra.mxu0 %v1827
        %v1911 = vpop.f32.mrf.mxu0
        %v1912 = vadd.f32 0.0, %v1911
        %1913 = vmatmul.f32.gmra.mxu0 %v1829
        %v1914 = vpop.f32.mrf.mxu0
        %v1915 = vadd.f32 0.0, %v1914
        %1916 = vmatmul.f32.gmra.mxu0 %v1831
        %v1917 = vpop.f32.mrf.mxu0
        %v1918 = vadd.f32 0.0, %v1917
        %1919 = vmatmul.f32.gmra.mxu0 %v1833
        %v1920 = vpop.f32.mrf.mxu0
        %v1921 = vadd.f32 0.0, %v1920
        %1922 = vmatmul.f32.gmra.mxu0 %v1835
        %v1923 = vpop.f32.mrf.mxu0
        %v1924 = vadd.f32 0.0, %v1923
        %1925 = vmatmul.f32.gmra.mxu0 %v1837
        %v1926 = vpop.f32.mrf.mxu0
        %v1927 = vadd.f32 0.0, %v1926
        %1928 = vmatmul.f32.gmra.mxu0 %v1839
        %v1929 = vpop.f32.mrf.mxu0
        %v1930 = vadd.f32 0.0, %v1929
        %1931 = vmatmul.f32.gmra.mxu0 %v1841
        %v1932 = vpop.f32.mrf.mxu0
        %v1933 = vadd.f32 0.0, %v1932
        %1934 = vmatmul.f32.gmra.mxu0 %v1843
        %v1935 = vpop.f32.mrf.mxu0
        %v1936 = vadd.f32 0.0, %v1935
        %1937 = vmatmul.f32.gmra.mxu0 %v1845
        %v1938 = vpop.f32.mrf.mxu0
        %v1939 = vadd.f32 0.0, %v1938
        %1940 = vmatmul.f32.gmra.mxu0 %v1847
        %v1941 = vpop.f32.mrf.mxu0
        %v1942 = vadd.f32 0.0, %v1941
        %1943 = vmatmul.f32.gmra.mxu0 %v1849
        %v1944 = vpop.f32.mrf.mxu0
        %v1945 = vadd.f32 0.0, %v1944
        %1946 = vmatmul.f32.gmra.mxu0 %v1851
        %v1947 = vpop.f32.mrf.mxu0
        %v1948 = vadd.f32 0.0, %v1947
        %1949 = vdwg.mxu0
        %1950 = vmax.xlane.f32.xlu0 %v1516
        %v1951 = vpop.xlane.xlu0 %1950
        %1952 = vmax.xlane.f32.xlu0 %v1519
        %v1953 = vpop.xlane.xlu0 %1952
        %1954 = vmax.xlane.f32.xlu0 %v1522
        %v1955 = vpop.xlane.xlu0 %1954
        %1956 = vmax.xlane.f32.xlu0 %v1525
        %v1957 = vpop.xlane.xlu0 %1956
        %1958 = vmax.xlane.f32.xlu0 %v1528
        %v1959 = vpop.xlane.xlu0 %1958
        %1960 = vmax.xlane.f32.xlu0 %v1531
        %v1961 = vpop.xlane.xlu0 %1960
        %1962 = vmax.xlane.f32.xlu0 %v1534
        %v1963 = vpop.xlane.xlu0 %1962
        %1964 = vmax.xlane.f32.xlu0 %v1537
        %v1965 = vpop.xlane.xlu0 %1964
        %1966 = vmax.xlane.f32.xlu0 %v1540
        %v1967 = vpop.xlane.xlu0 %1966
        %1968 = vmax.xlane.f32.xlu0 %v1543
        %v1969 = vpop.xlane.xlu0 %1968
        %1970 = vmax.xlane.f32.xlu0 %v1546
        %v1971 = vpop.xlane.xlu0 %1970
        %1972 = vmax.xlane.f32.xlu0 %v1549
        %v1973 = vpop.xlane.xlu0 %1972
        %1974 = vmax.xlane.f32.xlu0 %v1552
        %v1975 = vpop.xlane.xlu0 %1974
        %1976 = vmax.xlane.f32.xlu0 %v1555
        %v1977 = vpop.xlane.xlu0 %1976
        %1978 = vmax.xlane.f32.xlu0 %v1558
        %v1979 = vpop.xlane.xlu0 %1978
        %1980 = vmax.xlane.f32.xlu0 %v1561
        %v1981 = vpop.xlane.xlu0 %1980
        %1982 = vmax.xlane.f32.xlu0 %v1645
        %v1983 = vpop.xlane.xlu0 %1982
        %1984 = vmax.xlane.f32.xlu0 %v1648
        %v1985 = vpop.xlane.xlu0 %1984
        %1986 = vmax.xlane.f32.xlu0 %v1651
        %v1987 = vpop.xlane.xlu0 %1986
        %1988 = vmax.xlane.f32.xlu0 %v1654
        %v1989 = vpop.xlane.xlu0 %1988
        %1990 = vmax.xlane.f32.xlu0 %v1657
        %v1991 = vpop.xlane.xlu0 %1990
        %1992 = vmax.xlane.f32.xlu0 %v1660
        %v1993 = vpop.xlane.xlu0 %1992
        %1994 = vmax.xlane.f32.xlu0 %v1663
        %v1995 = vpop.xlane.xlu0 %1994
        %1996 = vmax.xlane.f32.xlu0 %v1666
        %v1997 = vpop.xlane.xlu0 %1996
        %1998 = vmax.xlane.f32.xlu0 %v1669
        %v1999 = vpop.xlane.xlu0 %1998
        %2000 = vmax.xlane.f32.xlu0 %v1672
        %v2001 = vpop.xlane.xlu0 %2000
        %2002 = vmax.xlane.f32.xlu0 %v1675
        %v2003 = vpop.xlane.xlu0 %2002
        %2004 = vmax.xlane.f32.xlu0 %v1678
        %v2005 = vpop.xlane.xlu0 %2004
        %2006 = vmax.xlane.f32.xlu0 %v1681
        %v2007 = vpop.xlane.xlu0 %2006
        %2008 = vmax.xlane.f32.xlu0 %v1684
        %v2009 = vpop.xlane.xlu0 %2008
        %2010 = vmax.xlane.f32.xlu0 %v1687
        %v2011 = vpop.xlane.xlu0 %2010
        %2012 = vmax.xlane.f32.xlu0 %v1690
        %v2013 = vpop.xlane.xlu0 %2012
        %2014 = vmax.xlane.f32.xlu0 %v1774
        %v2015 = vpop.xlane.xlu0 %2014
        %2016 = vmax.xlane.f32.xlu0 %v1777
        %v2017 = vpop.xlane.xlu0 %2016
        %2018 = vmax.xlane.f32.xlu0 %v1780
        %v2019 = vpop.xlane.xlu0 %2018
        %2020 = vmax.xlane.f32.xlu0 %v1783
        %v2021 = vpop.xlane.xlu0 %2020
        %2022 = vmax.xlane.f32.xlu0 %v1786
        %v2023 = vpop.xlane.xlu0 %2022
        %2024 = vmax.xlane.f32.xlu0 %v1789
        %v2025 = vpop.xlane.xlu0 %2024
        %2026 = vmax.xlane.f32.xlu0 %v1792
        %v2027 = vpop.xlane.xlu0 %2026
        %2028 = vmax.xlane.f32.xlu0 %v1795
        %v2029 = vpop.xlane.xlu0 %2028
        %2030 = vmax.xlane.f32.xlu0 %v1798
        %v2031 = vpop.xlane.xlu0 %2030
        %2032 = vmax.xlane.f32.xlu0 %v1801
        %v2033 = vpop.xlane.xlu0 %2032
        %2034 = vmax.xlane.f32.xlu0 %v1804
        %v2035 = vpop.xlane.xlu0 %2034
        %2036 = vmax.xlane.f32.xlu0 %v1807
        %v2037 = vpop.xlane.xlu0 %2036
        %2038 = vmax.xlane.f32.xlu0 %v1810
        %v2039 = vpop.xlane.xlu0 %2038
        %2040 = vmax.xlane.f32.xlu0 %v1813
        %v2041 = vpop.xlane.xlu0 %2040
        %2042 = vmax.xlane.f32.xlu0 %v1816
        %v2043 = vpop.xlane.xlu0 %2042
        %2044 = vmax.xlane.f32.xlu0 %v1819
        %v2045 = vpop.xlane.xlu0 %2044
        %2046 = vmax.xlane.f32.xlu0 %v1903
        %v2047 = vpop.xlane.xlu0 %2046
        %2048 = vmax.xlane.f32.xlu0 %v1906
        %v2049 = vpop.xlane.xlu0 %2048
        %2050 = vmax.xlane.f32.xlu0 %v1909
        %v2051 = vpop.xlane.xlu0 %2050
        %2052 = vmax.xlane.f32.xlu0 %v1912
        %v2053 = vpop.xlane.xlu0 %2052
        %2054 = vmax.xlane.f32.xlu0 %v1915
        %v2055 = vpop.xlane.xlu0 %2054
        %2056 = vmax.xlane.f32.xlu0 %v1918
        %v2057 = vpop.xlane.xlu0 %2056
        %2058 = vmax.xlane.f32.xlu0 %v1921
        %v2059 = vpop.xlane.xlu0 %2058
        %2060 = vmax.xlane.f32.xlu0 %v1924
        %v2061 = vpop.xlane.xlu0 %2060
        %2062 = vmax.xlane.f32.xlu0 %v1927
        %v2063 = vpop.xlane.xlu0 %2062
        %2064 = vmax.xlane.f32.xlu0 %v1930
        %v2065 = vpop.xlane.xlu0 %2064
        %2066 = vmax.xlane.f32.xlu0 %v1933
        %v2067 = vpop.xlane.xlu0 %2066
        %2068 = vmax.xlane.f32.xlu0 %v1936
        %v2069 = vpop.xlane.xlu0 %2068
        %2070 = vmax.xlane.f32.xlu0 %v1939
        %v2071 = vpop.xlane.xlu0 %2070
        %2072 = vmax.xlane.f32.xlu0 %v1942
        %v2073 = vpop.xlane.xlu0 %2072
        %2074 = vmax.xlane.f32.xlu0 %v1945
        %v2075 = vpop.xlane.xlu0 %2074
        %2076 = vmax.xlane.f32.xlu0 %v1948
        %v2077 = vpop.xlane.xlu0 %2076
        %v2078 = vsub.f32 %v1516, %v1951
        %v2079 = vsub.f32 %v1519, %v1953
        %v2080 = vsub.f32 %v1522, %v1955
        %v2081 = vsub.f32 %v1525, %v1957
        %v2082 = vsub.f32 %v1528, %v1959
        %v2083 = vsub.f32 %v1531, %v1961
        %v2084 = vsub.f32 %v1534, %v1963
        %v2085 = vsub.f32 %v1537, %v1965
        %v2086 = vsub.f32 %v1540, %v1967
        %v2087 = vsub.f32 %v1543, %v1969
        %v2088 = vsub.f32 %v1546, %v1971
        %v2089 = vsub.f32 %v1549, %v1973
        %v2090 = vsub.f32 %v1552, %v1975
        %v2091 = vsub.f32 %v1555, %v1977
        %v2092 = vsub.f32 %v1558, %v1979
        %v2093 = vsub.f32 %v1561, %v1981
        %v2094 = vsub.f32 %v1645, %v1983
        %v2095 = vsub.f32 %v1648, %v1985
        %v2096 = vsub.f32 %v1651, %v1987
        %v2097 = vsub.f32 %v1654, %v1989
        %v2098 = vsub.f32 %v1657, %v1991
        %v2099 = vsub.f32 %v1660, %v1993
        %v2100 = vsub.f32 %v1663, %v1995
        %v2101 = vsub.f32 %v1666, %v1997
        %v2102 = vsub.f32 %v1669, %v1999
        %v2103 = vsub.f32 %v1672, %v2001
        %v2104 = vsub.f32 %v1675, %v2003
        %v2105 = vsub.f32 %v1678, %v2005
        %v2106 = vsub.f32 %v1681, %v2007
        %v2107 = vsub.f32 %v1684, %v2009
        %v2108 = vsub.f32 %v1687, %v2011
        %v2109 = vsub.f32 %v1690, %v2013
        %v2110 = vsub.f32 %v1774, %v2015
        %v2111 = vsub.f32 %v1777, %v2017
        %v2112 = vsub.f32 %v1780, %v2019
        %v2113 = vsub.f32 %v1783, %v2021
        %v2114 = vsub.f32 %v1786, %v2023
        %v2115 = vsub.f32 %v1789, %v2025
        %v2116 = vsub.f32 %v1792, %v2027
        %v2117 = vsub.f32 %v1795, %v2029
        %v2118 = vsub.f32 %v1798, %v2031
        %v2119 = vsub.f32 %v1801, %v2033
        %v2120 = vsub.f32 %v1804, %v2035
        %v2121 = vsub.f32 %v1807, %v2037
        %v2122 = vsub.f32 %v1810, %v2039
        %v2123 = vsub.f32 %v1813, %v2041
        %v2124 = vsub.f32 %v1816, %v2043
        %v2125 = vsub.f32 %v1819, %v2045
        %v2126 = vsub.f32 %v1903, %v2047
        %v2127 = vsub.f32 %v1906, %v2049
        %v2128 = vsub.f32 %v1909, %v2051
        %v2129 = vsub.f32 %v1912, %v2053
        %v2130 = vsub.f32 %v1915, %v2055
        %v2131 = vsub.f32 %v1918, %v2057
        %v2132 = vsub.f32 %v1921, %v2059
        %v2133 = vsub.f32 %v1924, %v2061
        %v2134 = vsub.f32 %v1927, %v2063
        %v2135 = vsub.f32 %v1930, %v2065
        %v2136 = vsub.f32 %v1933, %v2067
        %v2137 = vsub.f32 %v1936, %v2069
        %v2138 = vsub.f32 %v1939, %v2071
        %v2139 = vsub.f32 %v1942, %v2073
        %v2140 = vsub.f32 %v1945, %v2075
        %v2141 = vsub.f32 %v1948, %v2077
        %v2142 = vmul.f32 %v2078, 1.442695
        %v2143 = vpow.pop %v2142
        %v2144 = vmul.f32 %v2079, 1.442695
        %v2145 = vpow.pop %v2144
        %v2146 = vmul.f32 %v2080, 1.442695
        %v2147 = vpow.pop %v2146
        %v2148 = vmul.f32 %v2081, 1.442695
        %v2149 = vpow.pop %v2148
        %v2150 = vmul.f32 %v2082, 1.442695
        %v2151 = vpow.pop %v2150
        %v2152 = vmul.f32 %v2083, 1.442695
        %v2153 = vpow.pop %v2152
        %v2154 = vmul.f32 %v2084, 1.442695
        %v2155 = vpow.pop %v2154
        %v2156 = vmul.f32 %v2085, 1.442695
        %v2157 = vpow.pop %v2156
        %v2158 = vmul.f32 %v2086, 1.442695
        %v2159 = vpow.pop %v2158
        %v2160 = vmul.f32 %v2087, 1.442695
        %v2161 = vpow.pop %v2160
        %v2162 = vmul.f32 %v2088, 1.442695
        %v2163 = vpow.pop %v2162
        %v2164 = vmul.f32 %v2089, 1.442695
        %v2165 = vpow.pop %v2164
        %v2166 = vmul.f32 %v2090, 1.442695
        %v2167 = vpow.pop %v2166
        %v2168 = vmul.f32 %v2091, 1.442695
        %v2169 = vpow.pop %v2168
        %v2170 = vmul.f32 %v2092, 1.442695
        %v2171 = vpow.pop %v2170
        %v2172 = vmul.f32 %v2093, 1.442695
        %v2173 = vpow.pop %v2172
        %v2174 = vmul.f32 %v2094, 1.442695
        %v2175 = vpow.pop %v2174
        %v2176 = vmul.f32 %v2095, 1.442695
        %v2177 = vpow.pop %v2176
        %v2178 = vmul.f32 %v2096, 1.442695
        %v2179 = vpow.pop %v2178
        %v2180 = vmul.f32 %v2097, 1.442695
        %v2181 = vpow.pop %v2180
        %v2182 = vmul.f32 %v2098, 1.442695
        %v2183 = vpow.pop %v2182
        %v2184 = vmul.f32 %v2099, 1.442695
        %v2185 = vpow.pop %v2184
        %v2186 = vmul.f32 %v2100, 1.442695
        %v2187 = vpow.pop %v2186
        %v2188 = vmul.f32 %v2101, 1.442695
        %v2189 = vpow.pop %v2188
        %v2190 = vmul.f32 %v2102, 1.442695
        %v2191 = vpow.pop %v2190
        %v2192 = vmul.f32 %v2103, 1.442695
        %v2193 = vpow.pop %v2192
        %v2194 = vmul.f32 %v2104, 1.442695
        %v2195 = vpow.pop %v2194
        %v2196 = vmul.f32 %v2105, 1.442695
        %v2197 = vpow.pop %v2196
        %v2198 = vmul.f32 %v2106, 1.442695
        %v2199 = vpow.pop %v2198
        %v2200 = vmul.f32 %v2107, 1.442695
        %v2201 = vpow.pop %v2200
        %v2202 = vmul.f32 %v2108, 1.442695
        %v2203 = vpow.pop %v2202
        %v2204 = vmul.f32 %v2109, 1.442695
        %v2205 = vpow.pop %v2204
        %v2206 = vmul.f32 %v2110, 1.442695
        %v2207 = vpow.pop %v2206
        %v2208 = vmul.f32 %v2111, 1.442695
        %v2209 = vpow.pop %v2208
        %v2210 = vmul.f32 %v2112, 1.442695
        %v2211 = vpow.pop %v2210
        %v2212 = vmul.f32 %v2113, 1.442695
        %v2213 = vpow.pop %v2212
        %v2214 = vmul.f32 %v2114, 1.442695
        %v2215 = vpow.pop %v2214
        %v2216 = vmul.f32 %v2115, 1.442695
        %v2217 = vpow.pop %v2216
        %v2218 = vmul.f32 %v2116, 1.442695
        %v2219 = vpow.pop %v2218
        %v2220 = vmul.f32 %v2117, 1.442695
        %v2221 = vpow.pop %v2220
        %v2222 = vmul.f32 %v2118, 1.442695
        %v2223 = vpow.pop %v2222
        %v2224 = vmul.f32 %v2119, 1.442695
        %v2225 = vpow.pop %v2224
        %v2226 = vmul.f32 %v2120, 1.442695
        %v2227 = vpow.pop %v2226
        %v2228 = vmul.f32 %v2121, 1.442695
        %v2229 = vpow.pop %v2228
        %v2230 = vmul.f32 %v2122, 1.442695
        %v2231 = vpow.pop %v2230
        %v2232 = vmul.f32 %v2123, 1.442695
        %v2233 = vpow.pop %v2232
        %v2234 = vmul.f32 %v2124, 1.442695
        %v2235 = vpow.pop %v2234
        %v2236 = vmul.f32 %v2125, 1.442695
        %v2237 = vpow.pop %v2236
        %v2238 = vmul.f32 %v2126, 1.442695
        %v2239 = vpow.pop %v2238
        %v2240 = vmul.f32 %v2127, 1.442695
        %v2241 = vpow.pop %v2240
        %v2242 = vmul.f32 %v2128, 1.442695
        %v2243 = vpow.pop %v2242
        %v2244 = vmul.f32 %v2129, 1.442695
        %v2245 = vpow.pop %v2244
        %v2246 = vmul.f32 %v2130, 1.442695
        %v2247 = vpow.pop %v2246
        %v2248 = vmul.f32 %v2131, 1.442695
        %v2249 = vpow.pop %v2248
        %v2250 = vmul.f32 %v2132, 1.442695
        %v2251 = vpow.pop %v2250
        %v2252 = vmul.f32 %v2133, 1.442695
        %v2253 = vpow.pop %v2252
        %v2254 = vmul.f32 %v2134, 1.442695
        %v2255 = vpow.pop %v2254
        %v2256 = vmul.f32 %v2135, 1.442695
        %v2257 = vpow.pop %v2256
        %v2258 = vmul.f32 %v2136, 1.442695
        %v2259 = vpow.pop %v2258
        %v2260 = vmul.f32 %v2137, 1.442695
        %v2261 = vpow.pop %v2260
        %v2262 = vmul.f32 %v2138, 1.442695
        %v2263 = vpow.pop %v2262
        %v2264 = vmul.f32 %v2139, 1.442695
        %v2265 = vpow.pop %v2264
        %v2266 = vmul.f32 %v2140, 1.442695
        %v2267 = vpow.pop %v2266
        %v2268 = vmul.f32 %v2141, 1.442695
        %v2269 = vpow.pop %v2268
        %2270 = vadd.xlane.f32.xlu0 %v2143
        %v2271 = vpop.xlane.xlu0 %2270
        %2272 = vadd.xlane.f32.xlu0 %v2145
        %v2273 = vpop.xlane.xlu0 %2272
        %2274 = vadd.xlane.f32.xlu0 %v2147
        %v2275 = vpop.xlane.xlu0 %2274
        %2276 = vadd.xlane.f32.xlu0 %v2149
        %v2277 = vpop.xlane.xlu0 %2276
        %2278 = vadd.xlane.f32.xlu0 %v2151
        %v2279 = vpop.xlane.xlu0 %2278
        %2280 = vadd.xlane.f32.xlu0 %v2153
        %v2281 = vpop.xlane.xlu0 %2280
        %2282 = vadd.xlane.f32.xlu0 %v2155
        %v2283 = vpop.xlane.xlu0 %2282
        %2284 = vadd.xlane.f32.xlu0 %v2157
        %v2285 = vpop.xlane.xlu0 %2284
        %2286 = vadd.xlane.f32.xlu0 %v2159
        %v2287 = vpop.xlane.xlu0 %2286
        %2288 = vadd.xlane.f32.xlu0 %v2161
        %v2289 = vpop.xlane.xlu0 %2288
        %2290 = vadd.xlane.f32.xlu0 %v2163
        %v2291 = vpop.xlane.xlu0 %2290
        %2292 = vadd.xlane.f32.xlu0 %v2165
        %v2293 = vpop.xlane.xlu0 %2292
        %2294 = vadd.xlane.f32.xlu0 %v2167
        %v2295 = vpop.xlane.xlu0 %2294
        %2296 = vadd.xlane.f32.xlu0 %v2169
        %v2297 = vpop.xlane.xlu0 %2296
        %2298 = vadd.xlane.f32.xlu0 %v2171
        %v2299 = vpop.xlane.xlu0 %2298
        %2300 = vadd.xlane.f32.xlu0 %v2173
        %v2301 = vpop.xlane.xlu0 %2300
        %2302 = vadd.xlane.f32.xlu0 %v2175
        %v2303 = vpop.xlane.xlu0 %2302
        %2304 = vadd.xlane.f32.xlu0 %v2177
        %v2305 = vpop.xlane.xlu0 %2304
        %2306 = vadd.xlane.f32.xlu0 %v2179
        %v2307 = vpop.xlane.xlu0 %2306
        %2308 = vadd.xlane.f32.xlu0 %v2181
        %v2309 = vpop.xlane.xlu0 %2308
        %2310 = vadd.xlane.f32.xlu0 %v2183
        %v2311 = vpop.xlane.xlu0 %2310
        %2312 = vadd.xlane.f32.xlu0 %v2185
        %v2313 = vpop.xlane.xlu0 %2312
        %2314 = vadd.xlane.f32.xlu0 %v2187
        %v2315 = vpop.xlane.xlu0 %2314
        %2316 = vadd.xlane.f32.xlu0 %v2189
        %v2317 = vpop.xlane.xlu0 %2316
        %2318 = vadd.xlane.f32.xlu0 %v2191
        %v2319 = vpop.xlane.xlu0 %2318
        %2320 = vadd.xlane.f32.xlu0 %v2193
        %v2321 = vpop.xlane.xlu0 %2320
        %2322 = vadd.xlane.f32.xlu0 %v2195
        %v2323 = vpop.xlane.xlu0 %2322
        %2324 = vadd.xlane.f32.xlu0 %v2197
        %v2325 = vpop.xlane.xlu0 %2324
        %2326 = vadd.xlane.f32.xlu0 %v2199
        %v2327 = vpop.xlane.xlu0 %2326
        %2328 = vadd.xlane.f32.xlu0 %v2201
        %v2329 = vpop.xlane.xlu0 %2328
        %2330 = vadd.xlane.f32.xlu0 %v2203
        %v2331 = vpop.xlane.xlu0 %2330
        %2332 = vadd.xlane.f32.xlu0 %v2205
        %v2333 = vpop.xlane.xlu0 %2332
        %2334 = vadd.xlane.f32.xlu0 %v2207
        %v2335 = vpop.xlane.xlu0 %2334
        %2336 = vadd.xlane.f32.xlu0 %v2209
        %v2337 = vpop.xlane.xlu0 %2336
        %2338 = vadd.xlane.f32.xlu0 %v2211
        %v2339 = vpop.xlane.xlu0 %2338
        %2340 = vadd.xlane.f32.xlu0 %v2213
        %v2341 = vpop.xlane.xlu0 %2340
        %2342 = vadd.xlane.f32.xlu0 %v2215
        %v2343 = vpop.xlane.xlu0 %2342
        %2344 = vadd.xlane.f32.xlu0 %v2217
        %v2345 = vpop.xlane.xlu0 %2344
        %2346 = vadd.xlane.f32.xlu0 %v2219
        %v2347 = vpop.xlane.xlu0 %2346
        %2348 = vadd.xlane.f32.xlu0 %v2221
        %v2349 = vpop.xlane.xlu0 %2348
        %2350 = vadd.xlane.f32.xlu0 %v2223
        %v2351 = vpop.xlane.xlu0 %2350
        %2352 = vadd.xlane.f32.xlu0 %v2225
        %v2353 = vpop.xlane.xlu0 %2352
        %2354 = vadd.xlane.f32.xlu0 %v2227
        %v2355 = vpop.xlane.xlu0 %2354
        %2356 = vadd.xlane.f32.xlu0 %v2229
        %v2357 = vpop.xlane.xlu0 %2356
        %2358 = vadd.xlane.f32.xlu0 %v2231
        %v2359 = vpop.xlane.xlu0 %2358
        %2360 = vadd.xlane.f32.xlu0 %v2233
        %v2361 = vpop.xlane.xlu0 %2360
        %2362 = vadd.xlane.f32.xlu0 %v2235
        %v2363 = vpop.xlane.xlu0 %2362
        %2364 = vadd.xlane.f32.xlu0 %v2237
        %v2365 = vpop.xlane.xlu0 %2364
        %2366 = vadd.xlane.f32.xlu0 %v2239
        %v2367 = vpop.xlane.xlu0 %2366
        %2368 = vadd.xlane.f32.xlu0 %v2241
        %v2369 = vpop.xlane.xlu0 %2368
        %2370 = vadd.xlane.f32.xlu0 %v2243
        %v2371 = vpop.xlane.xlu0 %2370
        %2372 = vadd.xlane.f32.xlu0 %v2245
        %v2373 = vpop.xlane.xlu0 %2372
        %2374 = vadd.xlane.f32.xlu0 %v2247
        %v2375 = vpop.xlane.xlu0 %2374
        %2376 = vadd.xlane.f32.xlu0 %v2249
        %v2377 = vpop.xlane.xlu0 %2376
        %2378 = vadd.xlane.f32.xlu0 %v2251
        %v2379 = vpop.xlane.xlu0 %2378
        %2380 = vadd.xlane.f32.xlu0 %v2253
        %v2381 = vpop.xlane.xlu0 %2380
        %2382 = vadd.xlane.f32.xlu0 %v2255
        %v2383 = vpop.xlane.xlu0 %2382
        %2384 = vadd.xlane.f32.xlu0 %v2257
        %v2385 = vpop.xlane.xlu0 %2384
        %2386 = vadd.xlane.f32.xlu0 %v2259
        %v2387 = vpop.xlane.xlu0 %2386
        %2388 = vadd.xlane.f32.xlu0 %v2261
        %v2389 = vpop.xlane.xlu0 %2388
        %2390 = vadd.xlane.f32.xlu0 %v2263
        %v2391 = vpop.xlane.xlu0 %2390
        %2392 = vadd.xlane.f32.xlu0 %v2265
        %v2393 = vpop.xlane.xlu0 %2392
        %2394 = vadd.xlane.f32.xlu0 %v2267
        %v2395 = vpop.xlane.xlu0 %2394
        %2396 = vadd.xlane.f32.xlu0 %v2269
        %v2397 = vpop.xlane.xlu0 %2396
        %v2398 = vrcp.pop %v2271
        %v2399 = vmul.f32 %v2271, %v2398
        %v2400 = vsub.f32 1.0, %v2399
        %v2401 = vmul.f32 %v2398, %v2400
        %v2402 = vadd.f32 %v2398, %v2401
        %vm2403 = vweird.f32 %v2271
        %vm2404 = vweird.f32 %v2398
        %vm2405 = vmor %vm2403, %vm2404
        %v2406 = vsel %vm2405, %v2398, %v2402
        %v2407 = vand.u32 2147483647, %v2271
        %vm2408 = vcmp.eq.f32.partialorder %v2407, 8.507059e+37
        %v2409 = vand.u32 %v2271, 2147483648
        %v2410 = vor.u32 1.1754944e-38, %v2409
        %v2411 = vsel %vm2408, %v2410, %v2406
        %v2412 = vrcp.pop %v2273
        %v2413 = vmul.f32 %v2273, %v2412
        %v2414 = vsub.f32 1.0, %v2413
        %v2415 = vmul.f32 %v2412, %v2414
        %v2416 = vadd.f32 %v2412, %v2415
        %vm2417 = vweird.f32 %v2273
        %vm2418 = vweird.f32 %v2412
        %vm2419 = vmor %vm2417, %vm2418
        %v2420 = vsel %vm2419, %v2412, %v2416
        %v2421 = vand.u32 2147483647, %v2273
        %vm2422 = vcmp.eq.f32.partialorder %v2421, 8.507059e+37
        %v2423 = vand.u32 %v2273, 2147483648
        %v2424 = vor.u32 1.1754944e-38, %v2423
        %v2425 = vsel %vm2422, %v2424, %v2420
        %v2426 = vrcp.pop %v2275
        %v2427 = vmul.f32 %v2275, %v2426
        %v2428 = vsub.f32 1.0, %v2427
        %v2429 = vmul.f32 %v2426, %v2428
        %v2430 = vadd.f32 %v2426, %v2429
        %vm2431 = vweird.f32 %v2275
        %vm2432 = vweird.f32 %v2426
        %vm2433 = vmor %vm2431, %vm2432
        %v2434 = vsel %vm2433, %v2426, %v2430
        %v2435 = vand.u32 2147483647, %v2275
        %vm2436 = vcmp.eq.f32.partialorder %v2435, 8.507059e+37
        %v2437 = vand.u32 %v2275, 2147483648
        %v2438 = vor.u32 1.1754944e-38, %v2437
        %v2439 = vsel %vm2436, %v2438, %v2434
        %v2440 = vrcp.pop %v2277
        %v2441 = vmul.f32 %v2277, %v2440
        %v2442 = vsub.f32 1.0, %v2441
        %v2443 = vmul.f32 %v2440, %v2442
        %v2444 = vadd.f32 %v2440, %v2443
        %vm2445 = vweird.f32 %v2277
        %vm2446 = vweird.f32 %v2440
        %vm2447 = vmor %vm2445, %vm2446
        %v2448 = vsel %vm2447, %v2440, %v2444
        %v2449 = vand.u32 2147483647, %v2277
        %vm2450 = vcmp.eq.f32.partialorder %v2449, 8.507059e+37
        %v2451 = vand.u32 %v2277, 2147483648
        %v2452 = vor.u32 1.1754944e-38, %v2451
        %v2453 = vsel %vm2450, %v2452, %v2448
        %v2454 = vrcp.pop %v2279
        %v2455 = vmul.f32 %v2279, %v2454
        %v2456 = vsub.f32 1.0, %v2455
        %v2457 = vmul.f32 %v2454, %v2456
        %v2458 = vadd.f32 %v2454, %v2457
        %vm2459 = vweird.f32 %v2279
        %vm2460 = vweird.f32 %v2454
        %vm2461 = vmor %vm2459, %vm2460
        %v2462 = vsel %vm2461, %v2454, %v2458
        %v2463 = vand.u32 2147483647, %v2279
        %vm2464 = vcmp.eq.f32.partialorder %v2463, 8.507059e+37
        %v2465 = vand.u32 %v2279, 2147483648
        %v2466 = vor.u32 1.1754944e-38, %v2465
        %v2467 = vsel %vm2464, %v2466, %v2462
        %v2468 = vrcp.pop %v2281
        %v2469 = vmul.f32 %v2281, %v2468
        %v2470 = vsub.f32 1.0, %v2469
        %v2471 = vmul.f32 %v2468, %v2470
        %v2472 = vadd.f32 %v2468, %v2471
        %vm2473 = vweird.f32 %v2281
        %vm2474 = vweird.f32 %v2468
        %vm2475 = vmor %vm2473, %vm2474
        %v2476 = vsel %vm2475, %v2468, %v2472
        %v2477 = vand.u32 2147483647, %v2281
        %vm2478 = vcmp.eq.f32.partialorder %v2477, 8.507059e+37
        %v2479 = vand.u32 %v2281, 2147483648
        %v2480 = vor.u32 1.1754944e-38, %v2479
        %v2481 = vsel %vm2478, %v2480, %v2476
        %v2482 = vrcp.pop %v2283
        %v2483 = vmul.f32 %v2283, %v2482
        %v2484 = vsub.f32 1.0, %v2483
        %v2485 = vmul.f32 %v2482, %v2484
        %v2486 = vadd.f32 %v2482, %v2485
        %vm2487 = vweird.f32 %v2283
        %vm2488 = vweird.f32 %v2482
        %vm2489 = vmor %vm2487, %vm2488
        %v2490 = vsel %vm2489, %v2482, %v2486
        %v2491 = vand.u32 2147483647, %v2283
        %vm2492 = vcmp.eq.f32.partialorder %v2491, 8.507059e+37
        %v2493 = vand.u32 %v2283, 2147483648
        %v2494 = vor.u32 1.1754944e-38, %v2493
        %v2495 = vsel %vm2492, %v2494, %v2490
        %v2496 = vrcp.pop %v2285
        %v2497 = vmul.f32 %v2285, %v2496
        %v2498 = vsub.f32 1.0, %v2497
        %v2499 = vmul.f32 %v2496, %v2498
        %v2500 = vadd.f32 %v2496, %v2499
        %vm2501 = vweird.f32 %v2285
        %vm2502 = vweird.f32 %v2496
        %vm2503 = vmor %vm2501, %vm2502
        %v2504 = vsel %vm2503, %v2496, %v2500
        %v2505 = vand.u32 2147483647, %v2285
        %vm2506 = vcmp.eq.f32.partialorder %v2505, 8.507059e+37
        %v2507 = vand.u32 %v2285, 2147483648
        %v2508 = vor.u32 1.1754944e-38, %v2507
        %v2509 = vsel %vm2506, %v2508, %v2504
        %v2510 = vrcp.pop %v2287
        %v2511 = vmul.f32 %v2287, %v2510
        %v2512 = vsub.f32 1.0, %v2511
        %v2513 = vmul.f32 %v2510, %v2512
        %v2514 = vadd.f32 %v2510, %v2513
        %vm2515 = vweird.f32 %v2287
        %vm2516 = vweird.f32 %v2510
        %vm2517 = vmor %vm2515, %vm2516
        %v2518 = vsel %vm2517, %v2510, %v2514
        %v2519 = vand.u32 2147483647, %v2287
        %vm2520 = vcmp.eq.f32.partialorder %v2519, 8.507059e+37
        %v2521 = vand.u32 %v2287, 2147483648
        %v2522 = vor.u32 1.1754944e-38, %v2521
        %v2523 = vsel %vm2520, %v2522, %v2518
        %v2524 = vrcp.pop %v2289
        %v2525 = vmul.f32 %v2289, %v2524
        %v2526 = vsub.f32 1.0, %v2525
        %v2527 = vmul.f32 %v2524, %v2526
        %v2528 = vadd.f32 %v2524, %v2527
        %vm2529 = vweird.f32 %v2289
        %vm2530 = vweird.f32 %v2524
        %vm2531 = vmor %vm2529, %vm2530
        %v2532 = vsel %vm2531, %v2524, %v2528
        %v2533 = vand.u32 2147483647, %v2289
        %vm2534 = vcmp.eq.f32.partialorder %v2533, 8.507059e+37
        %v2535 = vand.u32 %v2289, 2147483648
        %v2536 = vor.u32 1.1754944e-38, %v2535
        %v2537 = vsel %vm2534, %v2536, %v2532
        %v2538 = vrcp.pop %v2291
        %v2539 = vmul.f32 %v2291, %v2538
        %v2540 = vsub.f32 1.0, %v2539
        %v2541 = vmul.f32 %v2538, %v2540
        %v2542 = vadd.f32 %v2538, %v2541
        %vm2543 = vweird.f32 %v2291
        %vm2544 = vweird.f32 %v2538
        %vm2545 = vmor %vm2543, %vm2544
        %v2546 = vsel %vm2545, %v2538, %v2542
        %v2547 = vand.u32 2147483647, %v2291
        %vm2548 = vcmp.eq.f32.partialorder %v2547, 8.507059e+37
        %v2549 = vand.u32 %v2291, 2147483648
        %v2550 = vor.u32 1.1754944e-38, %v2549
        %v2551 = vsel %vm2548, %v2550, %v2546
        %v2552 = vrcp.pop %v2293
        %v2553 = vmul.f32 %v2293, %v2552
        %v2554 = vsub.f32 1.0, %v2553
        %v2555 = vmul.f32 %v2552, %v2554
        %v2556 = vadd.f32 %v2552, %v2555
        %vm2557 = vweird.f32 %v2293
        %vm2558 = vweird.f32 %v2552
        %vm2559 = vmor %vm2557, %vm2558
        %v2560 = vsel %vm2559, %v2552, %v2556
        %v2561 = vand.u32 2147483647, %v2293
        %vm2562 = vcmp.eq.f32.partialorder %v2561, 8.507059e+37
        %v2563 = vand.u32 %v2293, 2147483648
        %v2564 = vor.u32 1.1754944e-38, %v2563
        %v2565 = vsel %vm2562, %v2564, %v2560
        %v2566 = vrcp.pop %v2295
        %v2567 = vmul.f32 %v2295, %v2566
        %v2568 = vsub.f32 1.0, %v2567
        %v2569 = vmul.f32 %v2566, %v2568
        %v2570 = vadd.f32 %v2566, %v2569
        %vm2571 = vweird.f32 %v2295
        %vm2572 = vweird.f32 %v2566
        %vm2573 = vmor %vm2571, %vm2572
        %v2574 = vsel %vm2573, %v2566, %v2570
        %v2575 = vand.u32 2147483647, %v2295
        %vm2576 = vcmp.eq.f32.partialorder %v2575, 8.507059e+37
        %v2577 = vand.u32 %v2295, 2147483648
        %v2578 = vor.u32 1.1754944e-38, %v2577
        %v2579 = vsel %vm2576, %v2578, %v2574
        %v2580 = vrcp.pop %v2297
        %v2581 = vmul.f32 %v2297, %v2580
        %v2582 = vsub.f32 1.0, %v2581
        %v2583 = vmul.f32 %v2580, %v2582
        %v2584 = vadd.f32 %v2580, %v2583
        %vm2585 = vweird.f32 %v2297
        %vm2586 = vweird.f32 %v2580
        %vm2587 = vmor %vm2585, %vm2586
        %v2588 = vsel %vm2587, %v2580, %v2584
        %v2589 = vand.u32 2147483647, %v2297
        %vm2590 = vcmp.eq.f32.partialorder %v2589, 8.507059e+37
        %v2591 = vand.u32 %v2297, 2147483648
        %v2592 = vor.u32 1.1754944e-38, %v2591
        %v2593 = vsel %vm2590, %v2592, %v2588
        %v2594 = vrcp.pop %v2299
        %v2595 = vmul.f32 %v2299, %v2594
        %v2596 = vsub.f32 1.0, %v2595
        %v2597 = vmul.f32 %v2594, %v2596
        %v2598 = vadd.f32 %v2594, %v2597
        %vm2599 = vweird.f32 %v2299
        %vm2600 = vweird.f32 %v2594
        %vm2601 = vmor %vm2599, %vm2600
        %v2602 = vsel %vm2601, %v2594, %v2598
        %v2603 = vand.u32 2147483647, %v2299
        %vm2604 = vcmp.eq.f32.partialorder %v2603, 8.507059e+37
        %v2605 = vand.u32 %v2299, 2147483648
        %v2606 = vor.u32 1.1754944e-38, %v2605
        %v2607 = vsel %vm2604, %v2606, %v2602
        %v2608 = vrcp.pop %v2301
        %v2609 = vmul.f32 %v2301, %v2608
        %v2610 = vsub.f32 1.0, %v2609
        %v2611 = vmul.f32 %v2608, %v2610
        %v2612 = vadd.f32 %v2608, %v2611
        %vm2613 = vweird.f32 %v2301
        %vm2614 = vweird.f32 %v2608
        %vm2615 = vmor %vm2613, %vm2614
        %v2616 = vsel %vm2615, %v2608, %v2612
        %v2617 = vand.u32 2147483647, %v2301
        %vm2618 = vcmp.eq.f32.partialorder %v2617, 8.507059e+37
        %v2619 = vand.u32 %v2301, 2147483648
        %v2620 = vor.u32 1.1754944e-38, %v2619
        %v2621 = vsel %vm2618, %v2620, %v2616
        %v2622 = vrcp.pop %v2303
        %v2623 = vmul.f32 %v2303, %v2622
        %v2624 = vsub.f32 1.0, %v2623
        %v2625 = vmul.f32 %v2622, %v2624
        %v2626 = vadd.f32 %v2622, %v2625
        %vm2627 = vweird.f32 %v2303
        %vm2628 = vweird.f32 %v2622
        %vm2629 = vmor %vm2627, %vm2628
        %v2630 = vsel %vm2629, %v2622, %v2626
        %v2631 = vand.u32 2147483647, %v2303
        %vm2632 = vcmp.eq.f32.partialorder %v2631, 8.507059e+37
        %v2633 = vand.u32 %v2303, 2147483648
        %v2634 = vor.u32 1.1754944e-38, %v2633
        %v2635 = vsel %vm2632, %v2634, %v2630
        %v2636 = vrcp.pop %v2305
        %v2637 = vmul.f32 %v2305, %v2636
        %v2638 = vsub.f32 1.0, %v2637
        %v2639 = vmul.f32 %v2636, %v2638
        %v2640 = vadd.f32 %v2636, %v2639
        %vm2641 = vweird.f32 %v2305
        %vm2642 = vweird.f32 %v2636
        %vm2643 = vmor %vm2641, %vm2642
        %v2644 = vsel %vm2643, %v2636, %v2640
        %v2645 = vand.u32 2147483647, %v2305
        %vm2646 = vcmp.eq.f32.partialorder %v2645, 8.507059e+37
        %v2647 = vand.u32 %v2305, 2147483648
        %v2648 = vor.u32 1.1754944e-38, %v2647
        %v2649 = vsel %vm2646, %v2648, %v2644
        %v2650 = vrcp.pop %v2307
        %v2651 = vmul.f32 %v2307, %v2650
        %v2652 = vsub.f32 1.0, %v2651
        %v2653 = vmul.f32 %v2650, %v2652
        %v2654 = vadd.f32 %v2650, %v2653
        %vm2655 = vweird.f32 %v2307
        %vm2656 = vweird.f32 %v2650
        %vm2657 = vmor %vm2655, %vm2656
        %v2658 = vsel %vm2657, %v2650, %v2654
        %v2659 = vand.u32 2147483647, %v2307
        %vm2660 = vcmp.eq.f32.partialorder %v2659, 8.507059e+37
        %v2661 = vand.u32 %v2307, 2147483648
        %v2662 = vor.u32 1.1754944e-38, %v2661
        %v2663 = vsel %vm2660, %v2662, %v2658
        %v2664 = vrcp.pop %v2309
        %v2665 = vmul.f32 %v2309, %v2664
        %v2666 = vsub.f32 1.0, %v2665
        %v2667 = vmul.f32 %v2664, %v2666
        %v2668 = vadd.f32 %v2664, %v2667
        %vm2669 = vweird.f32 %v2309
        %vm2670 = vweird.f32 %v2664
        %vm2671 = vmor %vm2669, %vm2670
        %v2672 = vsel %vm2671, %v2664, %v2668
        %v2673 = vand.u32 2147483647, %v2309
        %vm2674 = vcmp.eq.f32.partialorder %v2673, 8.507059e+37
        %v2675 = vand.u32 %v2309, 2147483648
        %v2676 = vor.u32 1.1754944e-38, %v2675
        %v2677 = vsel %vm2674, %v2676, %v2672
        %v2678 = vrcp.pop %v2311
        %v2679 = vmul.f32 %v2311, %v2678
        %v2680 = vsub.f32 1.0, %v2679
        %v2681 = vmul.f32 %v2678, %v2680
        %v2682 = vadd.f32 %v2678, %v2681
        %vm2683 = vweird.f32 %v2311
        %vm2684 = vweird.f32 %v2678
        %vm2685 = vmor %vm2683, %vm2684
        %v2686 = vsel %vm2685, %v2678, %v2682
        %v2687 = vand.u32 2147483647, %v2311
        %vm2688 = vcmp.eq.f32.partialorder %v2687, 8.507059e+37
        %v2689 = vand.u32 %v2311, 2147483648
        %v2690 = vor.u32 1.1754944e-38, %v2689
        %v2691 = vsel %vm2688, %v2690, %v2686
        %v2692 = vrcp.pop %v2313
        %v2693 = vmul.f32 %v2313, %v2692
        %v2694 = vsub.f32 1.0, %v2693
        %v2695 = vmul.f32 %v2692, %v2694
        %v2696 = vadd.f32 %v2692, %v2695
        %vm2697 = vweird.f32 %v2313
        %vm2698 = vweird.f32 %v2692
        %vm2699 = vmor %vm2697, %vm2698
        %v2700 = vsel %vm2699, %v2692, %v2696
        %v2701 = vand.u32 2147483647, %v2313
        %vm2702 = vcmp.eq.f32.partialorder %v2701, 8.507059e+37
        %v2703 = vand.u32 %v2313, 2147483648
        %v2704 = vor.u32 1.1754944e-38, %v2703
        %v2705 = vsel %vm2702, %v2704, %v2700
        %v2706 = vrcp.pop %v2315
        %v2707 = vmul.f32 %v2315, %v2706
        %v2708 = vsub.f32 1.0, %v2707
        %v2709 = vmul.f32 %v2706, %v2708
        %v2710 = vadd.f32 %v2706, %v2709
        %vm2711 = vweird.f32 %v2315
        %vm2712 = vweird.f32 %v2706
        %vm2713 = vmor %vm2711, %vm2712
        %v2714 = vsel %vm2713, %v2706, %v2710
        %v2715 = vand.u32 2147483647, %v2315
        %vm2716 = vcmp.eq.f32.partialorder %v2715, 8.507059e+37
        %v2717 = vand.u32 %v2315, 2147483648
        %v2718 = vor.u32 1.1754944e-38, %v2717
        %v2719 = vsel %vm2716, %v2718, %v2714
        %v2720 = vrcp.pop %v2317
        %v2721 = vmul.f32 %v2317, %v2720
        %v2722 = vsub.f32 1.0, %v2721
        %v2723 = vmul.f32 %v2720, %v2722
        %v2724 = vadd.f32 %v2720, %v2723
        %vm2725 = vweird.f32 %v2317
        %vm2726 = vweird.f32 %v2720
        %vm2727 = vmor %vm2725, %vm2726
        %v2728 = vsel %vm2727, %v2720, %v2724
        %v2729 = vand.u32 2147483647, %v2317
        %vm2730 = vcmp.eq.f32.partialorder %v2729, 8.507059e+37
        %v2731 = vand.u32 %v2317, 2147483648
        %v2732 = vor.u32 1.1754944e-38, %v2731
        %v2733 = vsel %vm2730, %v2732, %v2728
        %v2734 = vrcp.pop %v2319
        %v2735 = vmul.f32 %v2319, %v2734
        %v2736 = vsub.f32 1.0, %v2735
        %v2737 = vmul.f32 %v2734, %v2736
        %v2738 = vadd.f32 %v2734, %v2737
        %vm2739 = vweird.f32 %v2319
        %vm2740 = vweird.f32 %v2734
        %vm2741 = vmor %vm2739, %vm2740
        %v2742 = vsel %vm2741, %v2734, %v2738
        %v2743 = vand.u32 2147483647, %v2319
        %vm2744 = vcmp.eq.f32.partialorder %v2743, 8.507059e+37
        %v2745 = vand.u32 %v2319, 2147483648
        %v2746 = vor.u32 1.1754944e-38, %v2745
        %v2747 = vsel %vm2744, %v2746, %v2742
        %v2748 = vrcp.pop %v2321
        %v2749 = vmul.f32 %v2321, %v2748
        %v2750 = vsub.f32 1.0, %v2749
        %v2751 = vmul.f32 %v2748, %v2750
        %v2752 = vadd.f32 %v2748, %v2751
        %vm2753 = vweird.f32 %v2321
        %vm2754 = vweird.f32 %v2748
        %vm2755 = vmor %vm2753, %vm2754
        %v2756 = vsel %vm2755, %v2748, %v2752
        %v2757 = vand.u32 2147483647, %v2321
        %vm2758 = vcmp.eq.f32.partialorder %v2757, 8.507059e+37
        %v2759 = vand.u32 %v2321, 2147483648
        %v2760 = vor.u32 1.1754944e-38, %v2759
        %v2761 = vsel %vm2758, %v2760, %v2756
        %v2762 = vrcp.pop %v2323
        %v2763 = vmul.f32 %v2323, %v2762
        %v2764 = vsub.f32 1.0, %v2763
        %v2765 = vmul.f32 %v2762, %v2764
        %v2766 = vadd.f32 %v2762, %v2765
        %vm2767 = vweird.f32 %v2323
        %vm2768 = vweird.f32 %v2762
        %vm2769 = vmor %vm2767, %vm2768
        %v2770 = vsel %vm2769, %v2762, %v2766
        %v2771 = vand.u32 2147483647, %v2323
        %vm2772 = vcmp.eq.f32.partialorder %v2771, 8.507059e+37
        %v2773 = vand.u32 %v2323, 2147483648
        %v2774 = vor.u32 1.1754944e-38, %v2773
        %v2775 = vsel %vm2772, %v2774, %v2770
        %v2776 = vrcp.pop %v2325
        %v2777 = vmul.f32 %v2325, %v2776
        %v2778 = vsub.f32 1.0, %v2777
        %v2779 = vmul.f32 %v2776, %v2778
        %v2780 = vadd.f32 %v2776, %v2779
        %vm2781 = vweird.f32 %v2325
        %vm2782 = vweird.f32 %v2776
        %vm2783 = vmor %vm2781, %vm2782
        %v2784 = vsel %vm2783, %v2776, %v2780
        %v2785 = vand.u32 2147483647, %v2325
        %vm2786 = vcmp.eq.f32.partialorder %v2785, 8.507059e+37
        %v2787 = vand.u32 %v2325, 2147483648
        %v2788 = vor.u32 1.1754944e-38, %v2787
        %v2789 = vsel %vm2786, %v2788, %v2784
        %v2790 = vrcp.pop %v2327
        %v2791 = vmul.f32 %v2327, %v2790
        %v2792 = vsub.f32 1.0, %v2791
        %v2793 = vmul.f32 %v2790, %v2792
        %v2794 = vadd.f32 %v2790, %v2793
        %vm2795 = vweird.f32 %v2327
        %vm2796 = vweird.f32 %v2790
        %vm2797 = vmor %vm2795, %vm2796
        %v2798 = vsel %vm2797, %v2790, %v2794
        %v2799 = vand.u32 2147483647, %v2327
        %vm2800 = vcmp.eq.f32.partialorder %v2799, 8.507059e+37
        %v2801 = vand.u32 %v2327, 2147483648
        %v2802 = vor.u32 1.1754944e-38, %v2801
        %v2803 = vsel %vm2800, %v2802, %v2798
        %v2804 = vrcp.pop %v2329
        %v2805 = vmul.f32 %v2329, %v2804
        %v2806 = vsub.f32 1.0, %v2805
        %v2807 = vmul.f32 %v2804, %v2806
        %v2808 = vadd.f32 %v2804, %v2807
        %vm2809 = vweird.f32 %v2329
        %vm2810 = vweird.f32 %v2804
        %vm2811 = vmor %vm2809, %vm2810
        %v2812 = vsel %vm2811, %v2804, %v2808
        %v2813 = vand.u32 2147483647, %v2329
        %vm2814 = vcmp.eq.f32.partialorder %v2813, 8.507059e+37
        %v2815 = vand.u32 %v2329, 2147483648
        %v2816 = vor.u32 1.1754944e-38, %v2815
        %v2817 = vsel %vm2814, %v2816, %v2812
        %v2818 = vrcp.pop %v2331
        %v2819 = vmul.f32 %v2331, %v2818
        %v2820 = vsub.f32 1.0, %v2819
        %v2821 = vmul.f32 %v2818, %v2820
        %v2822 = vadd.f32 %v2818, %v2821
        %vm2823 = vweird.f32 %v2331
        %vm2824 = vweird.f32 %v2818
        %vm2825 = vmor %vm2823, %vm2824
        %v2826 = vsel %vm2825, %v2818, %v2822
        %v2827 = vand.u32 2147483647, %v2331
        %vm2828 = vcmp.eq.f32.partialorder %v2827, 8.507059e+37
        %v2829 = vand.u32 %v2331, 2147483648
        %v2830 = vor.u32 1.1754944e-38, %v2829
        %v2831 = vsel %vm2828, %v2830, %v2826
        %v2832 = vrcp.pop %v2333
        %v2833 = vmul.f32 %v2333, %v2832
        %v2834 = vsub.f32 1.0, %v2833
        %v2835 = vmul.f32 %v2832, %v2834
        %v2836 = vadd.f32 %v2832, %v2835
        %vm2837 = vweird.f32 %v2333
        %vm2838 = vweird.f32 %v2832
        %vm2839 = vmor %vm2837, %vm2838
        %v2840 = vsel %vm2839, %v2832, %v2836
        %v2841 = vand.u32 2147483647, %v2333
        %vm2842 = vcmp.eq.f32.partialorder %v2841, 8.507059e+37
        %v2843 = vand.u32 %v2333, 2147483648
        %v2844 = vor.u32 1.1754944e-38, %v2843
        %v2845 = vsel %vm2842, %v2844, %v2840
        %v2846 = vrcp.pop %v2335
        %v2847 = vmul.f32 %v2335, %v2846
        %v2848 = vsub.f32 1.0, %v2847
        %v2849 = vmul.f32 %v2846, %v2848
        %v2850 = vadd.f32 %v2846, %v2849
        %vm2851 = vweird.f32 %v2335
        %vm2852 = vweird.f32 %v2846
        %vm2853 = vmor %vm2851, %vm2852
        %v2854 = vsel %vm2853, %v2846, %v2850
        %v2855 = vand.u32 2147483647, %v2335
        %vm2856 = vcmp.eq.f32.partialorder %v2855, 8.507059e+37
        %v2857 = vand.u32 %v2335, 2147483648
        %v2858 = vor.u32 1.1754944e-38, %v2857
        %v2859 = vsel %vm2856, %v2858, %v2854
        %v2860 = vrcp.pop %v2337
        %v2861 = vmul.f32 %v2337, %v2860
        %v2862 = vsub.f32 1.0, %v2861
        %v2863 = vmul.f32 %v2860, %v2862
        %v2864 = vadd.f32 %v2860, %v2863
        %vm2865 = vweird.f32 %v2337
        %vm2866 = vweird.f32 %v2860
        %vm2867 = vmor %vm2865, %vm2866
        %v2868 = vsel %vm2867, %v2860, %v2864
        %v2869 = vand.u32 2147483647, %v2337
        %vm2870 = vcmp.eq.f32.partialorder %v2869, 8.507059e+37
        %v2871 = vand.u32 %v2337, 2147483648
        %v2872 = vor.u32 1.1754944e-38, %v2871
        %v2873 = vsel %vm2870, %v2872, %v2868
        %v2874 = vrcp.pop %v2339
        %v2875 = vmul.f32 %v2339, %v2874
        %v2876 = vsub.f32 1.0, %v2875
        %v2877 = vmul.f32 %v2874, %v2876
        %v2878 = vadd.f32 %v2874, %v2877
        %vm2879 = vweird.f32 %v2339
        %vm2880 = vweird.f32 %v2874
        %vm2881 = vmor %vm2879, %vm2880
        %v2882 = vsel %vm2881, %v2874, %v2878
        %v2883 = vand.u32 2147483647, %v2339
        %vm2884 = vcmp.eq.f32.partialorder %v2883, 8.507059e+37
        %v2885 = vand.u32 %v2339, 2147483648
        %v2886 = vor.u32 1.1754944e-38, %v2885
        %v2887 = vsel %vm2884, %v2886, %v2882
        %v2888 = vrcp.pop %v2341
        %v2889 = vmul.f32 %v2341, %v2888
        %v2890 = vsub.f32 1.0, %v2889
        %v2891 = vmul.f32 %v2888, %v2890
        %v2892 = vadd.f32 %v2888, %v2891
        %vm2893 = vweird.f32 %v2341
        %vm2894 = vweird.f32 %v2888
        %vm2895 = vmor %vm2893, %vm2894
        %v2896 = vsel %vm2895, %v2888, %v2892
        %v2897 = vand.u32 2147483647, %v2341
        %vm2898 = vcmp.eq.f32.partialorder %v2897, 8.507059e+37
        %v2899 = vand.u32 %v2341, 2147483648
        %v2900 = vor.u32 1.1754944e-38, %v2899
        %v2901 = vsel %vm2898, %v2900, %v2896
        %v2902 = vrcp.pop %v2343
        %v2903 = vmul.f32 %v2343, %v2902
        %v2904 = vsub.f32 1.0, %v2903
        %v2905 = vmul.f32 %v2902, %v2904
        %v2906 = vadd.f32 %v2902, %v2905
        %vm2907 = vweird.f32 %v2343
        %vm2908 = vweird.f32 %v2902
        %vm2909 = vmor %vm2907, %vm2908
        %v2910 = vsel %vm2909, %v2902, %v2906
        %v2911 = vand.u32 2147483647, %v2343
        %vm2912 = vcmp.eq.f32.partialorder %v2911, 8.507059e+37
        %v2913 = vand.u32 %v2343, 2147483648
        %v2914 = vor.u32 1.1754944e-38, %v2913
        %v2915 = vsel %vm2912, %v2914, %v2910
        %v2916 = vrcp.pop %v2345
        %v2917 = vmul.f32 %v2345, %v2916
        %v2918 = vsub.f32 1.0, %v2917
        %v2919 = vmul.f32 %v2916, %v2918
        %v2920 = vadd.f32 %v2916, %v2919
        %vm2921 = vweird.f32 %v2345
        %vm2922 = vweird.f32 %v2916
        %vm2923 = vmor %vm2921, %vm2922
        %v2924 = vsel %vm2923, %v2916, %v2920
        %v2925 = vand.u32 2147483647, %v2345
        %vm2926 = vcmp.eq.f32.partialorder %v2925, 8.507059e+37
        %v2927 = vand.u32 %v2345, 2147483648
        %v2928 = vor.u32 1.1754944e-38, %v2927
        %v2929 = vsel %vm2926, %v2928, %v2924
        %v2930 = vrcp.pop %v2347
        %v2931 = vmul.f32 %v2347, %v2930
        %v2932 = vsub.f32 1.0, %v2931
        %v2933 = vmul.f32 %v2930, %v2932
        %v2934 = vadd.f32 %v2930, %v2933
        %vm2935 = vweird.f32 %v2347
        %vm2936 = vweird.f32 %v2930
        %vm2937 = vmor %vm2935, %vm2936
        %v2938 = vsel %vm2937, %v2930, %v2934
        %v2939 = vand.u32 2147483647, %v2347
        %vm2940 = vcmp.eq.f32.partialorder %v2939, 8.507059e+37
        %v2941 = vand.u32 %v2347, 2147483648
        %v2942 = vor.u32 1.1754944e-38, %v2941
        %v2943 = vsel %vm2940, %v2942, %v2938
        %v2944 = vrcp.pop %v2349
        %v2945 = vmul.f32 %v2349, %v2944
        %v2946 = vsub.f32 1.0, %v2945
        %v2947 = vmul.f32 %v2944, %v2946
        %v2948 = vadd.f32 %v2944, %v2947
        %vm2949 = vweird.f32 %v2349
        %vm2950 = vweird.f32 %v2944
        %vm2951 = vmor %vm2949, %vm2950
        %v2952 = vsel %vm2951, %v2944, %v2948
        %v2953 = vand.u32 2147483647, %v2349
        %vm2954 = vcmp.eq.f32.partialorder %v2953, 8.507059e+37
        %v2955 = vand.u32 %v2349, 2147483648
        %v2956 = vor.u32 1.1754944e-38, %v2955
        %v2957 = vsel %vm2954, %v2956, %v2952
        %v2958 = vrcp.pop %v2351
        %v2959 = vmul.f32 %v2351, %v2958
        %v2960 = vsub.f32 1.0, %v2959
        %v2961 = vmul.f32 %v2958, %v2960
        %v2962 = vadd.f32 %v2958, %v2961
        %vm2963 = vweird.f32 %v2351
        %vm2964 = vweird.f32 %v2958
        %vm2965 = vmor %vm2963, %vm2964
        %v2966 = vsel %vm2965, %v2958, %v2962
        %v2967 = vand.u32 2147483647, %v2351
        %vm2968 = vcmp.eq.f32.partialorder %v2967, 8.507059e+37
        %v2969 = vand.u32 %v2351, 2147483648
        %v2970 = vor.u32 1.1754944e-38, %v2969
        %v2971 = vsel %vm2968, %v2970, %v2966
        %v2972 = vrcp.pop %v2353
        %v2973 = vmul.f32 %v2353, %v2972
        %v2974 = vsub.f32 1.0, %v2973
        %v2975 = vmul.f32 %v2972, %v2974
        %v2976 = vadd.f32 %v2972, %v2975
        %vm2977 = vweird.f32 %v2353
        %vm2978 = vweird.f32 %v2972
        %vm2979 = vmor %vm2977, %vm2978
        %v2980 = vsel %vm2979, %v2972, %v2976
        %v2981 = vand.u32 2147483647, %v2353
        %vm2982 = vcmp.eq.f32.partialorder %v2981, 8.507059e+37
        %v2983 = vand.u32 %v2353, 2147483648
        %v2984 = vor.u32 1.1754944e-38, %v2983
        %v2985 = vsel %vm2982, %v2984, %v2980
        %v2986 = vrcp.pop %v2355
        %v2987 = vmul.f32 %v2355, %v2986
        %v2988 = vsub.f32 1.0, %v2987
        %v2989 = vmul.f32 %v2986, %v2988
        %v2990 = vadd.f32 %v2986, %v2989
        %vm2991 = vweird.f32 %v2355
        %vm2992 = vweird.f32 %v2986
        %vm2993 = vmor %vm2991, %vm2992
        %v2994 = vsel %vm2993, %v2986, %v2990
        %v2995 = vand.u32 2147483647, %v2355
        %vm2996 = vcmp.eq.f32.partialorder %v2995, 8.507059e+37
        %v2997 = vand.u32 %v2355, 2147483648
        %v2998 = vor.u32 1.1754944e-38, %v2997
        %v2999 = vsel %vm2996, %v2998, %v2994
        %v3000 = vrcp.pop %v2357
        %v3001 = vmul.f32 %v2357, %v3000
        %v3002 = vsub.f32 1.0, %v3001
        %v3003 = vmul.f32 %v3000, %v3002
        %v3004 = vadd.f32 %v3000, %v3003
        %vm3005 = vweird.f32 %v2357
        %vm3006 = vweird.f32 %v3000
        %vm3007 = vmor %vm3005, %vm3006
        %v3008 = vsel %vm3007, %v3000, %v3004
        %v3009 = vand.u32 2147483647, %v2357
        %vm3010 = vcmp.eq.f32.partialorder %v3009, 8.507059e+37
        %v3011 = vand.u32 %v2357, 2147483648
        %v3012 = vor.u32 1.1754944e-38, %v3011
        %v3013 = vsel %vm3010, %v3012, %v3008
        %v3014 = vrcp.pop %v2359
        %v3015 = vmul.f32 %v2359, %v3014
        %v3016 = vsub.f32 1.0, %v3015
        %v3017 = vmul.f32 %v3014, %v3016
        %v3018 = vadd.f32 %v3014, %v3017
        %vm3019 = vweird.f32 %v2359
        %vm3020 = vweird.f32 %v3014
        %vm3021 = vmor %vm3019, %vm3020
        %v3022 = vsel %vm3021, %v3014, %v3018
        %v3023 = vand.u32 2147483647, %v2359
        %vm3024 = vcmp.eq.f32.partialorder %v3023, 8.507059e+37
        %v3025 = vand.u32 %v2359, 2147483648
        %v3026 = vor.u32 1.1754944e-38, %v3025
        %v3027 = vsel %vm3024, %v3026, %v3022
        %v3028 = vrcp.pop %v2361
        %v3029 = vmul.f32 %v2361, %v3028
        %v3030 = vsub.f32 1.0, %v3029
        %v3031 = vmul.f32 %v3028, %v3030
        %v3032 = vadd.f32 %v3028, %v3031
        %vm3033 = vweird.f32 %v2361
        %vm3034 = vweird.f32 %v3028
        %vm3035 = vmor %vm3033, %vm3034
        %v3036 = vsel %vm3035, %v3028, %v3032
        %v3037 = vand.u32 2147483647, %v2361
        %vm3038 = vcmp.eq.f32.partialorder %v3037, 8.507059e+37
        %v3039 = vand.u32 %v2361, 2147483648
        %v3040 = vor.u32 1.1754944e-38, %v3039
        %v3041 = vsel %vm3038, %v3040, %v3036
        %v3042 = vrcp.pop %v2363
        %v3043 = vmul.f32 %v2363, %v3042
        %v3044 = vsub.f32 1.0, %v3043
        %v3045 = vmul.f32 %v3042, %v3044
        %v3046 = vadd.f32 %v3042, %v3045
        %vm3047 = vweird.f32 %v2363
        %vm3048 = vweird.f32 %v3042
        %vm3049 = vmor %vm3047, %vm3048
        %v3050 = vsel %vm3049, %v3042, %v3046
        %v3051 = vand.u32 2147483647, %v2363
        %vm3052 = vcmp.eq.f32.partialorder %v3051, 8.507059e+37
        %v3053 = vand.u32 %v2363, 2147483648
        %v3054 = vor.u32 1.1754944e-38, %v3053
        %v3055 = vsel %vm3052, %v3054, %v3050
        %v3056 = vrcp.pop %v2365
        %v3057 = vmul.f32 %v2365, %v3056
        %v3058 = vsub.f32 1.0, %v3057
        %v3059 = vmul.f32 %v3056, %v3058
        %v3060 = vadd.f32 %v3056, %v3059
        %vm3061 = vweird.f32 %v2365
        %vm3062 = vweird.f32 %v3056
        %vm3063 = vmor %vm3061, %vm3062
        %v3064 = vsel %vm3063, %v3056, %v3060
        %v3065 = vand.u32 2147483647, %v2365
        %vm3066 = vcmp.eq.f32.partialorder %v3065, 8.507059e+37
        %v3067 = vand.u32 %v2365, 2147483648
        %v3068 = vor.u32 1.1754944e-38, %v3067
        %v3069 = vsel %vm3066, %v3068, %v3064
        %v3070 = vrcp.pop %v2367
        %v3071 = vmul.f32 %v2367, %v3070
        %v3072 = vsub.f32 1.0, %v3071
        %v3073 = vmul.f32 %v3070, %v3072
        %v3074 = vadd.f32 %v3070, %v3073
        %vm3075 = vweird.f32 %v2367
        %vm3076 = vweird.f32 %v3070
        %vm3077 = vmor %vm3075, %vm3076
        %v3078 = vsel %vm3077, %v3070, %v3074
        %v3079 = vand.u32 2147483647, %v2367
        %vm3080 = vcmp.eq.f32.partialorder %v3079, 8.507059e+37
        %v3081 = vand.u32 %v2367, 2147483648
        %v3082 = vor.u32 1.1754944e-38, %v3081
        %v3083 = vsel %vm3080, %v3082, %v3078
        %v3084 = vrcp.pop %v2369
        %v3085 = vmul.f32 %v2369, %v3084
        %v3086 = vsub.f32 1.0, %v3085
        %v3087 = vmul.f32 %v3084, %v3086
        %v3088 = vadd.f32 %v3084, %v3087
        %vm3089 = vweird.f32 %v2369
        %vm3090 = vweird.f32 %v3084
        %vm3091 = vmor %vm3089, %vm3090
        %v3092 = vsel %vm3091, %v3084, %v3088
        %v3093 = vand.u32 2147483647, %v2369
        %vm3094 = vcmp.eq.f32.partialorder %v3093, 8.507059e+37
        %v3095 = vand.u32 %v2369, 2147483648
        %v3096 = vor.u32 1.1754944e-38, %v3095
        %v3097 = vsel %vm3094, %v3096, %v3092
        %v3098 = vrcp.pop %v2371
        %v3099 = vmul.f32 %v2371, %v3098
        %v3100 = vsub.f32 1.0, %v3099
        %v3101 = vmul.f32 %v3098, %v3100
        %v3102 = vadd.f32 %v3098, %v3101
        %vm3103 = vweird.f32 %v2371
        %vm3104 = vweird.f32 %v3098
        %vm3105 = vmor %vm3103, %vm3104
        %v3106 = vsel %vm3105, %v3098, %v3102
        %v3107 = vand.u32 2147483647, %v2371
        %vm3108 = vcmp.eq.f32.partialorder %v3107, 8.507059e+37
        %v3109 = vand.u32 %v2371, 2147483648
        %v3110 = vor.u32 1.1754944e-38, %v3109
        %v3111 = vsel %vm3108, %v3110, %v3106
        %v3112 = vrcp.pop %v2373
        %v3113 = vmul.f32 %v2373, %v3112
        %v3114 = vsub.f32 1.0, %v3113
        %v3115 = vmul.f32 %v3112, %v3114
        %v3116 = vadd.f32 %v3112, %v3115
        %vm3117 = vweird.f32 %v2373
        %vm3118 = vweird.f32 %v3112
        %vm3119 = vmor %vm3117, %vm3118
        %v3120 = vsel %vm3119, %v3112, %v3116
        %v3121 = vand.u32 2147483647, %v2373
        %vm3122 = vcmp.eq.f32.partialorder %v3121, 8.507059e+37
        %v3123 = vand.u32 %v2373, 2147483648
        %v3124 = vor.u32 1.1754944e-38, %v3123
        %v3125 = vsel %vm3122, %v3124, %v3120
        %v3126 = vrcp.pop %v2375
        %v3127 = vmul.f32 %v2375, %v3126
        %v3128 = vsub.f32 1.0, %v3127
        %v3129 = vmul.f32 %v3126, %v3128
        %v3130 = vadd.f32 %v3126, %v3129
        %vm3131 = vweird.f32 %v2375
        %vm3132 = vweird.f32 %v3126
        %vm3133 = vmor %vm3131, %vm3132
        %v3134 = vsel %vm3133, %v3126, %v3130
        %v3135 = vand.u32 2147483647, %v2375
        %vm3136 = vcmp.eq.f32.partialorder %v3135, 8.507059e+37
        %v3137 = vand.u32 %v2375, 2147483648
        %v3138 = vor.u32 1.1754944e-38, %v3137
        %v3139 = vsel %vm3136, %v3138, %v3134
        %v3140 = vrcp.pop %v2377
        %v3141 = vmul.f32 %v2377, %v3140
        %v3142 = vsub.f32 1.0, %v3141
        %v3143 = vmul.f32 %v3140, %v3142
        %v3144 = vadd.f32 %v3140, %v3143
        %vm3145 = vweird.f32 %v2377
        %vm3146 = vweird.f32 %v3140
        %vm3147 = vmor %vm3145, %vm3146
        %v3148 = vsel %vm3147, %v3140, %v3144
        %v3149 = vand.u32 2147483647, %v2377
        %vm3150 = vcmp.eq.f32.partialorder %v3149, 8.507059e+37
        %v3151 = vand.u32 %v2377, 2147483648
        %v3152 = vor.u32 1.1754944e-38, %v3151
        %v3153 = vsel %vm3150, %v3152, %v3148
        %v3154 = vrcp.pop %v2379
        %v3155 = vmul.f32 %v2379, %v3154
        %v3156 = vsub.f32 1.0, %v3155
        %v3157 = vmul.f32 %v3154, %v3156
        %v3158 = vadd.f32 %v3154, %v3157
        %vm3159 = vweird.f32 %v2379
        %vm3160 = vweird.f32 %v3154
        %vm3161 = vmor %vm3159, %vm3160
        %v3162 = vsel %vm3161, %v3154, %v3158
        %v3163 = vand.u32 2147483647, %v2379
        %vm3164 = vcmp.eq.f32.partialorder %v3163, 8.507059e+37
        %v3165 = vand.u32 %v2379, 2147483648
        %v3166 = vor.u32 1.1754944e-38, %v3165
        %v3167 = vsel %vm3164, %v3166, %v3162
        %v3168 = vrcp.pop %v2381
        %v3169 = vmul.f32 %v2381, %v3168
        %v3170 = vsub.f32 1.0, %v3169
        %v3171 = vmul.f32 %v3168, %v3170
        %v3172 = vadd.f32 %v3168, %v3171
        %vm3173 = vweird.f32 %v2381
        %vm3174 = vweird.f32 %v3168
        %vm3175 = vmor %vm3173, %vm3174
        %v3176 = vsel %vm3175, %v3168, %v3172
        %v3177 = vand.u32 2147483647, %v2381
        %vm3178 = vcmp.eq.f32.partialorder %v3177, 8.507059e+37
        %v3179 = vand.u32 %v2381, 2147483648
        %v3180 = vor.u32 1.1754944e-38, %v3179
        %v3181 = vsel %vm3178, %v3180, %v3176
        %v3182 = vrcp.pop %v2383
        %v3183 = vmul.f32 %v2383, %v3182
        %v3184 = vsub.f32 1.0, %v3183
        %v3185 = vmul.f32 %v3182, %v3184
        %v3186 = vadd.f32 %v3182, %v3185
        %vm3187 = vweird.f32 %v2383
        %vm3188 = vweird.f32 %v3182
        %vm3189 = vmor %vm3187, %vm3188
        %v3190 = vsel %vm3189, %v3182, %v3186
        %v3191 = vand.u32 2147483647, %v2383
        %vm3192 = vcmp.eq.f32.partialorder %v3191, 8.507059e+37
        %v3193 = vand.u32 %v2383, 2147483648
        %v3194 = vor.u32 1.1754944e-38, %v3193
        %v3195 = vsel %vm3192, %v3194, %v3190
        %v3196 = vrcp.pop %v2385
        %v3197 = vmul.f32 %v2385, %v3196
        %v3198 = vsub.f32 1.0, %v3197
        %v3199 = vmul.f32 %v3196, %v3198
        %v3200 = vadd.f32 %v3196, %v3199
        %vm3201 = vweird.f32 %v2385
        %vm3202 = vweird.f32 %v3196
        %vm3203 = vmor %vm3201, %vm3202
        %v3204 = vsel %vm3203, %v3196, %v3200
        %v3205 = vand.u32 2147483647, %v2385
        %vm3206 = vcmp.eq.f32.partialorder %v3205, 8.507059e+37
        %v3207 = vand.u32 %v2385, 2147483648
        %v3208 = vor.u32 1.1754944e-38, %v3207
        %v3209 = vsel %vm3206, %v3208, %v3204
        %v3210 = vrcp.pop %v2387
        %v3211 = vmul.f32 %v2387, %v3210
        %v3212 = vsub.f32 1.0, %v3211
        %v3213 = vmul.f32 %v3210, %v3212
        %v3214 = vadd.f32 %v3210, %v3213
        %vm3215 = vweird.f32 %v2387
        %vm3216 = vweird.f32 %v3210
        %vm3217 = vmor %vm3215, %vm3216
        %v3218 = vsel %vm3217, %v3210, %v3214
        %v3219 = vand.u32 2147483647, %v2387
        %vm3220 = vcmp.eq.f32.partialorder %v3219, 8.507059e+37
        %v3221 = vand.u32 %v2387, 2147483648
        %v3222 = vor.u32 1.1754944e-38, %v3221
        %v3223 = vsel %vm3220, %v3222, %v3218
        %v3224 = vrcp.pop %v2389
        %v3225 = vmul.f32 %v2389, %v3224
        %v3226 = vsub.f32 1.0, %v3225
        %v3227 = vmul.f32 %v3224, %v3226
        %v3228 = vadd.f32 %v3224, %v3227
        %vm3229 = vweird.f32 %v2389
        %vm3230 = vweird.f32 %v3224
        %vm3231 = vmor %vm3229, %vm3230
        %v3232 = vsel %vm3231, %v3224, %v3228
        %v3233 = vand.u32 2147483647, %v2389
        %vm3234 = vcmp.eq.f32.partialorder %v3233, 8.507059e+37
        %v3235 = vand.u32 %v2389, 2147483648
        %v3236 = vor.u32 1.1754944e-38, %v3235
        %v3237 = vsel %vm3234, %v3236, %v3232
        %v3238 = vrcp.pop %v2391
        %v3239 = vmul.f32 %v2391, %v3238
        %v3240 = vsub.f32 1.0, %v3239
        %v3241 = vmul.f32 %v3238, %v3240
        %v3242 = vadd.f32 %v3238, %v3241
        %vm3243 = vweird.f32 %v2391
        %vm3244 = vweird.f32 %v3238
        %vm3245 = vmor %vm3243, %vm3244
        %v3246 = vsel %vm3245, %v3238, %v3242
        %v3247 = vand.u32 2147483647, %v2391
        %vm3248 = vcmp.eq.f32.partialorder %v3247, 8.507059e+37
        %v3249 = vand.u32 %v2391, 2147483648
        %v3250 = vor.u32 1.1754944e-38, %v3249
        %v3251 = vsel %vm3248, %v3250, %v3246
        %v3252 = vrcp.pop %v2393
        %v3253 = vmul.f32 %v2393, %v3252
        %v3254 = vsub.f32 1.0, %v3253
        %v3255 = vmul.f32 %v3252, %v3254
        %v3256 = vadd.f32 %v3252, %v3255
        %vm3257 = vweird.f32 %v2393
        %vm3258 = vweird.f32 %v3252
        %vm3259 = vmor %vm3257, %vm3258
        %v3260 = vsel %vm3259, %v3252, %v3256
        %v3261 = vand.u32 2147483647, %v2393
        %vm3262 = vcmp.eq.f32.partialorder %v3261, 8.507059e+37
        %v3263 = vand.u32 %v2393, 2147483648
        %v3264 = vor.u32 1.1754944e-38, %v3263
        %v3265 = vsel %vm3262, %v3264, %v3260
        %v3266 = vrcp.pop %v2395
        %v3267 = vmul.f32 %v2395, %v3266
        %v3268 = vsub.f32 1.0, %v3267
        %v3269 = vmul.f32 %v3266, %v3268
        %v3270 = vadd.f32 %v3266, %v3269
        %vm3271 = vweird.f32 %v2395
        %vm3272 = vweird.f32 %v3266
        %vm3273 = vmor %vm3271, %vm3272
        %v3274 = vsel %vm3273, %v3266, %v3270
        %v3275 = vand.u32 2147483647, %v2395
        %vm3276 = vcmp.eq.f32.partialorder %v3275, 8.507059e+37
        %v3277 = vand.u32 %v2395, 2147483648
        %v3278 = vor.u32 1.1754944e-38, %v3277
        %v3279 = vsel %vm3276, %v3278, %v3274
        %v3280 = vrcp.pop %v2397
        %v3281 = vmul.f32 %v2397, %v3280
        %v3282 = vsub.f32 1.0, %v3281
        %v3283 = vmul.f32 %v3280, %v3282
        %v3284 = vadd.f32 %v3280, %v3283
        %vm3285 = vweird.f32 %v2397
        %vm3286 = vweird.f32 %v3280
        %vm3287 = vmor %vm3285, %vm3286
        %v3288 = vsel %vm3287, %v3280, %v3284
        %v3289 = vand.u32 2147483647, %v2397
        %vm3290 = vcmp.eq.f32.partialorder %v3289, 8.507059e+37
        %v3291 = vand.u32 %v2397, 2147483648
        %v3292 = vor.u32 1.1754944e-38, %v3291
        %v3293 = vsel %vm3290, %v3292, %v3288
        %v3294 = vmul.f32 %v2143, %v2411
        %v3295 = vmul.f32 %v2145, %v2425
        %v3296 = vmul.f32 %v2147, %v2439
        %v3297 = vmul.f32 %v2149, %v2453
        %v3298 = vmul.f32 %v2151, %v2467
        %v3299 = vmul.f32 %v2153, %v2481
        %v3300 = vmul.f32 %v2155, %v2495
        %v3301 = vmul.f32 %v2157, %v2509
        %v3302 = vmul.f32 %v2159, %v2523
        %v3303 = vmul.f32 %v2161, %v2537
        %v3304 = vmul.f32 %v2163, %v2551
        %v3305 = vmul.f32 %v2165, %v2565
        %v3306 = vmul.f32 %v2167, %v2579
        %v3307 = vmul.f32 %v2169, %v2593
        %v3308 = vmul.f32 %v2171, %v2607
        %v3309 = vmul.f32 %v2173, %v2621
        %v3310 = vmul.f32 %v2175, %v2635
        %v3311 = vmul.f32 %v2177, %v2649
        %v3312 = vmul.f32 %v2179, %v2663
        %v3313 = vmul.f32 %v2181, %v2677
        %v3314 = vmul.f32 %v2183, %v2691
        %v3315 = vmul.f32 %v2185, %v2705
        %v3316 = vmul.f32 %v2187, %v2719
        %v3317 = vmul.f32 %v2189, %v2733
        %v3318 = vmul.f32 %v2191, %v2747
        %v3319 = vmul.f32 %v2193, %v2761
        %v3320 = vmul.f32 %v2195, %v2775
        %v3321 = vmul.f32 %v2197, %v2789
        %v3322 = vmul.f32 %v2199, %v2803
        %v3323 = vmul.f32 %v2201, %v2817
        %v3324 = vmul.f32 %v2203, %v2831
        %v3325 = vmul.f32 %v2205, %v2845
        %v3326 = vmul.f32 %v2207, %v2859
        %v3327 = vmul.f32 %v2209, %v2873
        %v3328 = vmul.f32 %v2211, %v2887
        %v3329 = vmul.f32 %v2213, %v2901
        %v3330 = vmul.f32 %v2215, %v2915
        %v3331 = vmul.f32 %v2217, %v2929
        %v3332 = vmul.f32 %v2219, %v2943
        %v3333 = vmul.f32 %v2221, %v2957
        %v3334 = vmul.f32 %v2223, %v2971
        %v3335 = vmul.f32 %v2225, %v2985
        %v3336 = vmul.f32 %v2227, %v2999
        %v3337 = vmul.f32 %v2229, %v3013
        %v3338 = vmul.f32 %v2231, %v3027
        %v3339 = vmul.f32 %v2233, %v3041
        %v3340 = vmul.f32 %v2235, %v3055
        %v3341 = vmul.f32 %v2237, %v3069
        %v3342 = vmul.f32 %v2239, %v3083
        %v3343 = vmul.f32 %v2241, %v3097
        %v3344 = vmul.f32 %v2243, %v3111
        %v3345 = vmul.f32 %v2245, %v3125
        %v3346 = vmul.f32 %v2247, %v3139
        %v3347 = vmul.f32 %v2249, %v3153
        %v3348 = vmul.f32 %v2251, %v3167
        %v3349 = vmul.f32 %v2253, %v3181
        %v3350 = vmul.f32 %v2255, %v3195
        %v3351 = vmul.f32 %v2257, %v3209
        %v3352 = vmul.f32 %v2259, %v3223
        %v3353 = vmul.f32 %v2261, %v3237
        %v3354 = vmul.f32 %v2263, %v3251
        %v3355 = vmul.f32 %v2265, %v3265
        %v3356 = vmul.f32 %v2267, %v3279
        %v3357 = vmul.f32 %v2269, %v3293
        %3358 = vmatpush.msra.mxu0 %v1031
        %3359 = vmatpush.msra.mxu0 %v1028
        %3360 = vmatpush.msra.mxu0 %v1025
        %3361 = vmatpush.msra.mxu0 %v1022
        %3362 = vmatpush.msra.mxu0 %v1019
        %3363 = vmatpush.msra.mxu0 %v1016
        %3364 = vmatpush.msra.mxu0 %v1013
        %3365 = vmatpush.msra.mxu0 %v1010
        %3366 = vmatpush.msra.mxu0 %v1007
        %3367 = vmatpush.msra.mxu0 %v1004
        %3368 = vmatpush.msra.mxu0 %v1001
        %3369 = vmatpush.msra.mxu0 %v998
        %3370 = vmatpush.msra.mxu0 %v995
        %3371 = vmatpush.msra.mxu0 %v992
        %3372 = vmatpush.msra.mxu0 %v989
        %3373 = vmatpush.msra.mxu0 %v986
        %3374 = vmatmul.f32.gmra.mxu0 %v3294
        %v3375 = vpop.f32.mrf.mxu0
        %v3376 = vadd.f32 0.0, %v3375
        %3377 = vmatmul.f32.gmra.mxu0 %v3295
        %v3378 = vpop.f32.mrf.mxu0
        %v3379 = vadd.f32 0.0, %v3378
        %3380 = vmatmul.f32.gmra.mxu0 %v3296
        %v3381 = vpop.f32.mrf.mxu0
        %v3382 = vadd.f32 0.0, %v3381
        %3383 = vmatmul.f32.gmra.mxu0 %v3297
        %v3384 = vpop.f32.mrf.mxu0
        %v3385 = vadd.f32 0.0, %v3384
        %3386 = vmatmul.f32.gmra.mxu0 %v3298
        %v3387 = vpop.f32.mrf.mxu0
        %v3388 = vadd.f32 0.0, %v3387
        %3389 = vmatmul.f32.gmra.mxu0 %v3299
        %v3390 = vpop.f32.mrf.mxu0
        %v3391 = vadd.f32 0.0, %v3390
        %3392 = vmatmul.f32.gmra.mxu0 %v3300
        %v3393 = vpop.f32.mrf.mxu0
        %v3394 = vadd.f32 0.0, %v3393
        %3395 = vmatmul.f32.gmra.mxu0 %v3301
        %v3396 = vpop.f32.mrf.mxu0
        %v3397 = vadd.f32 0.0, %v3396
        %3398 = vmatmul.f32.gmra.mxu0 %v3302
        %v3399 = vpop.f32.mrf.mxu0
        %v3400 = vadd.f32 0.0, %v3399
        %3401 = vmatmul.f32.gmra.mxu0 %v3303
        %v3402 = vpop.f32.mrf.mxu0
        %v3403 = vadd.f32 0.0, %v3402
        %3404 = vmatmul.f32.gmra.mxu0 %v3304
        %v3405 = vpop.f32.mrf.mxu0
        %v3406 = vadd.f32 0.0, %v3405
        %3407 = vmatmul.f32.gmra.mxu0 %v3305
        %v3408 = vpop.f32.mrf.mxu0
        %v3409 = vadd.f32 0.0, %v3408
        %3410 = vmatmul.f32.gmra.mxu0 %v3306
        %v3411 = vpop.f32.mrf.mxu0
        %v3412 = vadd.f32 0.0, %v3411
        %3413 = vmatmul.f32.gmra.mxu0 %v3307
        %v3414 = vpop.f32.mrf.mxu0
        %v3415 = vadd.f32 0.0, %v3414
        %3416 = vmatmul.f32.gmra.mxu0 %v3308
        %v3417 = vpop.f32.mrf.mxu0
        %v3418 = vadd.f32 0.0, %v3417
        %3419 = vmatmul.f32.gmra.mxu0 %v3309
        %v3420 = vpop.f32.mrf.mxu0
        %v3421 = vadd.f32 0.0, %v3420
        %3422 = vdwg.mxu0
        %3423 = vmatpush.msra.mxu0 %v1320
        %3424 = vmatpush.msra.mxu0 %v1318
        %3425 = vmatpush.msra.mxu0 %v1316
        %3426 = vmatpush.msra.mxu0 %v1314
        %3427 = vmatpush.msra.mxu0 %v1312
        %3428 = vmatpush.msra.mxu0 %v1310
        %3429 = vmatpush.msra.mxu0 %v1308
        %3430 = vmatpush.msra.mxu0 %v1306
        %3431 = vmatpush.msra.mxu0 %v1304
        %3432 = vmatpush.msra.mxu0 %v1302
        %3433 = vmatpush.msra.mxu0 %v1300
        %3434 = vmatpush.msra.mxu0 %v1298
        %3435 = vmatpush.msra.mxu0 %v1296
        %3436 = vmatpush.msra.mxu0 %v1294
        %3437 = vmatpush.msra.mxu0 %v1292
        %3438 = vmatpush.msra.mxu0 %v1290
        %3439 = vmatmul.f32.gmra.mxu0 %v3310
        %v3440 = vpop.f32.mrf.mxu0
        %v3441 = vadd.f32 0.0, %v3440
        %3442 = vmatmul.f32.gmra.mxu0 %v3311
        %v3443 = vpop.f32.mrf.mxu0
        %v3444 = vadd.f32 0.0, %v3443
        %3445 = vmatmul.f32.gmra.mxu0 %v3312
        %v3446 = vpop.f32.mrf.mxu0
        %v3447 = vadd.f32 0.0, %v3446
        %3448 = vmatmul.f32.gmra.mxu0 %v3313
        %v3449 = vpop.f32.mrf.mxu0
        %v3450 = vadd.f32 0.0, %v3449
        %3451 = vmatmul.f32.gmra.mxu0 %v3314
        %v3452 = vpop.f32.mrf.mxu0
        %v3453 = vadd.f32 0.0, %v3452
        %3454 = vmatmul.f32.gmra.mxu0 %v3315
        %v3455 = vpop.f32.mrf.mxu0
        %v3456 = vadd.f32 0.0, %v3455
        %3457 = vmatmul.f32.gmra.mxu0 %v3316
        %v3458 = vpop.f32.mrf.mxu0
        %v3459 = vadd.f32 0.0, %v3458
        %3460 = vmatmul.f32.gmra.mxu0 %v3317
        %v3461 = vpop.f32.mrf.mxu0
        %v3462 = vadd.f32 0.0, %v3461
        %3463 = vmatmul.f32.gmra.mxu0 %v3318
        %v3464 = vpop.f32.mrf.mxu0
        %v3465 = vadd.f32 0.0, %v3464
        %3466 = vmatmul.f32.gmra.mxu0 %v3319
        %v3467 = vpop.f32.mrf.mxu0
        %v3468 = vadd.f32 0.0, %v3467
        %3469 = vmatmul.f32.gmra.mxu0 %v3320
        %v3470 = vpop.f32.mrf.mxu0
        %v3471 = vadd.f32 0.0, %v3470
        %3472 = vmatmul.f32.gmra.mxu0 %v3321
        %v3473 = vpop.f32.mrf.mxu0
        %v3474 = vadd.f32 0.0, %v3473
        %3475 = vmatmul.f32.gmra.mxu0 %v3322
        %v3476 = vpop.f32.mrf.mxu0
        %v3477 = vadd.f32 0.0, %v3476
        %3478 = vmatmul.f32.gmra.mxu0 %v3323
        %v3479 = vpop.f32.mrf.mxu0
        %v3480 = vadd.f32 0.0, %v3479
        %3481 = vmatmul.f32.gmra.mxu0 %v3324
        %v3482 = vpop.f32.mrf.mxu0
        %v3483 = vadd.f32 0.0, %v3482
        %3484 = vmatmul.f32.gmra.mxu0 %v3325
        %v3485 = vpop.f32.mrf.mxu0
        %v3486 = vadd.f32 0.0, %v3485
        %3487 = vdwg.mxu0
        %3488 = vmatpush.msra.mxu0 %v1368
        %3489 = vmatpush.msra.mxu0 %v1366
        %3490 = vmatpush.msra.mxu0 %v1364
        %3491 = vmatpush.msra.mxu0 %v1362
        %3492 = vmatpush.msra.mxu0 %v1360
        %3493 = vmatpush.msra.mxu0 %v1358
        %3494 = vmatpush.msra.mxu0 %v1356
        %3495 = vmatpush.msra.mxu0 %v1354
        %3496 = vmatpush.msra.mxu0 %v1352
        %3497 = vmatpush.msra.mxu0 %v1350
        %3498 = vmatpush.msra.mxu0 %v1348
        %3499 = vmatpush.msra.mxu0 %v1346
        %3500 = vmatpush.msra.mxu0 %v1344
        %3501 = vmatpush.msra.mxu0 %v1342
        %3502 = vmatpush.msra.mxu0 %v1340
        %3503 = vmatpush.msra.mxu0 %v1338
        %3504 = vmatmul.f32.gmra.mxu0 %v3326
        %v3505 = vpop.f32.mrf.mxu0
        %v3506 = vadd.f32 0.0, %v3505
        %3507 = vmatmul.f32.gmra.mxu0 %v3327
        %v3508 = vpop.f32.mrf.mxu0
        %v3509 = vadd.f32 0.0, %v3508
        %3510 = vmatmul.f32.gmra.mxu0 %v3328
        %v3511 = vpop.f32.mrf.mxu0
        %v3512 = vadd.f32 0.0, %v3511
        %3513 = vmatmul.f32.gmra.mxu0 %v3329
        %v3514 = vpop.f32.mrf.mxu0
        %v3515 = vadd.f32 0.0, %v3514
        %3516 = vmatmul.f32.gmra.mxu0 %v3330
        %v3517 = vpop.f32.mrf.mxu0
        %v3518 = vadd.f32 0.0, %v3517
        %3519 = vmatmul.f32.gmra.mxu0 %v3331
        %v3520 = vpop.f32.mrf.mxu0
        %v3521 = vadd.f32 0.0, %v3520
        %3522 = vmatmul.f32.gmra.mxu0 %v3332
        %v3523 = vpop.f32.mrf.mxu0
        %v3524 = vadd.f32 0.0, %v3523
        %3525 = vmatmul.f32.gmra.mxu0 %v3333
        %v3526 = vpop.f32.mrf.mxu0
        %v3527 = vadd.f32 0.0, %v3526
        %3528 = vmatmul.f32.gmra.mxu0 %v3334
        %v3529 = vpop.f32.mrf.mxu0
        %v3530 = vadd.f32 0.0, %v3529
        %3531 = vmatmul.f32.gmra.mxu0 %v3335
        %v3532 = vpop.f32.mrf.mxu0
        %v3533 = vadd.f32 0.0, %v3532
        %3534 = vmatmul.f32.gmra.mxu0 %v3336
        %v3535 = vpop.f32.mrf.mxu0
        %v3536 = vadd.f32 0.0, %v3535
        %3537 = vmatmul.f32.gmra.mxu0 %v3337
        %v3538 = vpop.f32.mrf.mxu0
        %v3539 = vadd.f32 0.0, %v3538
        %3540 = vmatmul.f32.gmra.mxu0 %v3338
        %v3541 = vpop.f32.mrf.mxu0
        %v3542 = vadd.f32 0.0, %v3541
        %3543 = vmatmul.f32.gmra.mxu0 %v3339
        %v3544 = vpop.f32.mrf.mxu0
        %v3545 = vadd.f32 0.0, %v3544
        %3546 = vmatmul.f32.gmra.mxu0 %v3340
        %v3547 = vpop.f32.mrf.mxu0
        %v3548 = vadd.f32 0.0, %v3547
        %3549 = vmatmul.f32.gmra.mxu0 %v3341
        %v3550 = vpop.f32.mrf.mxu0
        %v3551 = vadd.f32 0.0, %v3550
        %3552 = vdwg.mxu0
        %3553 = vmatpush.msra.mxu0 %v1416
        %3554 = vmatpush.msra.mxu0 %v1414
        %3555 = vmatpush.msra.mxu0 %v1412
        %3556 = vmatpush.msra.mxu0 %v1410
        %3557 = vmatpush.msra.mxu0 %v1408
        %3558 = vmatpush.msra.mxu0 %v1406
        %3559 = vmatpush.msra.mxu0 %v1404
        %3560 = vmatpush.msra.mxu0 %v1402
        %3561 = vmatpush.msra.mxu0 %v1400
        %3562 = vmatpush.msra.mxu0 %v1398
        %3563 = vmatpush.msra.mxu0 %v1396
        %3564 = vmatpush.msra.mxu0 %v1394
        %3565 = vmatpush.msra.mxu0 %v1392
        %3566 = vmatpush.msra.mxu0 %v1390
        %3567 = vmatpush.msra.mxu0 %v1388
        %3568 = vmatpush.msra.mxu0 %v1386
        %3569 = vmatmul.f32.gmra.mxu0 %v3342
        %v3570 = vpop.f32.mrf.mxu0
        %v3571 = vadd.f32 0.0, %v3570
        %3572 = vmatmul.f32.gmra.mxu0 %v3343
        %v3573 = vpop.f32.mrf.mxu0
        %v3574 = vadd.f32 0.0, %v3573
        %3575 = vmatmul.f32.gmra.mxu0 %v3344
        %v3576 = vpop.f32.mrf.mxu0
        %v3577 = vadd.f32 0.0, %v3576
        %3578 = vmatmul.f32.gmra.mxu0 %v3345
        %v3579 = vpop.f32.mrf.mxu0
        %v3580 = vadd.f32 0.0, %v3579
        %3581 = vmatmul.f32.gmra.mxu0 %v3346
        %v3582 = vpop.f32.mrf.mxu0
        %v3583 = vadd.f32 0.0, %v3582
        %3584 = vmatmul.f32.gmra.mxu0 %v3347
        %v3585 = vpop.f32.mrf.mxu0
        %v3586 = vadd.f32 0.0, %v3585
        %3587 = vmatmul.f32.gmra.mxu0 %v3348
        %v3588 = vpop.f32.mrf.mxu0
        %v3589 = vadd.f32 0.0, %v3588
        %3590 = vmatmul.f32.gmra.mxu0 %v3349
        %v3591 = vpop.f32.mrf.mxu0
        %v3592 = vadd.f32 0.0, %v3591
        %3593 = vmatmul.f32.gmra.mxu0 %v3350
        %v3594 = vpop.f32.mrf.mxu0
        %v3595 = vadd.f32 0.0, %v3594
        %3596 = vmatmul.f32.gmra.mxu0 %v3351
        %v3597 = vpop.f32.mrf.mxu0
        %v3598 = vadd.f32 0.0, %v3597
        %3599 = vmatmul.f32.gmra.mxu0 %v3352
        %v3600 = vpop.f32.mrf.mxu0
        %v3601 = vadd.f32 0.0, %v3600
        %3602 = vmatmul.f32.gmra.mxu0 %v3353
        %v3603 = vpop.f32.mrf.mxu0
        %v3604 = vadd.f32 0.0, %v3603
        %3605 = vmatmul.f32.gmra.mxu0 %v3354
        %v3606 = vpop.f32.mrf.mxu0
        %v3607 = vadd.f32 0.0, %v3606
        %3608 = vmatmul.f32.gmra.mxu0 %v3355
        %v3609 = vpop.f32.mrf.mxu0
        %v3610 = vadd.f32 0.0, %v3609
        %3611 = vmatmul.f32.gmra.mxu0 %v3356
        %v3612 = vpop.f32.mrf.mxu0
        %v3613 = vadd.f32 0.0, %v3612
        %3614 = vmatmul.f32.gmra.mxu0 %v3357
        %v3615 = vpop.f32.mrf.mxu0
        %v3616 = vadd.f32 0.0, %v3615
        %3617 = vdwg.mxu0
        %v3618 = vld [vmem:[#allocation10] sm:$0xff]
        %v3619 = vld [vmem:[#allocation10 + $0x8] sm:$0xff]
        %v3620 = vld [vmem:[#allocation10 + $0x10] sm:$0xff]
        %v3621 = vld [vmem:[#allocation10 + $0x18] sm:$0xff]
        %s3622 = scalar_lea.vmem [#allocation10], 32
        %v3623 = vld [vmem:[%s3622] sm:$0xff]
        %v3624 = vld [vmem:[%s3622 + $0x8] sm:$0xff]
        %v3625 = vld [vmem:[%s3622 + $0x10] sm:$0xff]
        %v3626 = vld [vmem:[%s3622 + $0x18] sm:$0xff]
        %v3628 = vsel %vm1433, %v3441, 0
        %v3631 = vsel %vm1433, %v3444, 0
        %v3634 = vsel %vm1433, %v3447, 0
        %v3637 = vsel %vm1433, %v3450, 0
        %v3640 = vsel %vm1433, %v3453, 0
        %v3643 = vsel %vm1433, %v3456, 0
        %v3646 = vsel %vm1433, %v3459, 0
        %v3649 = vsel %vm1433, %v3462, 0
        %v3652 = vsel %vm1433, %v3465, 0
        %v3655 = vsel %vm1433, %v3468, 0
        %v3658 = vsel %vm1433, %v3471, 0
        %v3661 = vsel %vm1433, %v3474, 0
        %v3664 = vsel %vm1433, %v3477, 0
        %v3667 = vsel %vm1433, %v3480, 0
        %v3670 = vsel %vm1433, %v3483, 0
        %v3673 = vsel %vm1433, %v3486, 0
        %3675 = vmatpush.msra.mxu0 0.0
        %3676 = vmatpush.msra.mxu0 0.0
        %3677 = vmatpush.msra.mxu0 0.0
        %3678 = vmatpush.msra.mxu0 0.0
        %3679 = vmatpush.msra.mxu0 0.0
        %3680 = vmatpush.msra.mxu0 0.0
        %3681 = vmatpush.msra.mxu0 0.0
        %3682 = vmatpush.msra.mxu0 0.0
        %3683 = vmatpush.msra.mxu0 0.0
        %3684 = vmatpush.msra.mxu0 0.0
        %3685 = vmatpush.msra.mxu0 0.0
        %3686 = vmatpush.msra.mxu0 0.0
        %3687 = vmatpush.msra.mxu0 %v3626
        %3688 = vmatpush.msra.mxu0 %v3625
        %3689 = vmatpush.msra.mxu0 %v3624
        %3690 = vmatpush.msra.mxu0 %v3623
        %3691 = vmatmul.f32.gmra.mxu0 %v3628
        %v3692 = vpop.f32.mrf.mxu0
        %v3693 = vadd.f32 0.0, %v3692
        %3694 = vmatmul.f32.gmra.mxu0 %v3631
        %v3695 = vpop.f32.mrf.mxu0
        %v3696 = vadd.f32 0.0, %v3695
        %3697 = vmatmul.f32.gmra.mxu0 %v3634
        %v3698 = vpop.f32.mrf.mxu0
        %v3699 = vadd.f32 0.0, %v3698
        %3700 = vmatmul.f32.gmra.mxu0 %v3637
        %v3701 = vpop.f32.mrf.mxu0
        %v3702 = vadd.f32 0.0, %v3701
        %3703 = vmatmul.f32.gmra.mxu0 %v3640
        %v3704 = vpop.f32.mrf.mxu0
        %v3705 = vadd.f32 0.0, %v3704
        %3706 = vmatmul.f32.gmra.mxu0 %v3643
        %v3707 = vpop.f32.mrf.mxu0
        %v3708 = vadd.f32 0.0, %v3707
        %3709 = vmatmul.f32.gmra.mxu0 %v3646
        %v3710 = vpop.f32.mrf.mxu0
        %v3711 = vadd.f32 0.0, %v3710
        %3712 = vmatmul.f32.gmra.mxu0 %v3649
        %v3713 = vpop.f32.mrf.mxu0
        %v3714 = vadd.f32 0.0, %v3713
        %3715 = vmatmul.f32.gmra.mxu0 %v3652
        %v3716 = vpop.f32.mrf.mxu0
        %v3717 = vadd.f32 0.0, %v3716
        %3718 = vmatmul.f32.gmra.mxu0 %v3655
        %v3719 = vpop.f32.mrf.mxu0
        %v3720 = vadd.f32 0.0, %v3719
        %3721 = vmatmul.f32.gmra.mxu0 %v3658
        %v3722 = vpop.f32.mrf.mxu0
        %v3723 = vadd.f32 0.0, %v3722
        %3724 = vmatmul.f32.gmra.mxu0 %v3661
        %v3725 = vpop.f32.mrf.mxu0
        %v3726 = vadd.f32 0.0, %v3725
        %3727 = vmatmul.f32.gmra.mxu0 %v3664
        %v3728 = vpop.f32.mrf.mxu0
        %v3729 = vadd.f32 0.0, %v3728
        %3730 = vmatmul.f32.gmra.mxu0 %v3667
        %v3731 = vpop.f32.mrf.mxu0
        %v3732 = vadd.f32 0.0, %v3731
        %3733 = vmatmul.f32.gmra.mxu0 %v3670
        %v3734 = vpop.f32.mrf.mxu0
        %v3735 = vadd.f32 0.0, %v3734
        %3736 = vmatmul.f32.gmra.mxu0 %v3673
        %v3737 = vpop.f32.mrf.mxu0
        %v3738 = vadd.f32 0.0, %v3737
        %3739 = vdwg.mxu0
        %v3741 = vsel %vm1433, %v3376, 0
        %v3744 = vsel %vm1433, %v3379, 0
        %v3747 = vsel %vm1433, %v3382, 0
        %v3750 = vsel %vm1433, %v3385, 0
        %v3753 = vsel %vm1433, %v3388, 0
        %v3756 = vsel %vm1433, %v3391, 0
        %v3759 = vsel %vm1433, %v3394, 0
        %v3762 = vsel %vm1433, %v3397, 0
        %v3765 = vsel %vm1433, %v3400, 0
        %v3768 = vsel %vm1433, %v3403, 0
        %v3771 = vsel %vm1433, %v3406, 0
        %v3774 = vsel %vm1433, %v3409, 0
        %v3777 = vsel %vm1433, %v3412, 0
        %v3780 = vsel %vm1433, %v3415, 0
        %v3783 = vsel %vm1433, %v3418, 0
        %v3786 = vsel %vm1433, %v3421, 0
        %3788 = vmatpush.msra.mxu0 0.0
        %3789 = vmatpush.msra.mxu0 0.0
        %3790 = vmatpush.msra.mxu0 0.0
        %3791 = vmatpush.msra.mxu0 0.0
        %3792 = vmatpush.msra.mxu0 0.0
        %3793 = vmatpush.msra.mxu0 0.0
        %3794 = vmatpush.msra.mxu0 0.0
        %3795 = vmatpush.msra.mxu0 0.0
        %3796 = vmatpush.msra.mxu0 0.0
        %3797 = vmatpush.msra.mxu0 0.0
        %3798 = vmatpush.msra.mxu0 0.0
        %3799 = vmatpush.msra.mxu0 0.0
        %3800 = vmatpush.msra.mxu0 %v3621
        %3801 = vmatpush.msra.mxu0 %v3620
        %3802 = vmatpush.msra.mxu0 %v3619
        %3803 = vmatpush.msra.mxu0 %v3618
        %3804 = vmatmul.f32.gmra.mxu0 %v3741
        %v3805 = vpop.f32.mrf.mxu0
        %v3806 = vadd.f32 %v3693, %v3805
        %3807 = vmatmul.f32.gmra.mxu0 %v3744
        %v3808 = vpop.f32.mrf.mxu0
        %v3809 = vadd.f32 %v3696, %v3808
        %3810 = vmatmul.f32.gmra.mxu0 %v3747
        %v3811 = vpop.f32.mrf.mxu0
        %v3812 = vadd.f32 %v3699, %v3811
        %3813 = vmatmul.f32.gmra.mxu0 %v3750
        %v3814 = vpop.f32.mrf.mxu0
        %v3815 = vadd.f32 %v3702, %v3814
        %3816 = vmatmul.f32.gmra.mxu0 %v3753
        %v3817 = vpop.f32.mrf.mxu0
        %v3818 = vadd.f32 %v3705, %v3817
        %3819 = vmatmul.f32.gmra.mxu0 %v3756
        %v3820 = vpop.f32.mrf.mxu0
        %v3821 = vadd.f32 %v3708, %v3820
        %3822 = vmatmul.f32.gmra.mxu0 %v3759
        %v3823 = vpop.f32.mrf.mxu0
        %v3824 = vadd.f32 %v3711, %v3823
        %3825 = vmatmul.f32.gmra.mxu0 %v3762
        %v3826 = vpop.f32.mrf.mxu0
        %v3827 = vadd.f32 %v3714, %v3826
        %3828 = vmatmul.f32.gmra.mxu0 %v3765
        %v3829 = vpop.f32.mrf.mxu0
        %v3830 = vadd.f32 %v3717, %v3829
        %3831 = vmatmul.f32.gmra.mxu0 %v3768
        %v3832 = vpop.f32.mrf.mxu0
        %v3833 = vadd.f32 %v3720, %v3832
        %3834 = vmatmul.f32.gmra.mxu0 %v3771
        %v3835 = vpop.f32.mrf.mxu0
        %v3836 = vadd.f32 %v3723, %v3835
        %3837 = vmatmul.f32.gmra.mxu0 %v3774
        %v3838 = vpop.f32.mrf.mxu0
        %v3839 = vadd.f32 %v3726, %v3838
        %3840 = vmatmul.f32.gmra.mxu0 %v3777
        %v3841 = vpop.f32.mrf.mxu0
        %v3842 = vadd.f32 %v3729, %v3841
        %3843 = vmatmul.f32.gmra.mxu0 %v3780
        %v3844 = vpop.f32.mrf.mxu0
        %v3845 = vadd.f32 %v3732, %v3844
        %3846 = vmatmul.f32.gmra.mxu0 %v3783
        %v3847 = vpop.f32.mrf.mxu0
        %v3848 = vadd.f32 %v3735, %v3847
        %3849 = vmatmul.f32.gmra.mxu0 %v3786
        %v3850 = vpop.f32.mrf.mxu0
        %v3851 = vadd.f32 %v3738, %v3850
        %3852 = vdwg.mxu0
        %s3853 = scalar_lea.vmem [#allocation10], 64
        %v3854 = vld [vmem:[%s3853] sm:$0xff]
        %v3855 = vld [vmem:[%s3853 + $0x8] sm:$0xff]
        %v3856 = vld [vmem:[%s3853 + $0x10] sm:$0xff]
        %v3857 = vld [vmem:[%s3853 + $0x18] sm:$0xff]
        %v3859 = vsel %vm1433, %v3506, 0
        %v3862 = vsel %vm1433, %v3509, 0
        %v3865 = vsel %vm1433, %v3512, 0
        %v3868 = vsel %vm1433, %v3515, 0
        %v3871 = vsel %vm1433, %v3518, 0
        %v3874 = vsel %vm1433, %v3521, 0
        %v3877 = vsel %vm1433, %v3524, 0
        %v3880 = vsel %vm1433, %v3527, 0
        %v3883 = vsel %vm1433, %v3530, 0
        %v3886 = vsel %vm1433, %v3533, 0
        %v3889 = vsel %vm1433, %v3536, 0
        %v3892 = vsel %vm1433, %v3539, 0
        %v3895 = vsel %vm1433, %v3542, 0
        %v3898 = vsel %vm1433, %v3545, 0
        %v3901 = vsel %vm1433, %v3548, 0
        %v3904 = vsel %vm1433, %v3551, 0
        %3906 = vmatpush.msra.mxu0 0.0
        %3907 = vmatpush.msra.mxu0 0.0
        %3908 = vmatpush.msra.mxu0 0.0
        %3909 = vmatpush.msra.mxu0 0.0
        %3910 = vmatpush.msra.mxu0 0.0
        %3911 = vmatpush.msra.mxu0 0.0
        %3912 = vmatpush.msra.mxu0 0.0
        %3913 = vmatpush.msra.mxu0 0.0
        %3914 = vmatpush.msra.mxu0 0.0
        %3915 = vmatpush.msra.mxu0 0.0
        %3916 = vmatpush.msra.mxu0 0.0
        %3917 = vmatpush.msra.mxu0 0.0
        %3918 = vmatpush.msra.mxu0 %v3857
        %3919 = vmatpush.msra.mxu0 %v3856
        %3920 = vmatpush.msra.mxu0 %v3855
        %3921 = vmatpush.msra.mxu0 %v3854
        %3922 = vmatmul.f32.gmra.mxu0 %v3859
        %v3923 = vpop.f32.mrf.mxu0
        %v3924 = vadd.f32 0.0, %v3923
        %3925 = vmatmul.f32.gmra.mxu0 %v3862
        %v3926 = vpop.f32.mrf.mxu0
        %v3927 = vadd.f32 0.0, %v3926
        %3928 = vmatmul.f32.gmra.mxu0 %v3865
        %v3929 = vpop.f32.mrf.mxu0
        %v3930 = vadd.f32 0.0, %v3929
        %3931 = vmatmul.f32.gmra.mxu0 %v3868
        %v3932 = vpop.f32.mrf.mxu0
        %v3933 = vadd.f32 0.0, %v3932
        %3934 = vmatmul.f32.gmra.mxu0 %v3871
        %v3935 = vpop.f32.mrf.mxu0
        %v3936 = vadd.f32 0.0, %v3935
        %3937 = vmatmul.f32.gmra.mxu0 %v3874
        %v3938 = vpop.f32.mrf.mxu0
        %v3939 = vadd.f32 0.0, %v3938
        %3940 = vmatmul.f32.gmra.mxu0 %v3877
        %v3941 = vpop.f32.mrf.mxu0
        %v3942 = vadd.f32 0.0, %v3941
        %3943 = vmatmul.f32.gmra.mxu0 %v3880
        %v3944 = vpop.f32.mrf.mxu0
        %v3945 = vadd.f32 0.0, %v3944
        %3946 = vmatmul.f32.gmra.mxu0 %v3883
        %v3947 = vpop.f32.mrf.mxu0
        %v3948 = vadd.f32 0.0, %v3947
        %3949 = vmatmul.f32.gmra.mxu0 %v3886
        %v3950 = vpop.f32.mrf.mxu0
        %v3951 = vadd.f32 0.0, %v3950
        %3952 = vmatmul.f32.gmra.mxu0 %v3889
        %v3953 = vpop.f32.mrf.mxu0
        %v3954 = vadd.f32 0.0, %v3953
        %3955 = vmatmul.f32.gmra.mxu0 %v3892
        %v3956 = vpop.f32.mrf.mxu0
        %v3957 = vadd.f32 0.0, %v3956
        %3958 = vmatmul.f32.gmra.mxu0 %v3895
        %v3959 = vpop.f32.mrf.mxu0
        %v3960 = vadd.f32 0.0, %v3959
        %3961 = vmatmul.f32.gmra.mxu0 %v3898
        %v3962 = vpop.f32.mrf.mxu0
        %v3963 = vadd.f32 0.0, %v3962
        %3964 = vmatmul.f32.gmra.mxu0 %v3901
        %v3965 = vpop.f32.mrf.mxu0
        %v3966 = vadd.f32 0.0, %v3965
        %3967 = vmatmul.f32.gmra.mxu0 %v3904
        %v3968 = vpop.f32.mrf.mxu0
        %v3969 = vadd.f32 0.0, %v3968
        %3970 = vdwg.mxu0
        %v3971 = vadd.f32 %v3806, %v3924
        %v3972 = vadd.f32 %v3809, %v3927
        %v3973 = vadd.f32 %v3812, %v3930
        %v3974 = vadd.f32 %v3815, %v3933
        %v3975 = vadd.f32 %v3818, %v3936
        %v3976 = vadd.f32 %v3821, %v3939
        %v3977 = vadd.f32 %v3824, %v3942
        %v3978 = vadd.f32 %v3827, %v3945
        %v3979 = vadd.f32 %v3830, %v3948
        %v3980 = vadd.f32 %v3833, %v3951
        %v3981 = vadd.f32 %v3836, %v3954
        %v3982 = vadd.f32 %v3839, %v3957
        %v3983 = vadd.f32 %v3842, %v3960
        %v3984 = vadd.f32 %v3845, %v3963
        %v3985 = vadd.f32 %v3848, %v3966
        %v3986 = vadd.f32 %v3851, %v3969
        %s3987 = scalar_lea.vmem [#allocation10], 96
        %v3988 = vld [vmem:[%s3987] sm:$0xff]
        %v3989 = vld [vmem:[%s3987 + $0x8] sm:$0xff]
        %v3990 = vld [vmem:[%s3987 + $0x10] sm:$0xff]
        %v3991 = vld [vmem:[%s3987 + $0x18] sm:$0xff]
        %v3993 = vsel %vm1433, %v3571, 0
        %v3996 = vsel %vm1433, %v3574, 0
        %v3999 = vsel %vm1433, %v3577, 0
        %v4002 = vsel %vm1433, %v3580, 0
        %v4005 = vsel %vm1433, %v3583, 0
        %v4008 = vsel %vm1433, %v3586, 0
        %v4011 = vsel %vm1433, %v3589, 0
        %v4014 = vsel %vm1433, %v3592, 0
        %v4017 = vsel %vm1433, %v3595, 0
        %v4020 = vsel %vm1433, %v3598, 0
        %v4023 = vsel %vm1433, %v3601, 0
        %v4026 = vsel %vm1433, %v3604, 0
        %v4029 = vsel %vm1433, %v3607, 0
        %v4032 = vsel %vm1433, %v3610, 0
        %v4035 = vsel %vm1433, %v3613, 0
        %v4038 = vsel %vm1433, %v3616, 0
        %4040 = vmatpush.msra.mxu0 0.0
        %4041 = vmatpush.msra.mxu0 0.0
        %4042 = vmatpush.msra.mxu0 0.0
        %4043 = vmatpush.msra.mxu0 0.0
        %4044 = vmatpush.msra.mxu0 0.0
        %4045 = vmatpush.msra.mxu0 0.0
        %4046 = vmatpush.msra.mxu0 0.0
        %4047 = vmatpush.msra.mxu0 0.0
        %4048 = vmatpush.msra.mxu0 0.0
        %4049 = vmatpush.msra.mxu0 0.0
        %4050 = vmatpush.msra.mxu0 0.0
        %4051 = vmatpush.msra.mxu0 0.0
        %4052 = vmatpush.msra.mxu0 %v3991
        %4053 = vmatpush.msra.mxu0 %v3990
        %4054 = vmatpush.msra.mxu0 %v3989
        %4055 = vmatpush.msra.mxu0 %v3988
        %4056 = vmatmul.f32.gmra.mxu0 %v3993
        %v4057 = vpop.f32.mrf.mxu0
        %v4058 = vadd.f32 0.0, %v4057
        %4059 = vmatmul.f32.gmra.mxu0 %v3996
        %v4060 = vpop.f32.mrf.mxu0
        %v4061 = vadd.f32 0.0, %v4060
        %4062 = vmatmul.f32.gmra.mxu0 %v3999
        %v4063 = vpop.f32.mrf.mxu0
        %v4064 = vadd.f32 0.0, %v4063
        %4065 = vmatmul.f32.gmra.mxu0 %v4002
        %v4066 = vpop.f32.mrf.mxu0
        %v4067 = vadd.f32 0.0, %v4066
        %4068 = vmatmul.f32.gmra.mxu0 %v4005
        %v4069 = vpop.f32.mrf.mxu0
        %v4070 = vadd.f32 0.0, %v4069
        %4071 = vmatmul.f32.gmra.mxu0 %v4008
        %v4072 = vpop.f32.mrf.mxu0
        %v4073 = vadd.f32 0.0, %v4072
        %4074 = vmatmul.f32.gmra.mxu0 %v4011
        %v4075 = vpop.f32.mrf.mxu0
        %v4076 = vadd.f32 0.0, %v4075
        %4077 = vmatmul.f32.gmra.mxu0 %v4014
        %v4078 = vpop.f32.mrf.mxu0
        %v4079 = vadd.f32 0.0, %v4078
        %4080 = vmatmul.f32.gmra.mxu0 %v4017
        %v4081 = vpop.f32.mrf.mxu0
        %v4082 = vadd.f32 0.0, %v4081
        %4083 = vmatmul.f32.gmra.mxu0 %v4020
        %v4084 = vpop.f32.mrf.mxu0
        %v4085 = vadd.f32 0.0, %v4084
        %4086 = vmatmul.f32.gmra.mxu0 %v4023
        %v4087 = vpop.f32.mrf.mxu0
        %v4088 = vadd.f32 0.0, %v4087
        %4089 = vmatmul.f32.gmra.mxu0 %v4026
        %v4090 = vpop.f32.mrf.mxu0
        %v4091 = vadd.f32 0.0, %v4090
        %4092 = vmatmul.f32.gmra.mxu0 %v4029
        %v4093 = vpop.f32.mrf.mxu0
        %v4094 = vadd.f32 0.0, %v4093
        %4095 = vmatmul.f32.gmra.mxu0 %v4032
        %v4096 = vpop.f32.mrf.mxu0
        %v4097 = vadd.f32 0.0, %v4096
        %4098 = vmatmul.f32.gmra.mxu0 %v4035
        %v4099 = vpop.f32.mrf.mxu0
        %v4100 = vadd.f32 0.0, %v4099
        %4101 = vmatmul.f32.gmra.mxu0 %v4038
        %v4102 = vpop.f32.mrf.mxu0
        %v4103 = vadd.f32 0.0, %v4102
        %4104 = vdwg.mxu0
        %v4105 = vadd.f32 %v3971, %v4058
        %v4106 = vadd.f32 %v3972, %v4061
        %v4107 = vadd.f32 %v3973, %v4064
        %v4108 = vadd.f32 %v3974, %v4067
        %v4109 = vadd.f32 %v3975, %v4070
        %v4110 = vadd.f32 %v3976, %v4073
        %v4111 = vadd.f32 %v3977, %v4076
        %v4112 = vadd.f32 %v3978, %v4079
        %v4113 = vadd.f32 %v3979, %v4082
        %v4114 = vadd.f32 %v3980, %v4085
        %v4115 = vadd.f32 %v3981, %v4088
        %v4116 = vadd.f32 %v3982, %v4091
        %v4117 = vadd.f32 %v3983, %v4094
        %v4118 = vadd.f32 %v3984, %v4097
        %v4119 = vadd.f32 %v3985, %v4100
        %v4120 = vadd.f32 %v3986, %v4103
        %v4121 = vld [vmem:[%s6] sm:$0x1]
        %v4123 = vperm.slane %v4121, 0
        %v4125 = vadd.f32 %v4105, %v4123
        %v4126 = vadd.f32 %v4106, %v4123
        %v4127 = vadd.f32 %v4107, %v4123
        %v4128 = vadd.f32 %v4108, %v4123
        %v4129 = vadd.f32 %v4109, %v4123
        %v4130 = vadd.f32 %v4110, %v4123
        %v4131 = vadd.f32 %v4111, %v4123
        %v4132 = vadd.f32 %v4112, %v4123
        %v4133 = vadd.f32 %v4113, %v4123
        %v4134 = vadd.f32 %v4114, %v4123
        %v4135 = vadd.f32 %v4115, %v4123
        %v4136 = vadd.f32 %v4116, %v4123
        %v4137 = vadd.f32 %v4117, %v4123
        %v4138 = vadd.f32 %v4118, %v4123
        %v4139 = vadd.f32 %v4119, %v4123
        %v4140 = vadd.f32 %v4120, %v4123
        %4141 = vst [vmem:[%s391] sm:$0xff] %v4125
        %4142 = vst [vmem:[%s391 + $0x8] sm:$0xff] %v4126
        %4143 = vst [vmem:[%s391 + $0x10] sm:$0xff] %v4127
        %4144 = vst [vmem:[%s391 + $0x18] sm:$0xff] %v4128
        %4145 = vst [vmem:[%s391 + $0x20] sm:$0xff] %v4129
        %4146 = vst [vmem:[%s391 + $0x28] sm:$0xff] %v4130
        %4147 = vst [vmem:[%s391 + $0x30] sm:$0xff] %v4131
        %4148 = vst [vmem:[%s391 + $0x38] sm:$0xff] %v4132
        %4149 = vst [vmem:[%s391 + $0x40] sm:$0xff] %v4133
        %4150 = vst [vmem:[%s391 + $0x48] sm:$0xff] %v4134
        %4151 = vst [vmem:[%s391 + $0x50] sm:$0xff] %v4135
        %4152 = vst [vmem:[%s391 + $0x58] sm:$0xff] %v4136
        %4153 = vst [vmem:[%s391 + $0x60] sm:$0xff] %v4137
        %4154 = vst [vmem:[%s391 + $0x68] sm:$0xff] %v4138
        %4155 = vst [vmem:[%s391 + $0x70] sm:$0xff] %v4139
        %4156 = vst [vmem:[%s391 + $0x78] sm:$0xff] %v4140
        %v4157 = vadd.f32 %v3294, %v3310
        %v4158 = vadd.f32 %v3295, %v3311
        %v4159 = vadd.f32 %v3296, %v3312
        %v4160 = vadd.f32 %v3297, %v3313
        %v4161 = vadd.f32 %v3298, %v3314
        %v4162 = vadd.f32 %v3299, %v3315
        %v4163 = vadd.f32 %v3300, %v3316
        %v4164 = vadd.f32 %v3301, %v3317
        %v4165 = vadd.f32 %v3302, %v3318
        %v4166 = vadd.f32 %v3303, %v3319
        %v4167 = vadd.f32 %v3304, %v3320
        %v4168 = vadd.f32 %v3305, %v3321
        %v4169 = vadd.f32 %v3306, %v3322
        %v4170 = vadd.f32 %v3307, %v3323
        %v4171 = vadd.f32 %v3308, %v3324
        %v4172 = vadd.f32 %v3309, %v3325
        %v4173 = vadd.f32 %v4157, %v3326
        %v4174 = vadd.f32 %v4158, %v3327
        %v4175 = vadd.f32 %v4159, %v3328
        %v4176 = vadd.f32 %v4160, %v3329
        %v4177 = vadd.f32 %v4161, %v3330
        %v4178 = vadd.f32 %v4162, %v3331
        %v4179 = vadd.f32 %v4163, %v3332
        %v4180 = vadd.f32 %v4164, %v3333
        %v4181 = vadd.f32 %v4165, %v3334
        %v4182 = vadd.f32 %v4166, %v3335
        %v4183 = vadd.f32 %v4167, %v3336
        %v4184 = vadd.f32 %v4168, %v3337
        %v4185 = vadd.f32 %v4169, %v3338
        %v4186 = vadd.f32 %v4170, %v3339
        %v4187 = vadd.f32 %v4171, %v3340
        %v4188 = vadd.f32 %v4172, %v3341
        %v4189 = vadd.f32 %v4173, %v3342
        %v4190 = vadd.f32 %v4174, %v3343
        %v4191 = vadd.f32 %v4175, %v3344
        %v4192 = vadd.f32 %v4176, %v3345
        %v4193 = vadd.f32 %v4177, %v3346
        %v4194 = vadd.f32 %v4178, %v3347
        %v4195 = vadd.f32 %v4179, %v3348
        %v4196 = vadd.f32 %v4180, %v3349
        %v4197 = vadd.f32 %v4181, %v3350
        %v4198 = vadd.f32 %v4182, %v3351
        %v4199 = vadd.f32 %v4183, %v3352
        %v4200 = vadd.f32 %v4184, %v3353
        %v4201 = vadd.f32 %v4185, %v3354
        %v4202 = vadd.f32 %v4186, %v3355
        %v4203 = vadd.f32 %v4187, %v3356
        %v4204 = vadd.f32 %v4188, %v3357
        %v4205 = vmul.f32 %v4189, 0.25
        %v4206 = vmul.f32 %v4190, 0.25
        %v4207 = vmul.f32 %v4191, 0.25
        %v4208 = vmul.f32 %v4192, 0.25
        %v4209 = vmul.f32 %v4193, 0.25
        %v4210 = vmul.f32 %v4194, 0.25
        %v4211 = vmul.f32 %v4195, 0.25
        %v4212 = vmul.f32 %v4196, 0.25
        %v4213 = vmul.f32 %v4197, 0.25
        %v4214 = vmul.f32 %v4198, 0.25
        %v4215 = vmul.f32 %v4199, 0.25
        %v4216 = vmul.f32 %v4200, 0.25
        %v4217 = vmul.f32 %v4201, 0.25
        %v4218 = vmul.f32 %v4202, 0.25
        %v4219 = vmul.f32 %v4203, 0.25
        %v4220 = vmul.f32 %v4204, 0.25
        %4221 = vst [vmem:[%s398] sm:$0xff] %v4205
        %4222 = vst [vmem:[%s398 + $0x8] sm:$0xff] %v4206
        %4223 = vst [vmem:[%s398 + $0x10] sm:$0xff] %v4207
        %4224 = vst [vmem:[%s398 + $0x18] sm:$0xff] %v4208
        %4225 = vst [vmem:[%s398 + $0x20] sm:$0xff] %v4209
        %4226 = vst [vmem:[%s398 + $0x28] sm:$0xff] %v4210
        %4227 = vst [vmem:[%s398 + $0x30] sm:$0xff] %v4211
        %4228 = vst [vmem:[%s398 + $0x38] sm:$0xff] %v4212
        %4229 = vst [vmem:[%s398 + $0x40] sm:$0xff] %v4213
        %4230 = vst [vmem:[%s398 + $0x48] sm:$0xff] %v4214
        %4231 = vst [vmem:[%s398 + $0x50] sm:$0xff] %v4215
        %4232 = vst [vmem:[%s398 + $0x58] sm:$0xff] %v4216
        %4233 = vst [vmem:[%s398 + $0x60] sm:$0xff] %v4217
        %4234 = vst [vmem:[%s398 + $0x68] sm:$0xff] %v4218
        %4235 = vst [vmem:[%s398 + $0x70] sm:$0xff] %v4219
        %4236 = vst [vmem:[%s398 + $0x78] sm:$0xff] %v4220
        %s4237 = sand.u32 %s191, 1
        %s4238 = scalar_lea.sflag [#allocation4], %s4237
        %s4239 = sand.u32 %s191, 1
        %s4240 = smul.addr %s4239, 128
        %s4241 = scalar_lea.vmem [#allocation11], %s4240
        %s4242 = sand.u32 %s217, 1
        %s4243 = scalar_lea.sflag [#allocation13], %s4242
        %s4244 = sand.u32 %s217, 1
        %s4245 = smul.addr %s4244, 128
        %s4246 = scalar_lea.vmem [#allocation12], %s4245
        // Predicated region
        $region69: #{tpu_custom_call.1} parent=47 // pred_check
          %p4247 = pneg %p201
        $region70: #{tpu_custom_call.1} parent=47 // pred_check_branch
          %4249 = sbr.rel (%p4247) target = $region72
        $region71: #{tpu_custom_call.1} parent=47 // pred_region
          %4251 = vsyncadd %s4238, 0
          %s4252 = smul.addr %s31, 16
          %s4253 = smul.addr %s4252, 8
          %s4254 = scalar_lea.hbm %s7, %s4253
          %s4255 = sshll.u32 %s4241, 4
          %s4256 = int_to_ptr.vmem [resolvable:$true] %s4255
          %s4257 = sshll.u32 %s4254, 4
          %s4258 = int_to_ptr.hbm [resolvable:$true] %s4257
          %4263 = dma.vmem_to_hbm [thread:$0]  %s4256, 2048, %s4258, %s4238, 128, 128, 8
        $region72: #{tpu_custom_call.1} parent=47 // pred_fallthru
          _
        // Predicated region
        $region73: #{tpu_custom_call.1} parent=47 // pred_check
          %p4264 = pneg %p227
        $region74: #{tpu_custom_call.1} parent=47 // pred_check_branch
          %4266 = sbr.rel (%p4264) target = $region76
        $region75: #{tpu_custom_call.1} parent=47 // pred_region
          %4268 = vsyncadd %s4243, 0
          %s4269 = smul.addr %s31, 16
          %s4270 = smul.addr %s4269, 8
          %s4271 = scalar_lea.hbm %s8, %s4270
          %s4272 = sshll.u32 %s4246, 4
          %s4273 = int_to_ptr.vmem [resolvable:$true] %s4272
          %s4274 = sshll.u32 %s4271, 4
          %s4275 = int_to_ptr.hbm [resolvable:$true] %s4274
          %4280 = dma.vmem_to_hbm [thread:$0]  %s4273, 2048, %s4275, %s4243, 128, 128, 8
        $region76: #{tpu_custom_call.1} parent=47 // pred_fallthru
          _
      $region48: #{tpu_custom_call.1} parent=5 // pred_fallthru
        _
      %p4281 = scmp.le.s32.totalorder 2, %s26
      // Predicated region
      $region77: #{tpu_custom_call.1} parent=5 // pred_check
        %p4282 = pneg %p4281
      $region78: #{tpu_custom_call.1} parent=5 // pred_check_branch
        %4284 = sbr.rel (%p4282) target = $region80
      $region79: #{tpu_custom_call.1} parent=5 // pred_region
        %s4285 = ssub.s32 %s26, 2
        // Predicated region
        $region81: #{tpu_custom_call.1} parent=79 // pred_check
          %p4286 = pneg %p207
        $region82: #{tpu_custom_call.1} parent=79 // pred_check_branch
          %4288 = sbr.rel (%p4286) target = $region84
        $region83: #{tpu_custom_call.1} parent=79 // pred_region
          %s4289 = sand.u32 %s192, 1
          %s4290 = scalar_lea.sflag [#allocation4], %s4289
          %s4291 = sand.u32 %s192, 1
          %s4292 = smul.addr %s4291, 128
          %s4293 = scalar_lea.vmem [#allocation11], %s4292
          %4295 = dma.done %s4290, 2048
        $region84: #{tpu_custom_call.1} parent=79 // pred_fallthru
          _
        // Predicated region
        $region85: #{tpu_custom_call.1} parent=79 // pred_check
          %p4296 = pneg %p233
        $region86: #{tpu_custom_call.1} parent=79 // pred_check_branch
          %4298 = sbr.rel (%p4296) target = $region88
        $region87: #{tpu_custom_call.1} parent=79 // pred_region
          %s4299 = sand.u32 %s218, 1
          %s4300 = scalar_lea.sflag [#allocation13], %s4299
          %s4301 = sand.u32 %s218, 1
          %s4302 = smul.addr %s4301, 128
          %s4303 = scalar_lea.vmem [#allocation12], %s4302
          %4305 = dma.done %s4300, 2048
        $region88: #{tpu_custom_call.1} parent=79 // pred_fallthru
          _
      $region80: #{tpu_custom_call.1} parent=5 // pred_fallthru
        _
    $region6: #{tpu_custom_call.1} parent=1 // loop_footer
      %s30 = sadd.s32 1, %s26
    $region7: #{tpu_custom_call.1} parent=1 // loop_footer_branch
      %25 = sbr.rel target = $region3
    $region8: #{tpu_custom_call.1} parent=1 // loop_exit
      _
    %4306 = vsyncpa [#allocation3], 1
    %s4307 = scalar_lea.sflag [#allocation3], 1
    %4308 = vsyncpa %s4307, 1
    %4309 = vsyncpa [#allocation6], 1
    %4310 = vsyncpa [#allocation9], 1
    %4311 = vsyncpa [#allocation4], 1
    %s4312 = scalar_lea.sflag [#allocation4], 1
    %4313 = vsyncpa %s4312, 1
    %4314 = vsyncpa [#allocation13], 1
    %s4315 = scalar_lea.sflag [#allocation13], 1
    %4316 = vsyncpa %s4315, 1

</llo_original>
